<compile_context>
chip_gen: v6e
topology: v6e:2x2x1
jax: 0.10.0
libtpu: 0.0.40
codegen_flags: <defaults>
</compile_context>

<pallas_src>
import math

import jax
import jax.numpy as jnp
from jax.experimental import pallas as pl
from jax.experimental.pallas import tpu as pltpu

EMBEDDING_DIM = 512
FEAT_CHANNELS = 128          # lane-dense stand-in for swin channels (real swin: 1024)
PATCH = 8                    # stand-in patch size -> 7x7 grid for a 56x56 input
GRID = 7                     # stage-4 swin feature map is 7x7
NUM_PATCHES = GRID * GRID    # 49
PATCH_DIM = 3 * PATCH * PATCH            # 192
KPAD = 256                               # lane-aligned K for patch-embed matmul


# ----------------------------- fused Pallas kernel ---------------------------

def _fused_encoder_call(patches, pe_w, pe_b, fc1_w, fc1_b, *, bpad, tn=128, tk=None):
    """patches: (NUM_PATCHES*bpad, KPAD) bf16, p-major / batch-minor rows.
    Returns (bpad, EMBEDDING_DIM) f32 (caller slices off batch padding)."""
    n_rows, kpad = patches.shape
    cf = pe_w.shape[1]
    k_fc, n_out = fc1_w.shape
    n_patches = NUM_PATCHES
    assert n_rows == n_patches * bpad, (n_rows, n_patches, bpad)

    if tk is None:
        tk = k_fc                      # no K tiling at stand-in width (6.4 MB weight)
    assert n_out % tn == 0 and tn % 128 == 0
    assert k_fc % tk == 0 and tk % 128 == 0
    n_n, n_k = n_out // tn, k_fc // tk

    def kernel(p_ref, pw_ref, pb_ref, w2_ref, b2_ref, o_ref,
               feat_ref, flat_ref, acc_ref):
        k = pl.program_id(1)

        # --- Stage 1: build the lane-dense fc1 input once per N tile (k==0).
        # Gating on the inner "arbitrary" axis is core-safe under megacore:
        # each core runs k==0 for every N tile it owns.  Also zero-init acc.
        @pl.when(k == 0)
        def _prologue():
            acc_ref[...] = jnp.zeros_like(acc_ref)
            # (1) stand-in patch-embed projection: (n_rows, K) @ (K, Cf),
            #     f32 accumulate, bias add, round to bf16 scratch.
            feat_ref[...] = (
                jnp.dot(p_ref[...], pw_ref[...],
                        preferred_element_type=jnp.float32)
                + pb_ref[...]
            ).astype(feat_ref.dtype)
            # (2) relayout to the lane-dense fc1 input.  Rows are p-major /
            #     batch-minor, so patch p for all padded batch rows is the
            #     aligned (bpad, cf) tile landing at lane offset p*cf.
            #     bpad % 16 == 0 -> full packed bf16 vreg stores.
            for p in range(n_patches):
                flat_ref[:, p * cf:(p + 1) * cf] = (
                    feat_ref[p * bpad:(p + 1) * bpad, :])

        # --- Stage 2: fc1, K-accumulated over the streamed (tk, tn) weight block.
        if n_k == 1:
            x_blk = flat_ref[...]
        else:
            start = pl.multiple_of(k * tk, 128)
            x_blk = flat_ref[:, pl.ds(start, tk)]
        acc_ref[...] += jnp.dot(x_blk, w2_ref[...],
                                preferred_element_type=jnp.float32)

        @pl.when(k == n_k - 1)
        def _epilogue():
            o_ref[...] = acc_ref[...] + b2_ref[...]

    cost = pl.CostEstimate(
        flops=2 * n_rows * kpad * cf + 2 * bpad * k_fc * n_out,
        transcendentals=0,
        bytes_accessed=(patches.size * 2 + pe_w.size * 2 + fc1_w.size * 2
                        + pe_b.size * 4 + fc1_b.size * 4 + bpad * n_out * 4),
    )

    return pl.pallas_call(
        kernel,
        out_shape=jax.ShapeDtypeStruct((bpad, n_out), jnp.float32),
        grid_spec=pltpu.PrefetchScalarGridSpec(
            num_scalar_prefetch=0,
            grid=(n_n, n_k),
            in_specs=[
                pl.BlockSpec((n_rows, kpad), lambda j, k: (0, 0)),   # patches (resident)
                pl.BlockSpec((kpad, cf), lambda j, k: (0, 0)),       # pe_w (resident)
                pl.BlockSpec((1, cf), lambda j, k: (0, 0)),          # pe_b
                pl.BlockSpec((tk, tn), lambda j, k: (k, j)),         # fc1_w (streamed)
                pl.BlockSpec((1, tn), lambda j, k: (0, j)),          # fc1_b
            ],
            out_specs=pl.BlockSpec((bpad, tn), lambda j, k: (0, j)),
            scratch_shapes=[
                pltpu.VMEM((n_rows, cf), jnp.bfloat16),              # feat
                pltpu.VMEM((bpad, n_patches * cf), jnp.bfloat16),    # fc1 input
                pltpu.VMEM((bpad, tn), jnp.float32),                 # fc1 K-accumulator
            ],
        ),
        compiler_params=pltpu.CompilerParams(
            dimension_semantics=("parallel", "arbitrary"),
            vmem_limit_bytes=64 * 1024 * 1024,
        ),
        cost_estimate=cost,
    )(patches, pe_w, pe_b, fc1_w, fc1_b)


# ------------------------------- forward pass --------------------------------

def image_encoder_forward(x, params):
    """x: (B, 3, H, W) float32 NCHW.  Returns (B, EMBEDDING_DIM) float32."""
    B, C, H, W = x.shape
    gh, gw = H // PATCH, W // PATCH
    assert gh == GRID and gw == GRID, (gh, gw)
    bpad = ((B + 15) // 16) * 16    # 16-sublane alignment for packed bf16 stores

    # Single XLA layout op: spatial patch tiling, p-major / batch-minor rows.
    patches = x.reshape(B, C, gh, PATCH, gw, PATCH)
    patches = patches.transpose(2, 4, 0, 1, 3, 5).reshape(gh * gw, B, C * PATCH * PATCH)
    # Sublane-align batch (-> bpad) and lane-align K (192 -> 256); cast to bf16.
    patches = jnp.pad(patches, ((0, 0), (0, bpad - B), (0, KPAD - C * PATCH * PATCH)))
    patches = patches.reshape(gh * gw * bpad, KPAD).astype(jnp.bfloat16)

    out_pad = _fused_encoder_call(
        patches, params["pe_w"], params["pe_b"], params["fc1_w"], params["fc1_b"],
        bpad=bpad)
    # Padded batch rows carry bias-derived values; drop them here (XLA slice).
    return out_pad[:B]


# ------------------------------- param init ----------------------------------

def init_params(key):
    k_pe, k_fc = jax.random.split(key)

    # Stand-in patch-embed projection; K padded to KPAD with zero rows.
    pe_core = (jax.random.normal(k_pe, (PATCH_DIM, FEAT_CHANNELS), jnp.float32)
               / math.sqrt(PATCH_DIM))
    pe_w = jnp.zeros((KPAD, FEAT_CHANNELS), jnp.float32).at[:PATCH_DIM].set(pe_core)
    pe_b = jnp.zeros((1, FEAT_CHANNELS), jnp.float32)

    # fc1: torch Linear(Cf*7*7, 512), xavier_uniform_ weight (512, Cf*49), zero bias.
    fan_in = FEAT_CHANNELS * NUM_PATCHES
    fan_out = EMBEDDING_DIM
    bound = math.sqrt(6.0 / (fan_in + fan_out))
    fc1_w_torch = jax.random.uniform(k_fc, (fan_out, fan_in), jnp.float32,
                                     minval=-bound, maxval=bound)
    # Fold the torch NCHW flatten column order (c, h, w) into the weight rows
    # once: kernel flat column = (h*7+w)*Cf + c  <->  torch column = c*49 + h*7 + w.
    w_t = fc1_w_torch.T.reshape(FEAT_CHANNELS, GRID, GRID, fan_out)   # (c,h,w,n)
    fc1_w = w_t.transpose(1, 2, 0, 3).reshape(fan_in, fan_out)        # ((h,w,c), n)
    fc1_b = jnp.zeros((1, EMBEDDING_DIM), jnp.float32)

    return {
        "pe_w": pe_w.astype(jnp.bfloat16),
        "pe_b": pe_b,
        "fc1_w": fc1_w.astype(jnp.bfloat16),
        "fc1_b": fc1_b,
    }


# --------------------------- plain-JAX reference ------------------------------

def reference_forward(x, params):
    """Mirrors the kernel math (same bf16 casts, f32 accumulation) in plain jnp."""
    B, C, H, W = x.shape
    gh, gw = H // PATCH, W // PATCH
    patches = x.reshape(B, C, gh, PATCH, gw, PATCH).transpose(0, 2, 4, 1, 3, 5)
    patches = patches.reshape(B, gh * gw, C * PATCH * PATCH)
    patches = jnp.pad(patches, ((0, 0), (0, 0), (0, KPAD - C * PATCH * PATCH)))
    patches = patches.astype(jnp.bfloat16)
    feat = (jnp.dot(patches, params["pe_w"], preferred_element_type=jnp.float32)
            + params["pe_b"])                                   # (B, 49, Cf)
    flat = feat.astype(jnp.bfloat16).reshape(B, gh * gw * FEAT_CHANNELS)
    out = (jnp.dot(flat, params["fc1_w"], preferred_element_type=jnp.float32)
           + params["fc1_b"])
    return out


# ----------------------------------- main -------------------------------------

if __name__ == "__main__":
    key = jax.random.PRNGKey(0)
    k_x, k_p = jax.random.split(key)

    # small NCHW image batch: 56x56 with PATCH=8 -> 7x7 feature grid (like swin)
    x = jax.random.normal(k_x, (2, 3, 56, 56), jnp.float32)
    params = init_params(k_p)

    fwd = jax.jit(image_encoder_forward)
    out = fwd(x, params)
    jax.block_until_ready(out)

    assert out.shape == (2, EMBEDDING_DIM), out.shape
    assert out.dtype == jnp.float32

    ref = reference_forward(x, params)
    assert jnp.allclose(out, ref, atol=1e-2, rtol=1e-2), float(jnp.abs(out - ref).max())

    print("KERNEL_OK")
</pallas_src>

<mosaic_0001>
module attributes {stable_mosaic.version = 11 : i64} {
  func.func @kernel(%arg0: i32, %arg1: i32, %arg2: memref<784x256xbf16, #tpu.memory_space<vmem>>, %arg3: memref<256x128xbf16, #tpu.memory_space<vmem>>, %arg4: memref<1x128xf32, #tpu.memory_space<vmem>>, %arg5: memref<6272x128xbf16, #tpu.memory_space<vmem>>, %arg6: memref<1x128xf32, #tpu.memory_space<vmem>>, %arg7: memref<16x128xf32, #tpu.memory_space<vmem>>, %arg8: memref<784x128xbf16, #tpu.memory_space<vmem>>, %arg9: memref<16x6272xbf16, #tpu.memory_space<vmem>>, %arg10: memref<16x128xf32, #tpu.memory_space<vmem>>) attributes {dimension_semantics = [#tpu.dimension_semantics<parallel>, #tpu.dimension_semantics<arbitrary>], iteration_bounds = array<i64: 4, 1>, scalar_prefetch = 0 : i64, scratch_operands = 3 : i64, tpu.core_type = #tpu.core_type<tc>, window_params = [{pipeline_mode = #tpu.pipeline_mode<synchronous>, transform_indices = @transform_0, window_bounds = array<i64: 784, 256>}, {pipeline_mode = #tpu.pipeline_mode<synchronous>, transform_indices = @transform_1, window_bounds = array<i64: 256, 128>}, {pipeline_mode = #tpu.pipeline_mode<synchronous>, transform_indices = @transform_2, window_bounds = array<i64: 1, 128>}, {transform_indices = @transform_3, window_bounds = array<i64: 6272, 128>}, {transform_indices = @transform_4, window_bounds = array<i64: 1, 128>}, {transform_indices = @transform_5, window_bounds = array<i64: 16, 128>}]} {
    %c0_i32 = arith.constant 0 : i32
    %0 = arith.cmpi eq, %arg1, %c0_i32 : i32
    %1 = arith.extui %0 : i1 to i32
    %c0_i32_0 = arith.constant 0 : i32
    %2 = arith.cmpi ne, %1, %c0_i32_0 : i32
    scf.if %2 {
      %cst_10 = arith.constant 0.000000e+00 : f32
      %12 = vector.broadcast %cst_10 : f32 to vector<16x128xf32>
      %c0_11 = arith.constant 0 : index
      %c0_12 = arith.constant 0 : index
      %13 = vector.load %arg10[%c0_11, %c0_12] : memref<16x128xf32, #tpu.memory_space<vmem>>, vector<16x128xf32>
      tpu.vector_store %arg10[%c0_11, %c0_12], %12 {strides = array<i32>} : memref<16x128xf32, #tpu.memory_space<vmem>>, vector<16x128xf32>,
      %c0_13 = arith.constant 0 : index
      %c0_14 = arith.constant 0 : index
      %14 = vector.load %arg2[%c0_13, %c0_14] : memref<784x256xbf16, #tpu.memory_space<vmem>>, vector<784x256xbf16>
      %c0_15 = arith.constant 0 : index
      %c0_16 = arith.constant 0 : index
      %15 = vector.load %arg3[%c0_15, %c0_16] : memref<256x128xbf16, #tpu.memory_space<vmem>>, vector<256x128xbf16>
      %cst_17 = arith.constant dense<0.000000e+00> : vector<784x128xf32>
      %16 = tpu.matmul %14, %15, %cst_17 {dimension_numbers = #tpu.dot_dimension_numbers<[1], [0], [0], [1], [0, 0, 1, 1], [], []>} : vector<784x256xbf16>, vector<256x128xbf16>, vector<784x128xf32> -> vector<784x128xf32>
      %c0_18 = arith.constant 0 : index
      %c0_19 = arith.constant 0 : index
      %17 = vector.load %arg4[%c0_18, %c0_19] : memref<1x128xf32, #tpu.memory_space<vmem>>, vector<1x128xf32>
      %18 = vector.broadcast %17 : vector<1x128xf32> to vector<784x128xf32>
      %19 = arith.addf %16, %18 : vector<784x128xf32>
      %20 = arith.truncf %19 : vector<784x128xf32> to vector<784x128xbf16>
      %c0_20 = arith.constant 0 : index
      %c0_21 = arith.constant 0 : index
      %21 = vector.load %arg8[%c0_20, %c0_21] : memref<784x128xbf16, #tpu.memory_space<vmem>>, vector<784x128xbf16>
      tpu.vector_store %arg8[%c0_20, %c0_21], %20 {strides = array<i32>} : memref<784x128xbf16, #tpu.memory_space<vmem>>, vector<784x128xbf16>,
      %c0_22 = arith.constant 0 : index
      %c0_23 = arith.constant 0 : index
      %22 = vector.load %arg8[%c0_22, %c0_23] : memref<784x128xbf16, #tpu.memory_space<vmem>>, vector<16x128xbf16>
      %c0_24 = arith.constant 0 : index
      %c0_25 = arith.constant 0 : index
      %23 = vector.load %arg9[%c0_24, %c0_25] : memref<16x6272xbf16, #tpu.memory_space<vmem>>, vector<16x128xbf16>
      tpu.vector_store %arg9[%c0_24, %c0_25], %22 {strides = array<i32>} : memref<16x6272xbf16, #tpu.memory_space<vmem>>, vector<16x128xbf16>,
      %c16 = arith.constant 16 : index
      %c0_26 = arith.constant 0 : index
      %24 = vector.load %arg8[%c16, %c0_26] : memref<784x128xbf16, #tpu.memory_space<vmem>>, vector<16x128xbf16>
      %c0_27 = arith.constant 0 : index
      %c128 = arith.constant 128 : index
      %25 = vector.load %arg9[%c0_27, %c128] : memref<16x6272xbf16, #tpu.memory_space<vmem>>, vector<16x128xbf16>
      tpu.vector_store %arg9[%c0_27, %c128], %24 {strides = array<i32>} : memref<16x6272xbf16, #tpu.memory_space<vmem>>, vector<16x128xbf16>,
      %c32 = arith.constant 32 : index
      %c0_28 = arith.constant 0 : index
      %26 = vector.load %arg8[%c32, %c0_28] : memref<784x128xbf16, #tpu.memory_space<vmem>>, vector<16x128xbf16>
      %c0_29 = arith.constant 0 : index
      %c256 = arith.constant 256 : index
      %27 = vector.load %arg9[%c0_29, %c256] : memref<16x6272xbf16, #tpu.memory_space<vmem>>, vector<16x128xbf16>
      tpu.vector_store %arg9[%c0_29, %c256], %26 {strides = array<i32>} : memref<16x6272xbf16, #tpu.memory_space<vmem>>, vector<16x128xbf16>,
      %c48 = arith.constant 48 : index
      %c0_30 = arith.constant 0 : index
      %28 = vector.load %arg8[%c48, %c0_30] : memref<784x128xbf16, #tpu.memory_space<vmem>>, vector<16x128xbf16>
      %c0_31 = arith.constant 0 : index
      %c384 = arith.constant 384 : index
      %29 = vector.load %arg9[%c0_31, %c384] : memref<16x6272xbf16, #tpu.memory_space<vmem>>, vector<16x128xbf16>
      tpu.vector_store %arg9[%c0_31, %c384], %28 {strides = array<i32>} : memref<16x6272xbf16, #tpu.memory_space<vmem>>, vector<16x128xbf16>,
      %c64 = arith.constant 64 : index
      %c0_32 = arith.constant 0 : index
      %30 = vector.load %arg8[%c64, %c0_32] : memref<784x128xbf16, #tpu.memory_space<vmem>>, vector<16x128xbf16>
      %c0_33 = arith.constant 0 : index
      %c512 = arith.constant 512 : index
      %31 = vector.load %arg9[%c0_33, %c512] : memref<16x6272xbf16, #tpu.memory_space<vmem>>, vector<16x128xbf16>
      tpu.vector_store %arg9[%c0_33, %c512], %30 {strides = array<i32>} : memref<16x6272xbf16, #tpu.memory_space<vmem>>, vector<16x128xbf16>,
      %c80 = arith.constant 80 : index
      %c0_34 = arith.constant 0 : index
      %32 = vector.load %arg8[%c80, %c0_34] : memref<784x128xbf16, #tpu.memory_space<vmem>>, vector<16x128xbf16>
      %c0_35 = arith.constant 0 : index
      %c640 = arith.constant 640 : index
      %33 = vector.load %arg9[%c0_35, %c640] : memref<16x6272xbf16, #tpu.memory_space<vmem>>, vector<16x128xbf16>
      tpu.vector_store %arg9[%c0_35, %c640], %32 {strides = array<i32>} : memref<16x6272xbf16, #tpu.memory_space<vmem>>, vector<16x128xbf16>,
      %c96 = arith.constant 96 : index
      %c0_36 = arith.constant 0 : index
      %34 = vector.load %arg8[%c96, %c0_36] : memref<784x128xbf16, #tpu.memory_space<vmem>>, vector<16x128xbf16>
      %c0_37 = arith.constant 0 : index
      %c768 = arith.constant 768 : index
      %35 = vector.load %arg9[%c0_37, %c768] : memref<16x6272xbf16, #tpu.memory_space<vmem>>, vector<16x128xbf16>
      tpu.vector_store %arg9[%c0_37, %c768], %34 {strides = array<i32>} : memref<16x6272xbf16, #tpu.memory_space<vmem>>, vector<16x128xbf16>,
      %c112 = arith.constant 112 : index
      %c0_38 = arith.constant 0 : index
      %36 = vector.load %arg8[%c112, %c0_38] : memref<784x128xbf16, #tpu.memory_space<vmem>>, vector<16x128xbf16>
      %c0_39 = arith.constant 0 : index
      %c896 = arith.constant 896 : index
      %37 = vector.load %arg9[%c0_39, %c896] : memref<16x6272xbf16, #tpu.memory_space<vmem>>, vector<16x128xbf16>
      tpu.vector_store %arg9[%c0_39, %c896], %36 {strides = array<i32>} : memref<16x6272xbf16, #tpu.memory_space<vmem>>, vector<16x128xbf16>,
      %c128_40 = arith.constant 128 : index
      %c0_41 = arith.constant 0 : index
      %38 = vector.load %arg8[%c128_40, %c0_41] : memref<784x128xbf16, #tpu.memory_space<vmem>>, vector<16x128xbf16>
      %c0_42 = arith.constant 0 : index
      %c1024 = arith.constant 1024 : index
      %39 = vector.load %arg9[%c0_42, %c1024] : memref<16x6272xbf16, #tpu.memory_space<vmem>>, vector<16x128xbf16>
      tpu.vector_store %arg9[%c0_42, %c1024], %38 {strides = array<i32>} : memref<16x6272xbf16, #tpu.memory_space<vmem>>, vector<16x128xbf16>,
      %c144 = arith.constant 144 : index
      %c0_43 = arith.constant 0 : index
      %40 = vector.load %arg8[%c144, %c0_43] : memref<784x128xbf16, #tpu.memory_space<vmem>>, vector<16x128xbf16>
      %c0_44 = arith.constant 0 : index
      %c1152 = arith.constant 1152 : index
      %41 = vector.load %arg9[%c0_44, %c1152] : memref<16x6272xbf16, #tpu.memory_space<vmem>>, vector<16x128xbf16>
      tpu.vector_store %arg9[%c0_44, %c1152], %40 {strides = array<i32>} : memref<16x6272xbf16, #tpu.memory_space<vmem>>, vector<16x128xbf16>,
      %c160 = arith.constant 160 : index
      %c0_45 = arith.constant 0 : index
      %42 = vector.load %arg8[%c160, %c0_45] : memref<784x128xbf16, #tpu.memory_space<vmem>>, vector<16x128xbf16>
      %c0_46 = arith.constant 0 : index
      %c1280 = arith.constant 1280 : index
      %43 = vector.load %arg9[%c0_46, %c1280] : memref<16x6272xbf16, #tpu.memory_space<vmem>>, vector<16x128xbf16>
      tpu.vector_store %arg9[%c0_46, %c1280], %42 {strides = array<i32>} : memref<16x6272xbf16, #tpu.memory_space<vmem>>, vector<16x128xbf16>,
      %c176 = arith.constant 176 : index
      %c0_47 = arith.constant 0 : index
      %44 = vector.load %arg8[%c176, %c0_47] : memref<784x128xbf16, #tpu.memory_space<vmem>>, vector<16x128xbf16>
      %c0_48 = arith.constant 0 : index
      %c1408 = arith.constant 1408 : index
      %45 = vector.load %arg9[%c0_48, %c1408] : memref<16x6272xbf16, #tpu.memory_space<vmem>>, vector<16x128xbf16>
      tpu.vector_store %arg9[%c0_48, %c1408], %44 {strides = array<i32>} : memref<16x6272xbf16, #tpu.memory_space<vmem>>, vector<16x128xbf16>,
      %c192 = arith.constant 192 : index
      %c0_49 = arith.constant 0 : index
      %46 = vector.load %arg8[%c192, %c0_49] : memref<784x128xbf16, #tpu.memory_space<vmem>>, vector<16x128xbf16>
      %c0_50 = arith.constant 0 : index
      %c1536 = arith.constant 1536 : index
      %47 = vector.load %arg9[%c0_50, %c1536] : memref<16x6272xbf16, #tpu.memory_space<vmem>>, vector<16x128xbf16>
      tpu.vector_store %arg9[%c0_50, %c1536], %46 {strides = array<i32>} : memref<16x6272xbf16, #tpu.memory_space<vmem>>, vector<16x128xbf16>,
      %c208 = arith.constant 208 : index
      %c0_51 = arith.constant 0 : index
      %48 = vector.load %arg8[%c208, %c0_51] : memref<784x128xbf16, #tpu.memory_space<vmem>>, vector<16x128xbf16>
      %c0_52 = arith.constant 0 : index
      %c1664 = arith.constant 1664 : index
      %49 = vector.load %arg9[%c0_52, %c1664] : memref<16x6272xbf16, #tpu.memory_space<vmem>>, vector<16x128xbf16>
      tpu.vector_store %arg9[%c0_52, %c1664], %48 {strides = array<i32>} : memref<16x6272xbf16, #tpu.memory_space<vmem>>, vector<16x128xbf16>,
      %c224 = arith.constant 224 : index
      %c0_53 = arith.constant 0 : index
      %50 = vector.load %arg8[%c224, %c0_53] : memref<784x128xbf16, #tpu.memory_space<vmem>>, vector<16x128xbf16>
      %c0_54 = arith.constant 0 : index
      %c1792 = arith.constant 1792 : index
      %51 = vector.load %arg9[%c0_54, %c1792] : memref<16x6272xbf16, #tpu.memory_space<vmem>>, vector<16x128xbf16>
      tpu.vector_store %arg9[%c0_54, %c1792], %50 {strides = array<i32>} : memref<16x6272xbf16, #tpu.memory_space<vmem>>, vector<16x128xbf16>,
      %c240 = arith.constant 240 : index
      %c0_55 = arith.constant 0 : index
      %52 = vector.load %arg8[%c240, %c0_55] : memref<784x128xbf16, #tpu.memory_space<vmem>>, vector<16x128xbf16>
      %c0_56 = arith.constant 0 : index
      %c1920 = arith.constant 1920 : index
      %53 = vector.load %arg9[%c0_56, %c1920] : memref<16x6272xbf16, #tpu.memory_space<vmem>>, vector<16x128xbf16>
      tpu.vector_store %arg9[%c0_56, %c1920], %52 {strides = array<i32>} : memref<16x6272xbf16, #tpu.memory_space<vmem>>, vector<16x128xbf16>,
      %c256_57 = arith.constant 256 : index
      %c0_58 = arith.constant 0 : index
      %54 = vector.load %arg8[%c256_57, %c0_58] : memref<784x128xbf16, #tpu.memory_space<vmem>>, vector<16x128xbf16>
      %c0_59 = arith.constant 0 : index
      %c2048 = arith.constant 2048 : index
      %55 = vector.load %arg9[%c0_59, %c2048] : memref<16x6272xbf16, #tpu.memory_space<vmem>>, vector<16x128xbf16>
      tpu.vector_store %arg9[%c0_59, %c2048], %54 {strides = array<i32>} : memref<16x6272xbf16, #tpu.memory_space<vmem>>, vector<16x128xbf16>,
      %c272 = arith.constant 272 : index
      %c0_60 = arith.constant 0 : index
      %56 = vector.load %arg8[%c272, %c0_60] : memref<784x128xbf16, #tpu.memory_space<vmem>>, vector<16x128xbf16>
      %c0_61 = arith.constant 0 : index
      %c2176 = arith.constant 2176 : index
      %57 = vector.load %arg9[%c0_61, %c2176] : memref<16x6272xbf16, #tpu.memory_space<vmem>>, vector<16x128xbf16>
      tpu.vector_store %arg9[%c0_61, %c2176], %56 {strides = array<i32>} : memref<16x6272xbf16, #tpu.memory_space<vmem>>, vector<16x128xbf16>,
      %c288 = arith.constant 288 : index
      %c0_62 = arith.constant 0 : index
      %58 = vector.load %arg8[%c288, %c0_62] : memref<784x128xbf16, #tpu.memory_space<vmem>>, vector<16x128xbf16>
      %c0_63 = arith.constant 0 : index
      %c2304 = arith.constant 2304 : index
      %59 = vector.load %arg9[%c0_63, %c2304] : memref<16x6272xbf16, #tpu.memory_space<vmem>>, vector<16x128xbf16>
      tpu.vector_store %arg9[%c0_63, %c2304], %58 {strides = array<i32>} : memref<16x6272xbf16, #tpu.memory_space<vmem>>, vector<16x128xbf16>,
      %c304 = arith.constant 304 : index
      %c0_64 = arith.constant 0 : index
      %60 = vector.load %arg8[%c304, %c0_64] : memref<784x128xbf16, #tpu.memory_space<vmem>>, vector<16x128xbf16>
      %c0_65 = arith.constant 0 : index
      %c2432 = arith.constant 2432 : index
      %61 = vector.load %arg9[%c0_65, %c2432] : memref<16x6272xbf16, #tpu.memory_space<vmem>>, vector<16x128xbf16>
      tpu.vector_store %arg9[%c0_65, %c2432], %60 {strides = array<i32>} : memref<16x6272xbf16, #tpu.memory_space<vmem>>, vector<16x128xbf16>,
      %c320 = arith.constant 320 : index
      %c0_66 = arith.constant 0 : index
      %62 = vector.load %arg8[%c320, %c0_66] : memref<784x128xbf16, #tpu.memory_space<vmem>>, vector<16x128xbf16>
      %c0_67 = arith.constant 0 : index
      %c2560 = arith.constant 2560 : index
      %63 = vector.load %arg9[%c0_67, %c2560] : memref<16x6272xbf16, #tpu.memory_space<vmem>>, vector<16x128xbf16>
      tpu.vector_store %arg9[%c0_67, %c2560], %62 {strides = array<i32>} : memref<16x6272xbf16, #tpu.memory_space<vmem>>, vector<16x128xbf16>,
      %c336 = arith.constant 336 : index
      %c0_68 = arith.constant 0 : index
      %64 = vector.load %arg8[%c336, %c0_68] : memref<784x128xbf16, #tpu.memory_space<vmem>>, vector<16x128xbf16>
      %c0_69 = arith.constant 0 : index
      %c2688 = arith.constant 2688 : index
      %65 = vector.load %arg9[%c0_69, %c2688] : memref<16x6272xbf16, #tpu.memory_space<vmem>>, vector<16x128xbf16>
      tpu.vector_store %arg9[%c0_69, %c2688], %64 {strides = array<i32>} : memref<16x6272xbf16, #tpu.memory_space<vmem>>, vector<16x128xbf16>,
      %c352 = arith.constant 352 : index
      %c0_70 = arith.constant 0 : index
      %66 = vector.load %arg8[%c352, %c0_70] : memref<784x128xbf16, #tpu.memory_space<vmem>>, vector<16x128xbf16>
      %c0_71 = arith.constant 0 : index
      %c2816 = arith.constant 2816 : index
      %67 = vector.load %arg9[%c0_71, %c2816] : memref<16x6272xbf16, #tpu.memory_space<vmem>>, vector<16x128xbf16>
      tpu.vector_store %arg9[%c0_71, %c2816], %66 {strides = array<i32>} : memref<16x6272xbf16, #tpu.memory_space<vmem>>, vector<16x128xbf16>,
      %c368 = arith.constant 368 : index
      %c0_72 = arith.constant 0 : index
      %68 = vector.load %arg8[%c368, %c0_72] : memref<784x128xbf16, #tpu.memory_space<vmem>>, vector<16x128xbf16>
      %c0_73 = arith.constant 0 : index
      %c2944 = arith.constant 2944 : index
      %69 = vector.load %arg9[%c0_73, %c2944] : memref<16x6272xbf16, #tpu.memory_space<vmem>>, vector<16x128xbf16>
      tpu.vector_store %arg9[%c0_73, %c2944], %68 {strides = array<i32>} : memref<16x6272xbf16, #tpu.memory_space<vmem>>, vector<16x128xbf16>,
      %c384_74 = arith.constant 384 : index
      %c0_75 = arith.constant 0 : index
      %70 = vector.load %arg8[%c384_74, %c0_75] : memref<784x128xbf16, #tpu.memory_space<vmem>>, vector<16x128xbf16>
      %c0_76 = arith.constant 0 : index
      %c3072 = arith.constant 3072 : index
      %71 = vector.load %arg9[%c0_76, %c3072] : memref<16x6272xbf16, #tpu.memory_space<vmem>>, vector<16x128xbf16>
      tpu.vector_store %arg9[%c0_76, %c3072], %70 {strides = array<i32>} : memref<16x6272xbf16, #tpu.memory_space<vmem>>, vector<16x128xbf16>,
      %c400 = arith.constant 400 : index
      %c0_77 = arith.constant 0 : index
      %72 = vector.load %arg8[%c400, %c0_77] : memref<784x128xbf16, #tpu.memory_space<vmem>>, vector<16x128xbf16>
      %c0_78 = arith.constant 0 : index
      %c3200 = arith.constant 3200 : index
      %73 = vector.load %arg9[%c0_78, %c3200] : memref<16x6272xbf16, #tpu.memory_space<vmem>>, vector<16x128xbf16>
      tpu.vector_store %arg9[%c0_78, %c3200], %72 {strides = array<i32>} : memref<16x6272xbf16, #tpu.memory_space<vmem>>, vector<16x128xbf16>,
      %c416 = arith.constant 416 : index
      %c0_79 = arith.constant 0 : index
      %74 = vector.load %arg8[%c416, %c0_79] : memref<784x128xbf16, #tpu.memory_space<vmem>>, vector<16x128xbf16>
      %c0_80 = arith.constant 0 : index
      %c3328 = arith.constant 3328 : index
      %75 = vector.load %arg9[%c0_80, %c3328] : memref<16x6272xbf16, #tpu.memory_space<vmem>>, vector<16x128xbf16>
      tpu.vector_store %arg9[%c0_80, %c3328], %74 {strides = array<i32>} : memref<16x6272xbf16, #tpu.memory_space<vmem>>, vector<16x128xbf16>,
      %c432 = arith.constant 432 : index
      %c0_81 = arith.constant 0 : index
      %76 = vector.load %arg8[%c432, %c0_81] : memref<784x128xbf16, #tpu.memory_space<vmem>>, vector<16x128xbf16>
      %c0_82 = arith.constant 0 : index
      %c3456 = arith.constant 3456 : index
      %77 = vector.load %arg9[%c0_82, %c3456] : memref<16x6272xbf16, #tpu.memory_space<vmem>>, vector<16x128xbf16>
      tpu.vector_store %arg9[%c0_82, %c3456], %76 {strides = array<i32>} : memref<16x6272xbf16, #tpu.memory_space<vmem>>, vector<16x128xbf16>,
      %c448 = arith.constant 448 : index
      %c0_83 = arith.constant 0 : index
      %78 = vector.load %arg8[%c448, %c0_83] : memref<784x128xbf16, #tpu.memory_space<vmem>>, vector<16x128xbf16>
      %c0_84 = arith.constant 0 : index
      %c3584 = arith.constant 3584 : index
      %79 = vector.load %arg9[%c0_84, %c3584] : memref<16x6272xbf16, #tpu.memory_space<vmem>>, vector<16x128xbf16>
      tpu.vector_store %arg9[%c0_84, %c3584], %78 {strides = array<i32>} : memref<16x6272xbf16, #tpu.memory_space<vmem>>, vector<16x128xbf16>,
      %c464 = arith.constant 464 : index
      %c0_85 = arith.constant 0 : index
      %80 = vector.load %arg8[%c464, %c0_85] : memref<784x128xbf16, #tpu.memory_space<vmem>>, vector<16x128xbf16>
      %c0_86 = arith.constant 0 : index
      %c3712 = arith.constant 3712 : index
      %81 = vector.load %arg9[%c0_86, %c3712] : memref<16x6272xbf16, #tpu.memory_space<vmem>>, vector<16x128xbf16>
      tpu.vector_store %arg9[%c0_86, %c3712], %80 {strides = array<i32>} : memref<16x6272xbf16, #tpu.memory_space<vmem>>, vector<16x128xbf16>,
      %c480 = arith.constant 480 : index
      %c0_87 = arith.constant 0 : index
      %82 = vector.load %arg8[%c480, %c0_87] : memref<784x128xbf16, #tpu.memory_space<vmem>>, vector<16x128xbf16>
      %c0_88 = arith.constant 0 : index
      %c3840 = arith.constant 3840 : index
      %83 = vector.load %arg9[%c0_88, %c3840] : memref<16x6272xbf16, #tpu.memory_space<vmem>>, vector<16x128xbf16>
      tpu.vector_store %arg9[%c0_88, %c3840], %82 {strides = array<i32>} : memref<16x6272xbf16, #tpu.memory_space<vmem>>, vector<16x128xbf16>,
      %c496 = arith.constant 496 : index
      %c0_89 = arith.constant 0 : index
      %84 = vector.load %arg8[%c496, %c0_89] : memref<784x128xbf16, #tpu.memory_space<vmem>>, vector<16x128xbf16>
      %c0_90 = arith.constant 0 : index
      %c3968 = arith.constant 3968 : index
      %85 = vector.load %arg9[%c0_90, %c3968] : memref<16x6272xbf16, #tpu.memory_space<vmem>>, vector<16x128xbf16>
      tpu.vector_store %arg9[%c0_90, %c3968], %84 {strides = array<i32>} : memref<16x6272xbf16, #tpu.memory_space<vmem>>, vector<16x128xbf16>,
      %c512_91 = arith.constant 512 : index
      %c0_92 = arith.constant 0 : index
      %86 = vector.load %arg8[%c512_91, %c0_92] : memref<784x128xbf16, #tpu.memory_space<vmem>>, vector<16x128xbf16>
      %c0_93 = arith.constant 0 : index
      %c4096 = arith.constant 4096 : index
      %87 = vector.load %arg9[%c0_93, %c4096] : memref<16x6272xbf16, #tpu.memory_space<vmem>>, vector<16x128xbf16>
      tpu.vector_store %arg9[%c0_93, %c4096], %86 {strides = array<i32>} : memref<16x6272xbf16, #tpu.memory_space<vmem>>, vector<16x128xbf16>,
      %c528 = arith.constant 528 : index
      %c0_94 = arith.constant 0 : index
      %88 = vector.load %arg8[%c528, %c0_94] : memref<784x128xbf16, #tpu.memory_space<vmem>>, vector<16x128xbf16>
      %c0_95 = arith.constant 0 : index
      %c4224 = arith.constant 4224 : index
      %89 = vector.load %arg9[%c0_95, %c4224] : memref<16x6272xbf16, #tpu.memory_space<vmem>>, vector<16x128xbf16>
      tpu.vector_store %arg9[%c0_95, %c4224], %88 {strides = array<i32>} : memref<16x6272xbf16, #tpu.memory_space<vmem>>, vector<16x128xbf16>,
      %c544 = arith.constant 544 : index
      %c0_96 = arith.constant 0 : index
      %90 = vector.load %arg8[%c544, %c0_96] : memref<784x128xbf16, #tpu.memory_space<vmem>>, vector<16x128xbf16>
      %c0_97 = arith.constant 0 : index
      %c4352 = arith.constant 4352 : index
      %91 = vector.load %arg9[%c0_97, %c4352] : memref<16x6272xbf16, #tpu.memory_space<vmem>>, vector<16x128xbf16>
      tpu.vector_store %arg9[%c0_97, %c4352], %90 {strides = array<i32>} : memref<16x6272xbf16, #tpu.memory_space<vmem>>, vector<16x128xbf16>,
      %c560 = arith.constant 560 : index
      %c0_98 = arith.constant 0 : index
      %92 = vector.load %arg8[%c560, %c0_98] : memref<784x128xbf16, #tpu.memory_space<vmem>>, vector<16x128xbf16>
      %c0_99 = arith.constant 0 : index
      %c4480 = arith.constant 4480 : index
      %93 = vector.load %arg9[%c0_99, %c4480] : memref<16x6272xbf16, #tpu.memory_space<vmem>>, vector<16x128xbf16>
      tpu.vector_store %arg9[%c0_99, %c4480], %92 {strides = array<i32>} : memref<16x6272xbf16, #tpu.memory_space<vmem>>, vector<16x128xbf16>,
      %c576 = arith.constant 576 : index
      %c0_100 = arith.constant 0 : index
      %94 = vector.load %arg8[%c576, %c0_100] : memref<784x128xbf16, #tpu.memory_space<vmem>>, vector<16x128xbf16>
      %c0_101 = arith.constant 0 : index
      %c4608 = arith.constant 4608 : index
      %95 = vector.load %arg9[%c0_101, %c4608] : memref<16x6272xbf16, #tpu.memory_space<vmem>>, vector<16x128xbf16>
      tpu.vector_store %arg9[%c0_101, %c4608], %94 {strides = array<i32>} : memref<16x6272xbf16, #tpu.memory_space<vmem>>, vector<16x128xbf16>,
      %c592 = arith.constant 592 : index
      %c0_102 = arith.constant 0 : index
      %96 = vector.load %arg8[%c592, %c0_102] : memref<784x128xbf16, #tpu.memory_space<vmem>>, vector<16x128xbf16>
      %c0_103 = arith.constant 0 : index
      %c4736 = arith.constant 4736 : index
      %97 = vector.load %arg9[%c0_103, %c4736] : memref<16x6272xbf16, #tpu.memory_space<vmem>>, vector<16x128xbf16>
      tpu.vector_store %arg9[%c0_103, %c4736], %96 {strides = array<i32>} : memref<16x6272xbf16, #tpu.memory_space<vmem>>, vector<16x128xbf16>,
      %c608 = arith.constant 608 : index
      %c0_104 = arith.constant 0 : index
      %98 = vector.load %arg8[%c608, %c0_104] : memref<784x128xbf16, #tpu.memory_space<vmem>>, vector<16x128xbf16>
      %c0_105 = arith.constant 0 : index
      %c4864 = arith.constant 4864 : index
      %99 = vector.load %arg9[%c0_105, %c4864] : memref<16x6272xbf16, #tpu.memory_space<vmem>>, vector<16x128xbf16>
      tpu.vector_store %arg9[%c0_105, %c4864], %98 {strides = array<i32>} : memref<16x6272xbf16, #tpu.memory_space<vmem>>, vector<16x128xbf16>,
      %c624 = arith.constant 624 : index
      %c0_106 = arith.constant 0 : index
      %100 = vector.load %arg8[%c624, %c0_106] : memref<784x128xbf16, #tpu.memory_space<vmem>>, vector<16x128xbf16>
      %c0_107 = arith.constant 0 : index
      %c4992 = arith.constant 4992 : index
      %101 = vector.load %arg9[%c0_107, %c4992] : memref<16x6272xbf16, #tpu.memory_space<vmem>>, vector<16x128xbf16>
      tpu.vector_store %arg9[%c0_107, %c4992], %100 {strides = array<i32>} : memref<16x6272xbf16, #tpu.memory_space<vmem>>, vector<16x128xbf16>,
      %c640_108 = arith.constant 640 : index
      %c0_109 = arith.constant 0 : index
      %102 = vector.load %arg8[%c640_108, %c0_109] : memref<784x128xbf16, #tpu.memory_space<vmem>>, vector<16x128xbf16>
      %c0_110 = arith.constant 0 : index
      %c5120 = arith.constant 5120 : index
      %103 = vector.load %arg9[%c0_110, %c5120] : memref<16x6272xbf16, #tpu.memory_space<vmem>>, vector<16x128xbf16>
      tpu.vector_store %arg9[%c0_110, %c5120], %102 {strides = array<i32>} : memref<16x6272xbf16, #tpu.memory_space<vmem>>, vector<16x128xbf16>,
      %c656 = arith.constant 656 : index
      %c0_111 = arith.constant 0 : index
      %104 = vector.load %arg8[%c656, %c0_111] : memref<784x128xbf16, #tpu.memory_space<vmem>>, vector<16x128xbf16>
      %c0_112 = arith.constant 0 : index
      %c5248 = arith.constant 5248 : index
      %105 = vector.load %arg9[%c0_112, %c5248] : memref<16x6272xbf16, #tpu.memory_space<vmem>>, vector<16x128xbf16>
      tpu.vector_store %arg9[%c0_112, %c5248], %104 {strides = array<i32>} : memref<16x6272xbf16, #tpu.memory_space<vmem>>, vector<16x128xbf16>,
      %c672 = arith.constant 672 : index
      %c0_113 = arith.constant 0 : index
      %106 = vector.load %arg8[%c672, %c0_113] : memref<784x128xbf16, #tpu.memory_space<vmem>>, vector<16x128xbf16>
      %c0_114 = arith.constant 0 : index
      %c5376 = arith.constant 5376 : index
      %107 = vector.load %arg9[%c0_114, %c5376] : memref<16x6272xbf16, #tpu.memory_space<vmem>>, vector<16x128xbf16>
      tpu.vector_store %arg9[%c0_114, %c5376], %106 {strides = array<i32>} : memref<16x6272xbf16, #tpu.memory_space<vmem>>, vector<16x128xbf16>,
      %c688 = arith.constant 688 : index
      %c0_115 = arith.constant 0 : index
      %108 = vector.load %arg8[%c688, %c0_115] : memref<784x128xbf16, #tpu.memory_space<vmem>>, vector<16x128xbf16>
      %c0_116 = arith.constant 0 : index
      %c5504 = arith.constant 5504 : index
      %109 = vector.load %arg9[%c0_116, %c5504] : memref<16x6272xbf16, #tpu.memory_space<vmem>>, vector<16x128xbf16>
      tpu.vector_store %arg9[%c0_116, %c5504], %108 {strides = array<i32>} : memref<16x6272xbf16, #tpu.memory_space<vmem>>, vector<16x128xbf16>,
      %c704 = arith.constant 704 : index
      %c0_117 = arith.constant 0 : index
      %110 = vector.load %arg8[%c704, %c0_117] : memref<784x128xbf16, #tpu.memory_space<vmem>>, vector<16x128xbf16>
      %c0_118 = arith.constant 0 : index
      %c5632 = arith.constant 5632 : index
      %111 = vector.load %arg9[%c0_118, %c5632] : memref<16x6272xbf16, #tpu.memory_space<vmem>>, vector<16x128xbf16>
      tpu.vector_store %arg9[%c0_118, %c5632], %110 {strides = array<i32>} : memref<16x6272xbf16, #tpu.memory_space<vmem>>, vector<16x128xbf16>,
      %c720 = arith.constant 720 : index
      %c0_119 = arith.constant 0 : index
      %112 = vector.load %arg8[%c720, %c0_119] : memref<784x128xbf16, #tpu.memory_space<vmem>>, vector<16x128xbf16>
      %c0_120 = arith.constant 0 : index
      %c5760 = arith.constant 5760 : index
      %113 = vector.load %arg9[%c0_120, %c5760] : memref<16x6272xbf16, #tpu.memory_space<vmem>>, vector<16x128xbf16>
      tpu.vector_store %arg9[%c0_120, %c5760], %112 {strides = array<i32>} : memref<16x6272xbf16, #tpu.memory_space<vmem>>, vector<16x128xbf16>,
      %c736 = arith.constant 736 : index
      %c0_121 = arith.constant 0 : index
      %114 = vector.load %arg8[%c736, %c0_121] : memref<784x128xbf16, #tpu.memory_space<vmem>>, vector<16x128xbf16>
      %c0_122 = arith.constant 0 : index
      %c5888 = arith.constant 5888 : index
      %115 = vector.load %arg9[%c0_122, %c5888] : memref<16x6272xbf16, #tpu.memory_space<vmem>>, vector<16x128xbf16>
      tpu.vector_store %arg9[%c0_122, %c5888], %114 {strides = array<i32>} : memref<16x6272xbf16, #tpu.memory_space<vmem>>, vector<16x128xbf16>,
      %c752 = arith.constant 752 : index
      %c0_123 = arith.constant 0 : index
      %116 = vector.load %arg8[%c752, %c0_123] : memref<784x128xbf16, #tpu.memory_space<vmem>>, vector<16x128xbf16>
      %c0_124 = arith.constant 0 : index
      %c6016 = arith.constant 6016 : index
      %117 = vector.load %arg9[%c0_124, %c6016] : memref<16x6272xbf16, #tpu.memory_space<vmem>>, vector<16x128xbf16>
      tpu.vector_store %arg9[%c0_124, %c6016], %116 {strides = array<i32>} : memref<16x6272xbf16, #tpu.memory_space<vmem>>, vector<16x128xbf16>,
      %c768_125 = arith.constant 768 : index
      %c0_126 = arith.constant 0 : index
      %118 = vector.load %arg8[%c768_125, %c0_126] : memref<784x128xbf16, #tpu.memory_space<vmem>>, vector<16x128xbf16>
      %c0_127 = arith.constant 0 : index
      %c6144 = arith.constant 6144 : index
      %119 = vector.load %arg9[%c0_127, %c6144] : memref<16x6272xbf16, #tpu.memory_space<vmem>>, vector<16x128xbf16>
      tpu.vector_store %arg9[%c0_127, %c6144], %118 {strides = array<i32>} : memref<16x6272xbf16, #tpu.memory_space<vmem>>, vector<16x128xbf16>,
    } else {
    }
    %c0 = arith.constant 0 : index
    %c0_1 = arith.constant 0 : index
    %3 = vector.load %arg9[%c0, %c0_1] : memref<16x6272xbf16, #tpu.memory_space<vmem>>, vector<16x6272xbf16>
    %c0_2 = arith.constant 0 : index
    %c0_3 = arith.constant 0 : index
    %4 = vector.load %arg10[%c0_2, %c0_3] : memref<16x128xf32, #tpu.memory_space<vmem>>, vector<16x128xf32>
    %c0_4 = arith.constant 0 : index
    %c0_5 = arith.constant 0 : index
    %5 = vector.load %arg5[%c0_4, %c0_5] : memref<6272x128xbf16, #tpu.memory_space<vmem>>, vector<6272x128xbf16>
    %cst = arith.constant dense<0.000000e+00> : vector<16x128xf32>
    %6 = tpu.matmul %3, %5, %cst {dimension_numbers = #tpu.dot_dimension_numbers<[1], [0], [0], [1], [0, 0, 1, 1], [], []>} : vector<16x6272xbf16>, vector<6272x128xbf16>, vector<16x128xf32> -> vector<16x128xf32>
    %7 = arith.addf %4, %6 : vector<16x128xf32>
    %c0_6 = arith.constant 0 : index
    %c0_7 = arith.constant 0 : index
    %8 = vector.load %arg10[%c0_6, %c0_7] : memref<16x128xf32, #tpu.memory_space<vmem>>, vector<16x128xf32>
    tpu.vector_store %arg10[%c0_6, %c0_7], %7 {strides = array<i32>} : memref<16x128xf32, #tpu.memory_space<vmem>>, vector<16x128xf32>,
    %c0_i32_8 = arith.constant 0 : i32
    %9 = arith.cmpi eq, %arg1, %c0_i32_8 : i32
    %10 = arith.extui %9 : i1 to i32
    %c0_i32_9 = arith.constant 0 : i32
    %11 = arith.cmpi ne, %10, %c0_i32_9 : i32
    scf.if %11 {
      %c0_10 = arith.constant 0 : index
      %c0_11 = arith.constant 0 : index
      %12 = vector.load %arg10[%c0_10, %c0_11] : memref<16x128xf32, #tpu.memory_space<vmem>>, vector<16x128xf32>
      %c0_12 = arith.constant 0 : index
      %c0_13 = arith.constant 0 : index
      %13 = vector.load %arg6[%c0_12, %c0_13] : memref<1x128xf32, #tpu.memory_space<vmem>>, vector<1x128xf32>
      %14 = vector.broadcast %13 : vector<1x128xf32> to vector<16x128xf32>
      %15 = arith.addf %12, %14 : vector<16x128xf32>
      %c0_14 = arith.constant 0 : index
      %c0_15 = arith.constant 0 : index
      %16 = vector.load %arg7[%c0_14, %c0_15] : memref<16x128xf32, #tpu.memory_space<vmem>>, vector<16x128xf32>
      tpu.vector_store %arg7[%c0_14, %c0_15], %15 {strides = array<i32>} : memref<16x128xf32, #tpu.memory_space<vmem>>, vector<16x128xf32>,
    } else {
    }
    return
  }
  func.func @transform_0(%arg0: i32, %arg1: i32) -> (i32, i32) {
    %c0_i32 = arith.constant 0 : i32
    %c0_i32_0 = arith.constant 0 : i32
    %c0_i32_1 = arith.constant 0 : i32
    return %c0_i32, %c0_i32_0 : i32, i32
  }
  func.func @transform_1(%arg0: i32, %arg1: i32) -> (i32, i32) {
    %c0_i32 = arith.constant 0 : i32
    %c0_i32_0 = arith.constant 0 : i32
    %c0_i32_1 = arith.constant 0 : i32
    return %c0_i32, %c0_i32_0 : i32, i32
  }
  func.func @transform_2(%arg0: i32, %arg1: i32) -> (i32, i32) {
    %c0_i32 = arith.constant 0 : i32
    %c0_i32_0 = arith.constant 0 : i32
    %c0_i32_1 = arith.constant 0 : i32
    return %c0_i32, %c0_i32_0 : i32, i32
  }
  func.func @transform_3(%arg0: i32, %arg1: i32) -> (i32, i32) {
    %c0_i32 = arith.constant 0 : i32
    return %arg1, %arg0 : i32, i32
  }
  func.func @transform_4(%arg0: i32, %arg1: i32) -> (i32, i32) {
    %c0_i32 = arith.constant 0 : i32
    %c0_i32_0 = arith.constant 0 : i32
    return %c0_i32, %arg0 : i32, i32
  }
  func.func @transform_5(%arg0: i32, %arg1: i32) -> (i32, i32) {
    %c0_i32 = arith.constant 0 : i32
    %c0_i32_0 = arith.constant 0 : i32
    return %c0_i32, %arg0 : i32, i32
  }
}

</mosaic_0001>

<llo_original>
// kernel: image_encoder_forward.1
$region0: #{image_encoder_forward.1}
  #allocation0 [shape = 'u32[]', space=smem, size = 0x4, offset = 0x4, fixed_abs, tag = 'smem constant byte address 0x4 - core index']
  #allocation1 [shape = 'u32[144,128]{1,0:T(1,128)}', space=vmem, size = 0x12000, scoped, tag = 'internal scratch']
  #allocation2 [shape = 'bf16[784,128]{1,0:T(8,128)(2,1)}', space=vmem, size = 0x31000, scoped, tag = 'scratch operand']
  #allocation3 [shape = 'bf16[16,6272]{1,0:T(8,128)(2,1)}', space=vmem, size = 0x31000, scoped, tag = 'scratch operand']
  #allocation4 [shape = 'f32[16,128]{1,0:T(8,128)}', space=vmem, size = 0x2000, scoped, tag = 'scratch operand']
  %s0 = inlined_call_operand.vmem [shape: bf16[784,256], index: 0, kind: input, shape index: {}]
  %s1 = inlined_call_operand.hbm [shape: bf16[256,128], index: 1, kind: input, shape index: {}]
  %s2 = inlined_call_operand.hbm [shape: f32[1,128], index: 2, kind: input, shape index: {}]
  %s3 = inlined_call_operand.hbm [shape: bf16[6272,512], index: 3, kind: input, shape index: {}]
  %s4 = inlined_call_operand.hbm [shape: f32[1,512], index: 4, kind: input, shape index: {}]
  %s5 = inlined_call_operand.vmem [shape: f32[16,512], index: 5, kind: output, shape index: {}]
  %s6 = sld [smem:[#allocation0]]
  $region111: #{image_encoder_forward.1} parent=0
    _
  %s8 = ssub.s32 1, %s6
  %s9 = scalar_select 0, %s8, %s6
  $region1: #{image_encoder_forward.1} parent=0
    #allocation5 [shape = 'u8[65536]{0}', space=vmem, size = 0x10000, scoped, tag = 'input window, operand 1, single buffered']
    #allocation6 [shape = 's32[2]{0}', space=sflag, size = 0x8, scoped, tag = 'scoped memory for image_encoder_forward.1']
    #allocation7 [shape = 'u8[512]{0}', space=vmem, size = 0x400, scoped, tag = 'input window, operand 2, single buffered']
    #allocation8 [shape = 's32[1]{0}', space=sflag, size = 0x4, scoped, tag = 'scoped memory for image_encoder_forward.1']
    #allocation9 [shape = 'u8[3211264]{0}', space=vmem, size = 0x310000, scoped, tag = 'input window, operand 3']
    #allocation10 [shape = 'u8[1024]{0}', space=vmem, size = 0x400, scoped, tag = 'input window, operand 4']
    #allocation11 [shape = 'u8[16384]{0}', space=vmem, size = 0x4000, scoped, tag = 'output window, operand 0']
    %10 = vsyncpa [#allocation6], 0
    %11 = vsyncpa [#allocation8], 0
    loop: start=0, step=1, limit=6
    $region2: #{image_encoder_forward.1} parent=1 // loop_pre_header
      _
    $region3: #{image_encoder_forward.1} parent=1 // loop_header
      %s13 = sphi 0, %s17
      %p14 = scmp.ge.s32.totalorder %s13, 6
      %s20 = sphi 0, %s32
      %s21 = sphi 0, %s28
      %s22 = sphi 0, %s20
      %s23 = sphi 0, %s21
      %s24 = sphi 0, %s22
      %s25 = sphi 0, %s23
      %s33 = sphi 0, %s33
      %s35 = sphi 0, %s33
      %s36 = sphi 0, %s35
      %s50 = sphi 0, %s36
      %s54 = sphi 0, %s54
      %s56 = sphi 0, %s54
      %s57 = sphi 0, %s56
      %s71 = sphi 0, %s57
      %s75 = sphi 0, %s75
      %s77 = sphi 0, %s75
      %s78 = sphi 0, %s77
      %s92 = sphi 0, %s78
      %s100 = sphi 0, %s102
      %s103 = sphi 0, %s100
      %s104 = sphi 0, %s103
      %s120 = sphi 0, %s104
      %s126 = sphi 0, %s128
      %s129 = sphi 0, %s126
      %s130 = sphi 0, %s129
      %s146 = sphi 0, %s130
      %s152 = sphi 0, %s154
      %s155 = sphi 0, %s152
      %s156 = sphi 0, %s155
      %s172 = sphi 0, %s156
    $region4: #{image_encoder_forward.1} parent=1 // loop_header_branch
      %16 = sbr.rel (%p14) target = $region8
    $region5: #{image_encoder_forward.1} parent=1 // loop_body
      %s18 = ssub.s32 %s13, 1
      %s19 = ssub.s32 %s13, 2
      %s26 = sadd.s32 1, %s21
      %p27 = scmp.ge.s32.totalorder %s26, 1
      %s28 = scalar_select %p27, 0, %s26
      %s29 = sadd.s32 1, %s20
      %s30 = scalar_select %p27, %s29, %s20
      %p31 = scmp.ge.s32.totalorder %s30, 4
      %s32 = scalar_select %p31, 0, %s30
      %s34 = sadd.s32 %s33, 1
      %p37 = scmp.eq.s32.totalorder %s13, 3
      %p38 = scmp.ne.s32.totalorder %s33, %s35
      %p39 = scmp.eq.s32.totalorder %s13, 0
      %p40 = por %p38, %p39
      %p41 = scmp.ne.s32.totalorder %s33, %s35
      %p42 = scmp.eq.s32.totalorder %s18, 3
      %p43 = por %p41, %p42
      %p44 = scmp.ne.s32.totalorder %s35, %s36
      %p45 = scmp.eq.s32.totalorder %s18, 0
      %p46 = por %p44, %p45
      %p47 = scmp.ne.s32.totalorder %s35, %s36
      %p48 = scmp.eq.s32.totalorder %s19, 3
      %p49 = por %p47, %p48
      %p51 = scmp.ne.s32.totalorder %s36, %s50
      %p52 = scmp.eq.s32.totalorder %s19, 0
      %p53 = por %p51, %p52
      %s55 = sadd.s32 %s54, 1
      %p58 = scmp.eq.s32.totalorder %s13, 3
      %p59 = scmp.ne.s32.totalorder %s54, %s56
      %p60 = scmp.eq.s32.totalorder %s13, 0
      %p61 = por %p59, %p60
      %p62 = scmp.ne.s32.totalorder %s54, %s56
      %p63 = scmp.eq.s32.totalorder %s18, 3
      %p64 = por %p62, %p63
      %p65 = scmp.ne.s32.totalorder %s56, %s57
      %p66 = scmp.eq.s32.totalorder %s18, 0
      %p67 = por %p65, %p66
      %p68 = scmp.ne.s32.totalorder %s56, %s57
      %p69 = scmp.eq.s32.totalorder %s19, 3
      %p70 = por %p68, %p69
      %p72 = scmp.ne.s32.totalorder %s57, %s71
      %p73 = scmp.eq.s32.totalorder %s19, 0
      %p74 = por %p72, %p73
      %s76 = sadd.s32 %s75, 1
      %p79 = scmp.eq.s32.totalorder %s13, 3
      %p80 = scmp.ne.s32.totalorder %s75, %s77
      %p81 = scmp.eq.s32.totalorder %s13, 0
      %p82 = por %p80, %p81
      %p83 = scmp.ne.s32.totalorder %s75, %s77
      %p84 = scmp.eq.s32.totalorder %s18, 3
      %p85 = por %p83, %p84
      %p86 = scmp.ne.s32.totalorder %s77, %s78
      %p87 = scmp.eq.s32.totalorder %s18, 0
      %p88 = por %p86, %p87
      %p89 = scmp.ne.s32.totalorder %s77, %s78
      %p90 = scmp.eq.s32.totalorder %s19, 3
      %p91 = por %p89, %p90
      %p93 = scmp.ne.s32.totalorder %s78, %s92
      %p94 = scmp.eq.s32.totalorder %s19, 0
      %p95 = por %p93, %p94
      %s96 = ssub.s32 %s21, %s28
      %s97 = ssub.s32 %s20, %s32
      %s98 = sor.u32 %s96, %s97
      %p99 = scmp.eq.s32.totalorder %s98, 0
      %s101 = sadd.s32 %s100, 1
      %s102 = scalar_select %p99, %s100, %s101
      %p105 = pneg %p99
      %p106 = scmp.eq.s32.totalorder %s13, 3
      %p107 = por %p105, %p106
      %p108 = scmp.ne.s32.totalorder %s100, %s103
      %p109 = scmp.eq.s32.totalorder %s13, 0
      %p110 = por %p108, %p109
      %p111 = scmp.ne.s32.totalorder %s100, %s103
      %p112 = scmp.eq.s32.totalorder %s18, 3
      %p113 = por %p111, %p112
      %p114 = scmp.ne.s32.totalorder %s103, %s104
      %p115 = scmp.eq.s32.totalorder %s18, 0
      %p116 = por %p114, %p115
      %p117 = scmp.ne.s32.totalorder %s103, %s104
      %p118 = scmp.eq.s32.totalorder %s19, 3
      %p119 = por %p117, %p118
      %p121 = scmp.ne.s32.totalorder %s104, %s120
      %p122 = scmp.eq.s32.totalorder %s19, 0
      %p123 = por %p121, %p122
      %s124 = ssub.s32 %s20, %s32
      %p125 = scmp.eq.s32.totalorder %s124, 0
      %s127 = sadd.s32 %s126, 1
      %s128 = scalar_select %p125, %s126, %s127
      %p131 = pneg %p125
      %p132 = scmp.eq.s32.totalorder %s13, 3
      %p133 = por %p131, %p132
      %p134 = scmp.ne.s32.totalorder %s126, %s129
      %p135 = scmp.eq.s32.totalorder %s13, 0
      %p136 = por %p134, %p135
      %p137 = scmp.ne.s32.totalorder %s126, %s129
      %p138 = scmp.eq.s32.totalorder %s18, 3
      %p139 = por %p137, %p138
      %p140 = scmp.ne.s32.totalorder %s129, %s130
      %p141 = scmp.eq.s32.totalorder %s18, 0
      %p142 = por %p140, %p141
      %p143 = scmp.ne.s32.totalorder %s129, %s130
      %p144 = scmp.eq.s32.totalorder %s19, 3
      %p145 = por %p143, %p144
      %p147 = scmp.ne.s32.totalorder %s130, %s146
      %p148 = scmp.eq.s32.totalorder %s19, 0
      %p149 = por %p147, %p148
      %s150 = ssub.s32 %s20, %s32
      %p151 = scmp.eq.s32.totalorder %s150, 0
      %s153 = sadd.s32 %s152, 1
      %s154 = scalar_select %p151, %s152, %s153
      %p157 = pneg %p151
      %p158 = scmp.eq.s32.totalorder %s13, 3
      %p159 = por %p157, %p158
      %p160 = scmp.ne.s32.totalorder %s152, %s155
      %p161 = scmp.eq.s32.totalorder %s13, 0
      %p162 = por %p160, %p161
      %p163 = scmp.ne.s32.totalorder %s152, %s155
      %p164 = scmp.eq.s32.totalorder %s18, 3
      %p165 = por %p163, %p164
      %p166 = scmp.ne.s32.totalorder %s155, %s156
      %p167 = scmp.eq.s32.totalorder %s18, 0
      %p168 = por %p166, %p167
      %p169 = scmp.ne.s32.totalorder %s155, %s156
      %p170 = scmp.eq.s32.totalorder %s19, 3
      %p171 = por %p169, %p170
      %p173 = scmp.ne.s32.totalorder %s156, %s172
      %p174 = scmp.eq.s32.totalorder %s19, 0
      %p175 = por %p173, %p174
      %p176 = scmp.le.s32.totalorder 1, %s13
      %p177 = scmp.lt.s32.totalorder %s13, 5
      %p178 = pnand %p176, %p177
      %p179 = pneg %p178
      // Predicated region
      $region9: #{image_encoder_forward.1} parent=5 // pred_check
        _
      $region10: #{image_encoder_forward.1} parent=5 // pred_check_branch
        %181 = sbr.rel (%p178) target = $region12
      $region11: #{image_encoder_forward.1} parent=5 // pred_region
        %s182 = ssub.s32 %s13, 1
        // Predicated region
        $region13: #{image_encoder_forward.1} parent=11 // pred_check
          %p183 = pneg %p46
        $region14: #{image_encoder_forward.1} parent=11 // pred_check_branch
          %185 = sbr.rel (%p183) target = $region16
        $region15: #{image_encoder_forward.1} parent=11 // pred_region
          _
        $region16: #{image_encoder_forward.1} parent=11 // pred_fallthru
          _
        // Predicated region
        $region17: #{image_encoder_forward.1} parent=11 // pred_check
          %p186 = pneg %p67
        $region18: #{image_encoder_forward.1} parent=11 // pred_check_branch
          %188 = sbr.rel (%p186) target = $region20
        $region19: #{image_encoder_forward.1} parent=11 // pred_region
          %s190 = ssub.s32 2048, 2048
          %191 = vsyncadd [#allocation6], %s190
          %s192 = sshll.u32 [#allocation5], 4
          %s193 = int_to_ptr.vmem [resolvable:$true] %s192
          %198 = dma.hbm_to_vmem [thread:$0]  %s1, 2048, %s193, [#allocation6], 64, 64, 4
        $region20: #{image_encoder_forward.1} parent=11 // pred_fallthru
          _
        // Predicated region
        $region21: #{image_encoder_forward.1} parent=11 // pred_check
          %p199 = pneg %p88
        $region22: #{image_encoder_forward.1} parent=11 // pred_check_branch
          %201 = sbr.rel (%p199) target = $region24
        $region23: #{image_encoder_forward.1} parent=11 // pred_region
          %s203 = ssub.s32 16, 16
          %204 = vsyncadd [#allocation8], %s203
          %s206 = sshll.u32 [#allocation7], 4
          %s207 = int_to_ptr.vmem [resolvable:$true] %s206
          %209 = dma.hbm_to_vmem [thread:$0]  %s2, 16, %s207, [#allocation8]
        $region24: #{image_encoder_forward.1} parent=11 // pred_fallthru
          _
      $region12: #{image_encoder_forward.1} parent=5 // pred_fallthru
        _
      %p210 = scmp.lt.s32.totalorder %s13, 4
      // Predicated region
      $region25: #{image_encoder_forward.1} parent=5 // pred_check
        %p211 = pneg %p210
      $region26: #{image_encoder_forward.1} parent=5 // pred_check_branch
        %213 = sbr.rel (%p211) target = $region28
      $region27: #{image_encoder_forward.1} parent=5 // pred_region
        // Predicated region
        $region29: #{image_encoder_forward.1} parent=27 // pred_check
          %p214 = pneg %p110
        $region30: #{image_encoder_forward.1} parent=27 // pred_check_branch
          %216 = sbr.rel (%p214) target = $region32
        $region31: #{image_encoder_forward.1} parent=27 // pred_region
          %s217 = sand.u32 %s13, 1
          %s218 = scalar_lea.sflag [#allocation6], %s217
          %s219 = sand.u32 %s100, 1
          %s220 = smul.addr %s219, 3136
          %s221 = scalar_lea.vmem [#allocation9], %s220
          %s222 = smul.u32 784, %s21
          %s224 = ssub.s32 50176, 50176
          %225 = vsyncadd %s218, %s224
          %s226 = smul.addr %s222, 4
          %s227 = sadd.s32 %s20, %s226
          %s228 = smul.addr %s227, 64
          %s229 = scalar_lea.hbm %s3, %s228
          %s230 = sshll.u32 %s221, 4
          %s231 = int_to_ptr.vmem [resolvable:$true] %s230
          %236 = dma.hbm_to_vmem [thread:$0]  %s229, 50176, %s231, %s218, 256, 64, 4
        $region32: #{image_encoder_forward.1} parent=27 // pred_fallthru
          _
        // Predicated region
        $region33: #{image_encoder_forward.1} parent=27 // pred_check
          %p237 = pneg %p136
        $region34: #{image_encoder_forward.1} parent=27 // pred_check_branch
          %239 = sbr.rel (%p237) target = $region36
        $region35: #{image_encoder_forward.1} parent=27 // pred_region
          %s240 = sand.u32 %s13, 1
          %s241 = scalar_lea.sflag [#allocation6], %s240
          %s242 = sand.u32 %s126, 1
          %s243 = scalar_lea.vmem [#allocation10], %s242
          %s245 = ssub.s32 16, 16
          %246 = vsyncadd %s241, %s245
          %s247 = smul.addr %s20, 16
          %s248 = scalar_lea.hbm %s4, %s247
          %s250 = sshll.u32 %s243, 4
          %s251 = int_to_ptr.vmem [resolvable:$true] %s250
          %253 = dma.hbm_to_vmem [thread:$0]  %s248, 16, %s251, %s241
        $region36: #{image_encoder_forward.1} parent=27 // pred_fallthru
          _
      $region28: #{image_encoder_forward.1} parent=5 // pred_fallthru
        _
      %p254 = scmp.le.s32.totalorder 1, %s13
      %p255 = scmp.lt.s32.totalorder %s13, 5
      %p256 = pnand %p254, %p255
      %p257 = pneg %p256
      // Predicated region
      $region37: #{image_encoder_forward.1} parent=5 // pred_check
        _
      $region38: #{image_encoder_forward.1} parent=5 // pred_check_branch
        %259 = sbr.rel (%p256) target = $region40
      $region39: #{image_encoder_forward.1} parent=5 // pred_region
        %s260 = ssub.s32 %s13, 1
        // Predicated region
        $region41: #{image_encoder_forward.1} parent=39 // pred_check
          %p261 = pneg %p67
        $region42: #{image_encoder_forward.1} parent=39 // pred_check_branch
          %263 = sbr.rel (%p261) target = $region44
        $region43: #{image_encoder_forward.1} parent=39 // pred_region
          %264 = dma.done [#allocation6], 2048
        $region44: #{image_encoder_forward.1} parent=39 // pred_fallthru
          _
        // Predicated region
        $region45: #{image_encoder_forward.1} parent=39 // pred_check
          %p265 = pneg %p88
        $region46: #{image_encoder_forward.1} parent=39 // pred_check_branch
          %267 = sbr.rel (%p265) target = $region48
        $region47: #{image_encoder_forward.1} parent=39 // pred_region
          %268 = dma.done [#allocation8], 16
        $region48: #{image_encoder_forward.1} parent=39 // pred_fallthru
          _
        %s269 = sand.u32 %s18, 1
        %s270 = scalar_lea.sflag [#allocation6], %s269
        %s271 = sand.u32 %s103, 1
        %s272 = smul.addr %s271, 3136
        %s273 = scalar_lea.vmem [#allocation9], %s272
        // Predicated region
        $region49: #{image_encoder_forward.1} parent=39 // pred_check
          %p274 = pneg %p116
        $region50: #{image_encoder_forward.1} parent=39 // pred_check_branch
          %276 = sbr.rel (%p274) target = $region52
        $region51: #{image_encoder_forward.1} parent=39 // pred_region
          %277 = dma.done %s270, 50176
        $region52: #{image_encoder_forward.1} parent=39 // pred_fallthru
          _
        %s278 = sand.u32 %s18, 1
        %s279 = scalar_lea.sflag [#allocation6], %s278
        %s280 = sand.u32 %s129, 1
        %s281 = scalar_lea.vmem [#allocation10], %s280
        // Predicated region
        $region53: #{image_encoder_forward.1} parent=39 // pred_check
          %p282 = pneg %p142
        $region54: #{image_encoder_forward.1} parent=39 // pred_check_branch
          %284 = sbr.rel (%p282) target = $region56
        $region55: #{image_encoder_forward.1} parent=39 // pred_region
          %285 = dma.done %s279, 16
        $region56: #{image_encoder_forward.1} parent=39 // pred_fallthru
          _
        %p286 = pneg %p46
        %p287 = pneg %p43
        %p288 = pneg %p67
        %p289 = pneg %p64
        %p290 = pneg %p88
        %p291 = pneg %p85
        %s292 = sand.u32 %s18, 1
        %s293 = scalar_lea.sflag [#allocation6], %s292
        %s294 = sand.u32 %s103, 1
        %s295 = smul.addr %s294, 3136
        %s296 = scalar_lea.vmem [#allocation9], %s295
        %p297 = pneg %p116
        %p298 = pneg %p113
        %s299 = sand.u32 %s18, 1
        %s300 = scalar_lea.sflag [#allocation6], %s299
        %s301 = sand.u32 %s129, 1
        %s302 = scalar_lea.vmem [#allocation10], %s301
        %p303 = pneg %p142
        %p304 = pneg %p139
        %p305 = pneg %p168
        %p306 = pneg %p165
        %s307 = sand.u32 %s155, 1
        %s308 = sand.u32 %s155, 1
        %s309 = smul.addr %s308, 16
        %s310 = scalar_lea.vmem [#allocation11], %s309
        %s311 = smul.u32 784, %s23
        %p313 = scmp.eq.s32.totalorder %s23, 0
        // Predicated region
        $region57: #{image_encoder_forward.1} parent=39 // pred_check
          %p314 = pneg %p313
        $region58: #{image_encoder_forward.1} parent=39 // pred_check_branch
          %316 = sbr.rel (%p314) target = $region60
        $region59: #{image_encoder_forward.1} parent=39 // pred_region
          %317 = vst [vmem:[#allocation4] sm:$0xff] 0.0
          %318 = vst [vmem:[#allocation4 + $0x8] sm:$0xff] 0.0
          %v319 = vld [vmem:[%s0] sm:$0xff]
          %v320 = vld [vmem:[%s0 + $0x8] sm:$0xff]
          %v321 = vld [vmem:[%s0 + $0x10] sm:$0xff]
          %v322 = vld [vmem:[%s0 + $0x18] sm:$0xff]
          %v323 = vld [vmem:[%s0 + $0x20] sm:$0xff]
          %v324 = vld [vmem:[%s0 + $0x28] sm:$0xff]
          %v325 = vld [vmem:[%s0 + $0x30] sm:$0xff]
          %v326 = vld [vmem:[%s0 + $0x38] sm:$0xff]
          %v327 = vld [vmem:[%s0 + $0x40] sm:$0xff]
          %v328 = vld [vmem:[%s0 + $0x48] sm:$0xff]
          %v329 = vld [vmem:[%s0 + $0x50] sm:$0xff]
          %v330 = vld [vmem:[%s0 + $0x58] sm:$0xff]
          %v331 = vld [vmem:[%s0 + $0x60] sm:$0xff]
          %v332 = vld [vmem:[%s0 + $0x68] sm:$0xff]
          %v333 = vld [vmem:[%s0 + $0x70] sm:$0xff]
          %v334 = vld [vmem:[%s0 + $0x78] sm:$0xff]
          %v335 = vld [vmem:[%s0 + $0x80] sm:$0xff]
          %v336 = vld [vmem:[%s0 + $0x88] sm:$0xff]
          %v337 = vld [vmem:[%s0 + $0x90] sm:$0xff]
          %v338 = vld [vmem:[%s0 + $0x98] sm:$0xff]
          %v339 = vld [vmem:[%s0 + $0xa0] sm:$0xff]
          %v340 = vld [vmem:[%s0 + $0xa8] sm:$0xff]
          %v341 = vld [vmem:[%s0 + $0xb0] sm:$0xff]
          %v342 = vld [vmem:[%s0 + $0xb8] sm:$0xff]
          %v343 = vld [vmem:[%s0 + $0xc0] sm:$0xff]
          %v344 = vld [vmem:[%s0 + $0xc8] sm:$0xff]
          %v345 = vld [vmem:[%s0 + $0xd0] sm:$0xff]
          %v346 = vld [vmem:[%s0 + $0xd8] sm:$0xff]
          %v347 = vld [vmem:[%s0 + $0xe0] sm:$0xff]
          %v348 = vld [vmem:[%s0 + $0xe8] sm:$0xff]
          %v349 = vld [vmem:[%s0 + $0xf0] sm:$0xff]
          %v350 = vld [vmem:[%s0 + $0xf8] sm:$0xff]
          %v351 = vld [vmem:[%s0 + $0x100] sm:$0xff]
          %v352 = vld [vmem:[%s0 + $0x108] sm:$0xff]
          %v353 = vld [vmem:[%s0 + $0x110] sm:$0xff]
          %v354 = vld [vmem:[%s0 + $0x118] sm:$0xff]
          %v355 = vld [vmem:[%s0 + $0x120] sm:$0xff]
          %v356 = vld [vmem:[%s0 + $0x128] sm:$0xff]
          %v357 = vld [vmem:[%s0 + $0x130] sm:$0xff]
          %v358 = vld [vmem:[%s0 + $0x138] sm:$0xff]
          %v359 = vld [vmem:[%s0 + $0x140] sm:$0xff]
          %v360 = vld [vmem:[%s0 + $0x148] sm:$0xff]
          %v361 = vld [vmem:[%s0 + $0x150] sm:$0xff]
          %v362 = vld [vmem:[%s0 + $0x158] sm:$0xff]
          %v363 = vld [vmem:[%s0 + $0x160] sm:$0xff]
          %v364 = vld [vmem:[%s0 + $0x168] sm:$0xff]
          %v365 = vld [vmem:[%s0 + $0x170] sm:$0xff]
          %v366 = vld [vmem:[%s0 + $0x178] sm:$0xff]
          %v367 = vld [vmem:[%s0 + $0x180] sm:$0xff]
          %v368 = vld [vmem:[%s0 + $0x188] sm:$0xff]
          %v369 = vld [vmem:[%s0 + $0x190] sm:$0xff]
          %v370 = vld [vmem:[%s0 + $0x198] sm:$0xff]
          %v371 = vld [vmem:[%s0 + $0x1a0] sm:$0xff]
          %v372 = vld [vmem:[%s0 + $0x1a8] sm:$0xff]
          %v373 = vld [vmem:[%s0 + $0x1b0] sm:$0xff]
          %v374 = vld [vmem:[%s0 + $0x1b8] sm:$0xff]
          %v375 = vld [vmem:[%s0 + $0x1c0] sm:$0xff]
          %v376 = vld [vmem:[%s0 + $0x1c8] sm:$0xff]
          %v377 = vld [vmem:[%s0 + $0x1d0] sm:$0xff]
          %v378 = vld [vmem:[%s0 + $0x1d8] sm:$0xff]
          %v379 = vld [vmem:[%s0 + $0x1e0] sm:$0xff]
          %v380 = vld [vmem:[%s0 + $0x1e8] sm:$0xff]
          %v381 = vld [vmem:[%s0 + $0x1f0] sm:$0xff]
          %v382 = vld [vmem:[%s0 + $0x1f8] sm:$0xff]
          %v383 = vld [vmem:[%s0 + $0x200] sm:$0xff]
          %v384 = vld [vmem:[%s0 + $0x208] sm:$0xff]
          %v385 = vld [vmem:[%s0 + $0x210] sm:$0xff]
          %v386 = vld [vmem:[%s0 + $0x218] sm:$0xff]
          %v387 = vld [vmem:[%s0 + $0x220] sm:$0xff]
          %v388 = vld [vmem:[%s0 + $0x228] sm:$0xff]
          %v389 = vld [vmem:[%s0 + $0x230] sm:$0xff]
          %v390 = vld [vmem:[%s0 + $0x238] sm:$0xff]
          %v391 = vld [vmem:[%s0 + $0x240] sm:$0xff]
          %v392 = vld [vmem:[%s0 + $0x248] sm:$0xff]
          %v393 = vld [vmem:[%s0 + $0x250] sm:$0xff]
          %v394 = vld [vmem:[%s0 + $0x258] sm:$0xff]
          %v395 = vld [vmem:[%s0 + $0x260] sm:$0xff]
          %v396 = vld [vmem:[%s0 + $0x268] sm:$0xff]
          %v397 = vld [vmem:[%s0 + $0x270] sm:$0xff]
          %v398 = vld [vmem:[%s0 + $0x278] sm:$0xff]
          %v399 = vld [vmem:[%s0 + $0x280] sm:$0xff]
          %v400 = vld [vmem:[%s0 + $0x288] sm:$0xff]
          %v401 = vld [vmem:[%s0 + $0x290] sm:$0xff]
          %v402 = vld [vmem:[%s0 + $0x298] sm:$0xff]
          %v403 = vld [vmem:[%s0 + $0x2a0] sm:$0xff]
          %v404 = vld [vmem:[%s0 + $0x2a8] sm:$0xff]
          %v405 = vld [vmem:[%s0 + $0x2b0] sm:$0xff]
          %v406 = vld [vmem:[%s0 + $0x2b8] sm:$0xff]
          %v407 = vld [vmem:[%s0 + $0x2c0] sm:$0xff]
          %v408 = vld [vmem:[%s0 + $0x2c8] sm:$0xff]
          %v409 = vld [vmem:[%s0 + $0x2d0] sm:$0xff]
          %v410 = vld [vmem:[%s0 + $0x2d8] sm:$0xff]
          %v411 = vld [vmem:[%s0 + $0x2e0] sm:$0xff]
          %v412 = vld [vmem:[%s0 + $0x2e8] sm:$0xff]
          %v413 = vld [vmem:[%s0 + $0x2f0] sm:$0xff]
          %v414 = vld [vmem:[%s0 + $0x2f8] sm:$0xff]
          %v415 = vld [vmem:[%s0 + $0x300] sm:$0xff]
          %v416 = vld [vmem:[%s0 + $0x308] sm:$0xff]
          %v417 = vld [vmem:[#allocation5] sm:$0xf]
          %v418 = vld [vmem:[#allocation5 + $0x4] sm:$0xf]
          %v419 = vld [vmem:[#allocation5 + $0x8] sm:$0xf]
          %v420 = vld [vmem:[#allocation5 + $0xc] sm:$0xf]
          %v421 = vld [vmem:[#allocation5 + $0x10] sm:$0xf]
          %v422 = vld [vmem:[#allocation5 + $0x14] sm:$0xf]
          %v423 = vld [vmem:[#allocation5 + $0x18] sm:$0xf]
          %v424 = vld [vmem:[#allocation5 + $0x1c] sm:$0xf]
          %v425 = vld [vmem:[#allocation5 + $0x20] sm:$0xf]
          %v426 = vld [vmem:[#allocation5 + $0x24] sm:$0xf]
          %v427 = vld [vmem:[#allocation5 + $0x28] sm:$0xf]
          %v428 = vld [vmem:[#allocation5 + $0x2c] sm:$0xf]
          %v429 = vld [vmem:[#allocation5 + $0x30] sm:$0xf]
          %v430 = vld [vmem:[#allocation5 + $0x34] sm:$0xf]
          %v431 = vld [vmem:[#allocation5 + $0x38] sm:$0xf]
          %v432 = vld [vmem:[#allocation5 + $0x3c] sm:$0xf]
          %v433 = vld [vmem:[#allocation5 + $0x40] sm:$0xf]
          %v434 = vld [vmem:[#allocation5 + $0x44] sm:$0xf]
          %v435 = vld [vmem:[#allocation5 + $0x48] sm:$0xf]
          %v436 = vld [vmem:[#allocation5 + $0x4c] sm:$0xf]
          %v437 = vld [vmem:[#allocation5 + $0x50] sm:$0xf]
          %v438 = vld [vmem:[#allocation5 + $0x54] sm:$0xf]
          %v439 = vld [vmem:[#allocation5 + $0x58] sm:$0xf]
          %v440 = vld [vmem:[#allocation5 + $0x5c] sm:$0xf]
          %v441 = vld [vmem:[#allocation5 + $0x60] sm:$0xf]
          %v442 = vld [vmem:[#allocation5 + $0x64] sm:$0xf]
          %v443 = vld [vmem:[#allocation5 + $0x68] sm:$0xf]
          %v444 = vld [vmem:[#allocation5 + $0x6c] sm:$0xf]
          %v445 = vld [vmem:[#allocation5 + $0x70] sm:$0xf]
          %v446 = vld [vmem:[#allocation5 + $0x74] sm:$0xf]
          %v447 = vld [vmem:[#allocation5 + $0x78] sm:$0xf]
          %v448 = vld [vmem:[#allocation5 + $0x7c] sm:$0xf]
          %v449 = vld [vmem:[#allocation7] sm:$0x1]
          %v451 = vlaneseq
          %v452 = vshrl.u32 %v451, 7
          %v453 = vsub.s32 0, %v452
          %v454 = vrot.slane %v449, %v453
          %v554 = vunpack.c.l.b16 %v319
          %v555 = vunpack.c.h.b16 %v319
          %v556 = vunpack.c.l.b16 %v320
          %v557 = vunpack.c.h.b16 %v320
          %v558 = vunpack.c.l.b16 %v321
          %v559 = vunpack.c.h.b16 %v321
          %v560 = vunpack.c.l.b16 %v322
          %v561 = vunpack.c.h.b16 %v322
          %v562 = vunpack.c.l.b16 %v323
          %v563 = vunpack.c.h.b16 %v323
          %v564 = vunpack.c.l.b16 %v324
          %v565 = vunpack.c.h.b16 %v324
          %v566 = vunpack.c.l.b16 %v325
          %v567 = vunpack.c.h.b16 %v325
          %v568 = vunpack.c.l.b16 %v326
          %v569 = vunpack.c.h.b16 %v326
          %v570 = vunpack.c.l.b16 %v327
          %v571 = vunpack.c.h.b16 %v327
          %v572 = vunpack.c.l.b16 %v328
          %v573 = vunpack.c.h.b16 %v328
          %v574 = vunpack.c.l.b16 %v329
          %v575 = vunpack.c.h.b16 %v329
          %v576 = vunpack.c.l.b16 %v330
          %v577 = vunpack.c.h.b16 %v330
          %v578 = vunpack.c.l.b16 %v331
          %v579 = vunpack.c.h.b16 %v331
          %v580 = vunpack.c.l.b16 %v332
          %v581 = vunpack.c.h.b16 %v332
          %v582 = vunpack.c.l.b16 %v333
          %v583 = vunpack.c.h.b16 %v333
          %v584 = vunpack.c.l.b16 %v334
          %v585 = vunpack.c.h.b16 %v334
          %v586 = vunpack.c.l.b16 %v335
          %v587 = vunpack.c.h.b16 %v335
          %v588 = vunpack.c.l.b16 %v336
          %v589 = vunpack.c.h.b16 %v336
          %v590 = vunpack.c.l.b16 %v337
          %v591 = vunpack.c.h.b16 %v337
          %v592 = vunpack.c.l.b16 %v338
          %v593 = vunpack.c.h.b16 %v338
          %v594 = vunpack.c.l.b16 %v339
          %v595 = vunpack.c.h.b16 %v339
          %v596 = vunpack.c.l.b16 %v340
          %v597 = vunpack.c.h.b16 %v340
          %v598 = vunpack.c.l.b16 %v341
          %v599 = vunpack.c.h.b16 %v341
          %v600 = vunpack.c.l.b16 %v342
          %v601 = vunpack.c.h.b16 %v342
          %v602 = vunpack.c.l.b16 %v343
          %v603 = vunpack.c.h.b16 %v343
          %v604 = vunpack.c.l.b16 %v344
          %v605 = vunpack.c.h.b16 %v344
          %v606 = vunpack.c.l.b16 %v345
          %v607 = vunpack.c.h.b16 %v345
          %v608 = vunpack.c.l.b16 %v346
          %v609 = vunpack.c.h.b16 %v346
          %v610 = vunpack.c.l.b16 %v347
          %v611 = vunpack.c.h.b16 %v347
          %v612 = vunpack.c.l.b16 %v348
          %v613 = vunpack.c.h.b16 %v348
          %v614 = vunpack.c.l.b16 %v349
          %v615 = vunpack.c.h.b16 %v349
          %v616 = vunpack.c.l.b16 %v350
          %v617 = vunpack.c.h.b16 %v350
          %v618 = vunpack.c.l.b16 %v351
          %v619 = vunpack.c.h.b16 %v351
          %v620 = vunpack.c.l.b16 %v352
          %v621 = vunpack.c.h.b16 %v352
          %v622 = vunpack.c.l.b16 %v353
          %v623 = vunpack.c.h.b16 %v353
          %v624 = vunpack.c.l.b16 %v354
          %v625 = vunpack.c.h.b16 %v354
          %v626 = vunpack.c.l.b16 %v355
          %v627 = vunpack.c.h.b16 %v355
          %v628 = vunpack.c.l.b16 %v356
          %v629 = vunpack.c.h.b16 %v356
          %v630 = vunpack.c.l.b16 %v357
          %v631 = vunpack.c.h.b16 %v357
          %v632 = vunpack.c.l.b16 %v358
          %v633 = vunpack.c.h.b16 %v358
          %v634 = vunpack.c.l.b16 %v359
          %v635 = vunpack.c.h.b16 %v359
          %v636 = vunpack.c.l.b16 %v360
          %v637 = vunpack.c.h.b16 %v360
          %v638 = vunpack.c.l.b16 %v361
          %v639 = vunpack.c.h.b16 %v361
          %v640 = vunpack.c.l.b16 %v362
          %v641 = vunpack.c.h.b16 %v362
          %v642 = vunpack.c.l.b16 %v363
          %v643 = vunpack.c.h.b16 %v363
          %v644 = vunpack.c.l.b16 %v364
          %v645 = vunpack.c.h.b16 %v364
          %v646 = vunpack.c.l.b16 %v365
          %v647 = vunpack.c.h.b16 %v365
          %v648 = vunpack.c.l.b16 %v366
          %v649 = vunpack.c.h.b16 %v366
          %v650 = vunpack.c.l.b16 %v367
          %v651 = vunpack.c.h.b16 %v367
          %v652 = vunpack.c.l.b16 %v368
          %v653 = vunpack.c.h.b16 %v368
          %v654 = vunpack.c.l.b16 %v369
          %v655 = vunpack.c.h.b16 %v369
          %v656 = vunpack.c.l.b16 %v370
          %v657 = vunpack.c.h.b16 %v370
          %v658 = vunpack.c.l.b16 %v371
          %v659 = vunpack.c.h.b16 %v371
          %v660 = vunpack.c.l.b16 %v372
          %v661 = vunpack.c.h.b16 %v372
          %v662 = vunpack.c.l.b16 %v373
          %v663 = vunpack.c.h.b16 %v373
          %v664 = vunpack.c.l.b16 %v374
          %v665 = vunpack.c.h.b16 %v374
          %v666 = vunpack.c.l.b16 %v375
          %v667 = vunpack.c.h.b16 %v375
          %v668 = vunpack.c.l.b16 %v376
          %v669 = vunpack.c.h.b16 %v376
          %v670 = vunpack.c.l.b16 %v377
          %v671 = vunpack.c.h.b16 %v377
          %v672 = vunpack.c.l.b16 %v378
          %v673 = vunpack.c.h.b16 %v378
          %v674 = vunpack.c.l.b16 %v379
          %v675 = vunpack.c.h.b16 %v379
          %v676 = vunpack.c.l.b16 %v380
          %v677 = vunpack.c.h.b16 %v380
          %v678 = vunpack.c.l.b16 %v381
          %v679 = vunpack.c.h.b16 %v381
          %v680 = vunpack.c.l.b16 %v382
          %v681 = vunpack.c.h.b16 %v382
          %v682 = vunpack.c.l.b16 %v383
          %v683 = vunpack.c.h.b16 %v383
          %v684 = vunpack.c.l.b16 %v384
          %v685 = vunpack.c.h.b16 %v384
          %v686 = vunpack.c.l.b16 %v385
          %v687 = vunpack.c.h.b16 %v385
          %v688 = vunpack.c.l.b16 %v386
          %v689 = vunpack.c.h.b16 %v386
          %v690 = vunpack.c.l.b16 %v387
          %v691 = vunpack.c.h.b16 %v387
          %v692 = vunpack.c.l.b16 %v388
          %v693 = vunpack.c.h.b16 %v388
          %v694 = vunpack.c.l.b16 %v389
          %v695 = vunpack.c.h.b16 %v389
          %v696 = vunpack.c.l.b16 %v390
          %v697 = vunpack.c.h.b16 %v390
          %v698 = vunpack.c.l.b16 %v391
          %v699 = vunpack.c.h.b16 %v391
          %v700 = vunpack.c.l.b16 %v392
          %v701 = vunpack.c.h.b16 %v392
          %v702 = vunpack.c.l.b16 %v393
          %v703 = vunpack.c.h.b16 %v393
          %v704 = vunpack.c.l.b16 %v394
          %v705 = vunpack.c.h.b16 %v394
          %v706 = vunpack.c.l.b16 %v395
          %v707 = vunpack.c.h.b16 %v395
          %v708 = vunpack.c.l.b16 %v396
          %v709 = vunpack.c.h.b16 %v396
          %v710 = vunpack.c.l.b16 %v397
          %v711 = vunpack.c.h.b16 %v397
          %v712 = vunpack.c.l.b16 %v398
          %v713 = vunpack.c.h.b16 %v398
          %v714 = vunpack.c.l.b16 %v399
          %v715 = vunpack.c.h.b16 %v399
          %v716 = vunpack.c.l.b16 %v400
          %v717 = vunpack.c.h.b16 %v400
          %v718 = vunpack.c.l.b16 %v401
          %v719 = vunpack.c.h.b16 %v401
          %v720 = vunpack.c.l.b16 %v402
          %v721 = vunpack.c.h.b16 %v402
          %v722 = vunpack.c.l.b16 %v403
          %v723 = vunpack.c.h.b16 %v403
          %v724 = vunpack.c.l.b16 %v404
          %v725 = vunpack.c.h.b16 %v404
          %v726 = vunpack.c.l.b16 %v405
          %v727 = vunpack.c.h.b16 %v405
          %v728 = vunpack.c.l.b16 %v406
          %v729 = vunpack.c.h.b16 %v406
          %v730 = vunpack.c.l.b16 %v407
          %v731 = vunpack.c.h.b16 %v407
          %v732 = vunpack.c.l.b16 %v408
          %v733 = vunpack.c.h.b16 %v408
          %v734 = vunpack.c.l.b16 %v409
          %v735 = vunpack.c.h.b16 %v409
          %v736 = vunpack.c.l.b16 %v410
          %v737 = vunpack.c.h.b16 %v410
          %v738 = vunpack.c.l.b16 %v411
          %v739 = vunpack.c.h.b16 %v411
          %v740 = vunpack.c.l.b16 %v412
          %v741 = vunpack.c.h.b16 %v412
          %v742 = vunpack.c.l.b16 %v413
          %v743 = vunpack.c.h.b16 %v413
          %v744 = vunpack.c.l.b16 %v414
          %v745 = vunpack.c.h.b16 %v414
          %v746 = vunpack.c.l.b16 %v415
          %v747 = vunpack.c.h.b16 %v415
          %v748 = vunpack.c.l.b16 %v416
          %v749 = vunpack.c.h.b16 %v416
          %v750 = vpack.c.b16 %v556, %v554
          %v751 = vpack.c.b16 %v557, %v555
          %v752 = vpack.c.b16 %v560, %v558
          %v753 = vpack.c.b16 %v561, %v559
          %v754 = vpack.c.b16 %v564, %v562
          %v755 = vpack.c.b16 %v565, %v563
          %v756 = vpack.c.b16 %v568, %v566
          %v757 = vpack.c.b16 %v569, %v567
          %v758 = vpack.c.b16 %v572, %v570
          %v759 = vpack.c.b16 %v573, %v571
          %v760 = vpack.c.b16 %v576, %v574
          %v761 = vpack.c.b16 %v577, %v575
          %v762 = vpack.c.b16 %v580, %v578
          %v763 = vpack.c.b16 %v581, %v579
          %v764 = vpack.c.b16 %v584, %v582
          %v765 = vpack.c.b16 %v585, %v583
          %v766 = vpack.c.b16 %v588, %v586
          %v767 = vpack.c.b16 %v589, %v587
          %v768 = vpack.c.b16 %v592, %v590
          %v769 = vpack.c.b16 %v593, %v591
          %v770 = vpack.c.b16 %v596, %v594
          %v771 = vpack.c.b16 %v597, %v595
          %v772 = vpack.c.b16 %v600, %v598
          %v773 = vpack.c.b16 %v601, %v599
          %v774 = vpack.c.b16 %v604, %v602
          %v775 = vpack.c.b16 %v605, %v603
          %v776 = vpack.c.b16 %v608, %v606
          %v777 = vpack.c.b16 %v609, %v607
          %v778 = vpack.c.b16 %v612, %v610
          %v779 = vpack.c.b16 %v613, %v611
          %v780 = vpack.c.b16 %v616, %v614
          %v781 = vpack.c.b16 %v617, %v615
          %v782 = vpack.c.b16 %v620, %v618
          %v783 = vpack.c.b16 %v621, %v619
          %v784 = vpack.c.b16 %v624, %v622
          %v785 = vpack.c.b16 %v625, %v623
          %v786 = vpack.c.b16 %v628, %v626
          %v787 = vpack.c.b16 %v629, %v627
          %v788 = vpack.c.b16 %v632, %v630
          %v789 = vpack.c.b16 %v633, %v631
          %v790 = vpack.c.b16 %v636, %v634
          %v791 = vpack.c.b16 %v637, %v635
          %v792 = vpack.c.b16 %v640, %v638
          %v793 = vpack.c.b16 %v641, %v639
          %v794 = vpack.c.b16 %v644, %v642
          %v795 = vpack.c.b16 %v645, %v643
          %v796 = vpack.c.b16 %v648, %v646
          %v797 = vpack.c.b16 %v649, %v647
          %v798 = vpack.c.b16 %v652, %v650
          %v799 = vpack.c.b16 %v653, %v651
          %v800 = vpack.c.b16 %v656, %v654
          %v801 = vpack.c.b16 %v657, %v655
          %v802 = vpack.c.b16 %v660, %v658
          %v803 = vpack.c.b16 %v661, %v659
          %v804 = vpack.c.b16 %v664, %v662
          %v805 = vpack.c.b16 %v665, %v663
          %v806 = vpack.c.b16 %v668, %v666
          %v807 = vpack.c.b16 %v669, %v667
          %v808 = vpack.c.b16 %v672, %v670
          %v809 = vpack.c.b16 %v673, %v671
          %v810 = vpack.c.b16 %v676, %v674
          %v811 = vpack.c.b16 %v677, %v675
          %v812 = vpack.c.b16 %v680, %v678
          %v813 = vpack.c.b16 %v681, %v679
          %v814 = vpack.c.b16 %v684, %v682
          %v815 = vpack.c.b16 %v685, %v683
          %v816 = vpack.c.b16 %v688, %v686
          %v817 = vpack.c.b16 %v689, %v687
          %v818 = vpack.c.b16 %v692, %v690
          %v819 = vpack.c.b16 %v693, %v691
          %v820 = vpack.c.b16 %v696, %v694
          %v821 = vpack.c.b16 %v697, %v695
          %v822 = vpack.c.b16 %v700, %v698
          %v823 = vpack.c.b16 %v701, %v699
          %v824 = vpack.c.b16 %v704, %v702
          %v825 = vpack.c.b16 %v705, %v703
          %v826 = vpack.c.b16 %v708, %v706
          %v827 = vpack.c.b16 %v709, %v707
          %v828 = vpack.c.b16 %v712, %v710
          %v829 = vpack.c.b16 %v713, %v711
          %v830 = vpack.c.b16 %v716, %v714
          %v831 = vpack.c.b16 %v717, %v715
          %v832 = vpack.c.b16 %v720, %v718
          %v833 = vpack.c.b16 %v721, %v719
          %v834 = vpack.c.b16 %v724, %v722
          %v835 = vpack.c.b16 %v725, %v723
          %v836 = vpack.c.b16 %v728, %v726
          %v837 = vpack.c.b16 %v729, %v727
          %v838 = vpack.c.b16 %v732, %v730
          %v839 = vpack.c.b16 %v733, %v731
          %v840 = vpack.c.b16 %v736, %v734
          %v841 = vpack.c.b16 %v737, %v735
          %v842 = vpack.c.b16 %v740, %v738
          %v843 = vpack.c.b16 %v741, %v739
          %v844 = vpack.c.b16 %v744, %v742
          %v845 = vpack.c.b16 %v745, %v743
          %v846 = vpack.c.b16 %v748, %v746
          %v847 = vpack.c.b16 %v749, %v747
          %v978 = vunpack.c.l.b16 %v417
          %v979 = vunpack.c.l.b16 %v418
          %v980 = vunpack.c.l.b16 %v419
          %v981 = vunpack.c.l.b16 %v420
          %v982 = vunpack.c.l.b16 %v421
          %v983 = vunpack.c.l.b16 %v422
          %v984 = vunpack.c.l.b16 %v423
          %v985 = vunpack.c.l.b16 %v424
          %v986 = vunpack.c.l.b16 %v425
          %v987 = vunpack.c.l.b16 %v426
          %v988 = vunpack.c.l.b16 %v427
          %v989 = vunpack.c.l.b16 %v428
          %v990 = vunpack.c.l.b16 %v429
          %v991 = vunpack.c.l.b16 %v430
          %v992 = vunpack.c.l.b16 %v431
          %v993 = vunpack.c.l.b16 %v432
          %v994 = vunpack.c.l.b16 %v433
          %v995 = vunpack.c.l.b16 %v434
          %v996 = vunpack.c.l.b16 %v435
          %v997 = vunpack.c.l.b16 %v436
          %v998 = vunpack.c.l.b16 %v437
          %v999 = vunpack.c.l.b16 %v438
          %v1000 = vunpack.c.l.b16 %v439
          %v1001 = vunpack.c.l.b16 %v440
          %v1002 = vunpack.c.l.b16 %v441
          %v1003 = vunpack.c.l.b16 %v442
          %v1004 = vunpack.c.l.b16 %v443
          %v1005 = vunpack.c.l.b16 %v444
          %v1006 = vunpack.c.l.b16 %v445
          %v1007 = vunpack.c.l.b16 %v446
          %v1008 = vunpack.c.l.b16 %v447
          %v1009 = vunpack.c.l.b16 %v448
          %v1010 = vpack.c.b16 %v979, %v978
          %v1011 = vpack.c.b16 %v981, %v980
          %v1012 = vpack.c.b16 %v983, %v982
          %v1013 = vpack.c.b16 %v985, %v984
          %v1014 = vpack.c.b16 %v987, %v986
          %v1015 = vpack.c.b16 %v989, %v988
          %v1016 = vpack.c.b16 %v991, %v990
          %v1017 = vpack.c.b16 %v993, %v992
          %v1018 = vpack.c.b16 %v995, %v994
          %v1019 = vpack.c.b16 %v997, %v996
          %v1020 = vpack.c.b16 %v999, %v998
          %v1021 = vpack.c.b16 %v1001, %v1000
          %v1022 = vpack.c.b16 %v1003, %v1002
          %v1023 = vpack.c.b16 %v1005, %v1004
          %v1024 = vpack.c.b16 %v1007, %v1006
          %v1025 = vpack.c.b16 %v1009, %v1008
          %1042 = vmatprep.subr.bf16.mxu0 0
          %1043 = vmatpush1.bf16.msra.mxu0 %v1017
          %1044 = vmatprep.subr.bf16.mxu0 0
          %1045 = vmatpush1.bf16.msra.mxu0 %v1016
          %1046 = vmatprep.subr.bf16.mxu0 0
          %1047 = vmatpush1.bf16.msra.mxu0 %v1015
          %1048 = vmatprep.subr.bf16.mxu0 0
          %1049 = vmatpush1.bf16.msra.mxu0 %v1014
          %1050 = vmatprep.subr.bf16.mxu0 0
          %1051 = vmatpush1.bf16.msra.mxu0 %v1013
          %1052 = vmatprep.subr.bf16.mxu0 0
          %1053 = vmatpush1.bf16.msra.mxu0 %v1012
          %1054 = vmatprep.subr.bf16.mxu0 0
          %1055 = vmatpush1.bf16.msra.mxu0 %v1011
          %1056 = vmatprep.subr.bf16.mxu0 0
          %1057 = vmatpush1.bf16.msra.mxu0 %v1010
          %1058 = vmatprep.subr.bf16.mxu0 0
          %1059 = vmatpush2.bf16.msra.mxu0 %v1025
          %1060 = vmatprep.subr.bf16.mxu0 0
          %1061 = vmatpush2.bf16.msra.mxu0 %v1024
          %1062 = vmatprep.subr.bf16.mxu0 0
          %1063 = vmatpush2.bf16.msra.mxu0 %v1023
          %1064 = vmatprep.subr.bf16.mxu0 0
          %1065 = vmatpush2.bf16.msra.mxu0 %v1022
          %1066 = vmatprep.subr.bf16.mxu0 0
          %1067 = vmatpush2.bf16.msra.mxu0 %v1021
          %1068 = vmatprep.subr.bf16.mxu0 0
          %1069 = vmatpush2.bf16.msra.mxu0 %v1020
          %1070 = vmatprep.subr.bf16.mxu0 0
          %1071 = vmatpush2.bf16.msra.mxu0 %v1019
          %1072 = vmatprep.subr.bf16.mxu0 0
          %1073 = vmatpush2.bf16.msra.mxu0 %v1018
          %1074 = vmatprep.mubr.bf16.mxu0 %v751
          %1075 = vmatmul.mubr.bf16.gmra.mxu0 %v750
          %v1076 = vpop.f32.mrf.mxu0
          %v1077 = vadd.f32 %v454, %v1076
          %v1078 = vpop.f32.mrf.mxu0
          %v1079 = vpop.f32.mrf.mxu0
          %v1080 = vadd.f32 %v454, %v1079
          %v1081 = vpop.f32.mrf.mxu0
          %1082 = vmatprep.mubr.bf16.mxu0 %v753
          %1083 = vmatmul.mubr.bf16.gmra.mxu0 %v752
          %v1084 = vpop.f32.mrf.mxu0
          %v1085 = vadd.f32 %v454, %v1084
          %v1086 = vpop.f32.mrf.mxu0
          %v1087 = vpop.f32.mrf.mxu0
          %v1088 = vadd.f32 %v454, %v1087
          %v1089 = vpop.f32.mrf.mxu0
          %1090 = vmatprep.mubr.bf16.mxu0 %v755
          %1091 = vmatmul.mubr.bf16.gmra.mxu0 %v754
          %v1092 = vpop.f32.mrf.mxu0
          %v1093 = vadd.f32 %v454, %v1092
          %v1094 = vpop.f32.mrf.mxu0
          %v1095 = vpop.f32.mrf.mxu0
          %v1096 = vadd.f32 %v454, %v1095
          %v1097 = vpop.f32.mrf.mxu0
          %1098 = vmatprep.mubr.bf16.mxu0 %v757
          %1099 = vmatmul.mubr.bf16.gmra.mxu0 %v756
          %v1100 = vpop.f32.mrf.mxu0
          %v1101 = vadd.f32 %v454, %v1100
          %v1102 = vpop.f32.mrf.mxu0
          %v1103 = vpop.f32.mrf.mxu0
          %v1104 = vadd.f32 %v454, %v1103
          %v1105 = vpop.f32.mrf.mxu0
          %1106 = vmatprep.mubr.bf16.mxu0 %v759
          %1107 = vmatmul.mubr.bf16.gmra.mxu0 %v758
          %v1108 = vpop.f32.mrf.mxu0
          %v1109 = vadd.f32 %v454, %v1108
          %v1110 = vpop.f32.mrf.mxu0
          %v1111 = vpop.f32.mrf.mxu0
          %v1112 = vadd.f32 %v454, %v1111
          %v1113 = vpop.f32.mrf.mxu0
          %1114 = vmatprep.mubr.bf16.mxu0 %v761
          %1115 = vmatmul.mubr.bf16.gmra.mxu0 %v760
          %v1116 = vpop.f32.mrf.mxu0
          %v1117 = vadd.f32 %v454, %v1116
          %v1118 = vpop.f32.mrf.mxu0
          %v1119 = vpop.f32.mrf.mxu0
          %v1120 = vadd.f32 %v454, %v1119
          %v1121 = vpop.f32.mrf.mxu0
          %1122 = vmatprep.mubr.bf16.mxu0 %v763
          %1123 = vmatmul.mubr.bf16.gmra.mxu0 %v762
          %v1124 = vpop.f32.mrf.mxu0
          %v1125 = vadd.f32 %v454, %v1124
          %v1126 = vpop.f32.mrf.mxu0
          %v1127 = vpop.f32.mrf.mxu0
          %v1128 = vadd.f32 %v454, %v1127
          %v1129 = vpop.f32.mrf.mxu0
          %1130 = vmatprep.mubr.bf16.mxu0 %v765
          %1131 = vmatmul.mubr.bf16.gmra.mxu0 %v764
          %v1132 = vpop.f32.mrf.mxu0
          %v1133 = vadd.f32 %v454, %v1132
          %v1134 = vpop.f32.mrf.mxu0
          %v1135 = vpop.f32.mrf.mxu0
          %v1136 = vadd.f32 %v454, %v1135
          %v1137 = vpop.f32.mrf.mxu0
          %1138 = vmatprep.mubr.bf16.mxu0 %v767
          %1139 = vmatmul.mubr.bf16.gmra.mxu0 %v766
          %v1140 = vpop.f32.mrf.mxu0
          %v1141 = vadd.f32 %v454, %v1140
          %v1142 = vpop.f32.mrf.mxu0
          %v1143 = vpop.f32.mrf.mxu0
          %v1144 = vadd.f32 %v454, %v1143
          %v1145 = vpop.f32.mrf.mxu0
          %1146 = vmatprep.mubr.bf16.mxu0 %v769
          %1147 = vmatmul.mubr.bf16.gmra.mxu0 %v768
          %v1148 = vpop.f32.mrf.mxu0
          %v1149 = vadd.f32 %v454, %v1148
          %v1150 = vpop.f32.mrf.mxu0
          %v1151 = vpop.f32.mrf.mxu0
          %v1152 = vadd.f32 %v454, %v1151
          %v1153 = vpop.f32.mrf.mxu0
          %1154 = vmatprep.mubr.bf16.mxu0 %v771
          %1155 = vmatmul.mubr.bf16.gmra.mxu0 %v770
          %v1156 = vpop.f32.mrf.mxu0
          %v1157 = vadd.f32 %v454, %v1156
          %v1158 = vpop.f32.mrf.mxu0
          %v1159 = vpop.f32.mrf.mxu0
          %v1160 = vadd.f32 %v454, %v1159
          %v1161 = vpop.f32.mrf.mxu0
          %1162 = vmatprep.mubr.bf16.mxu0 %v773
          %1163 = vmatmul.mubr.bf16.gmra.mxu0 %v772
          %v1164 = vpop.f32.mrf.mxu0
          %v1165 = vadd.f32 %v454, %v1164
          %v1166 = vpop.f32.mrf.mxu0
          %v1167 = vpop.f32.mrf.mxu0
          %v1168 = vadd.f32 %v454, %v1167
          %v1169 = vpop.f32.mrf.mxu0
          %1170 = vmatprep.mubr.bf16.mxu0 %v775
          %1171 = vmatmul.mubr.bf16.gmra.mxu0 %v774
          %v1172 = vpop.f32.mrf.mxu0
          %v1173 = vadd.f32 %v454, %v1172
          %v1174 = vpop.f32.mrf.mxu0
          %v1175 = vpop.f32.mrf.mxu0
          %v1176 = vadd.f32 %v454, %v1175
          %v1177 = vpop.f32.mrf.mxu0
          %1178 = vmatprep.mubr.bf16.mxu0 %v777
          %1179 = vmatmul.mubr.bf16.gmra.mxu0 %v776
          %v1180 = vpop.f32.mrf.mxu0
          %v1181 = vadd.f32 %v454, %v1180
          %v1182 = vpop.f32.mrf.mxu0
          %v1183 = vpop.f32.mrf.mxu0
          %v1184 = vadd.f32 %v454, %v1183
          %v1185 = vpop.f32.mrf.mxu0
          %1186 = vmatprep.mubr.bf16.mxu0 %v779
          %1187 = vmatmul.mubr.bf16.gmra.mxu0 %v778
          %v1188 = vpop.f32.mrf.mxu0
          %v1189 = vadd.f32 %v454, %v1188
          %v1190 = vpop.f32.mrf.mxu0
          %v1191 = vpop.f32.mrf.mxu0
          %v1192 = vadd.f32 %v454, %v1191
          %v1193 = vpop.f32.mrf.mxu0
          %1194 = vmatprep.mubr.bf16.mxu0 %v781
          %1195 = vmatmul.mubr.bf16.gmra.mxu0 %v780
          %v1196 = vpop.f32.mrf.mxu0
          %v1197 = vadd.f32 %v454, %v1196
          %v1198 = vpop.f32.mrf.mxu0
          %v1199 = vpop.f32.mrf.mxu0
          %v1200 = vadd.f32 %v454, %v1199
          %v1201 = vpop.f32.mrf.mxu0
          %1202 = vmatprep.mubr.bf16.mxu0 %v783
          %1203 = vmatmul.mubr.bf16.gmra.mxu0 %v782
          %v1204 = vpop.f32.mrf.mxu0
          %v1205 = vadd.f32 %v454, %v1204
          %v1206 = vpop.f32.mrf.mxu0
          %v1207 = vpop.f32.mrf.mxu0
          %v1208 = vadd.f32 %v454, %v1207
          %v1209 = vpop.f32.mrf.mxu0
          %1210 = vmatprep.mubr.bf16.mxu0 %v785
          %1211 = vmatmul.mubr.bf16.gmra.mxu0 %v784
          %v1212 = vpop.f32.mrf.mxu0
          %v1213 = vadd.f32 %v454, %v1212
          %v1214 = vpop.f32.mrf.mxu0
          %v1215 = vpop.f32.mrf.mxu0
          %v1216 = vadd.f32 %v454, %v1215
          %v1217 = vpop.f32.mrf.mxu0
          %1218 = vmatprep.mubr.bf16.mxu0 %v787
          %1219 = vmatmul.mubr.bf16.gmra.mxu0 %v786
          %v1220 = vpop.f32.mrf.mxu0
          %v1221 = vadd.f32 %v454, %v1220
          %v1222 = vpop.f32.mrf.mxu0
          %v1223 = vpop.f32.mrf.mxu0
          %v1224 = vadd.f32 %v454, %v1223
          %v1225 = vpop.f32.mrf.mxu0
          %1226 = vmatprep.mubr.bf16.mxu0 %v789
          %1227 = vmatmul.mubr.bf16.gmra.mxu0 %v788
          %v1228 = vpop.f32.mrf.mxu0
          %v1229 = vadd.f32 %v454, %v1228
          %v1230 = vpop.f32.mrf.mxu0
          %v1231 = vpop.f32.mrf.mxu0
          %v1232 = vadd.f32 %v454, %v1231
          %v1233 = vpop.f32.mrf.mxu0
          %1234 = vmatprep.mubr.bf16.mxu0 %v791
          %1235 = vmatmul.mubr.bf16.gmra.mxu0 %v790
          %v1236 = vpop.f32.mrf.mxu0
          %v1237 = vadd.f32 %v454, %v1236
          %v1238 = vpop.f32.mrf.mxu0
          %v1239 = vpop.f32.mrf.mxu0
          %v1240 = vadd.f32 %v454, %v1239
          %v1241 = vpop.f32.mrf.mxu0
          %1242 = vmatprep.mubr.bf16.mxu0 %v793
          %1243 = vmatmul.mubr.bf16.gmra.mxu0 %v792
          %v1244 = vpop.f32.mrf.mxu0
          %v1245 = vadd.f32 %v454, %v1244
          %v1246 = vpop.f32.mrf.mxu0
          %v1247 = vpop.f32.mrf.mxu0
          %v1248 = vadd.f32 %v454, %v1247
          %v1249 = vpop.f32.mrf.mxu0
          %1250 = vmatprep.mubr.bf16.mxu0 %v795
          %1251 = vmatmul.mubr.bf16.gmra.mxu0 %v794
          %v1252 = vpop.f32.mrf.mxu0
          %v1253 = vadd.f32 %v454, %v1252
          %v1254 = vpop.f32.mrf.mxu0
          %v1255 = vpop.f32.mrf.mxu0
          %v1256 = vadd.f32 %v454, %v1255
          %v1257 = vpop.f32.mrf.mxu0
          %1258 = vmatprep.mubr.bf16.mxu0 %v797
          %1259 = vmatmul.mubr.bf16.gmra.mxu0 %v796
          %v1260 = vpop.f32.mrf.mxu0
          %v1261 = vadd.f32 %v454, %v1260
          %v1262 = vpop.f32.mrf.mxu0
          %v1263 = vpop.f32.mrf.mxu0
          %v1264 = vadd.f32 %v454, %v1263
          %v1265 = vpop.f32.mrf.mxu0
          %1266 = vmatprep.mubr.bf16.mxu0 %v799
          %1267 = vmatmul.mubr.bf16.gmra.mxu0 %v798
          %v1268 = vpop.f32.mrf.mxu0
          %v1269 = vadd.f32 %v454, %v1268
          %v1270 = vpop.f32.mrf.mxu0
          %v1271 = vpop.f32.mrf.mxu0
          %v1272 = vadd.f32 %v454, %v1271
          %v1273 = vpop.f32.mrf.mxu0
          %1274 = vmatprep.mubr.bf16.mxu0 %v801
          %1275 = vmatmul.mubr.bf16.gmra.mxu0 %v800
          %v1276 = vpop.f32.mrf.mxu0
          %v1277 = vadd.f32 %v454, %v1276
          %v1278 = vpop.f32.mrf.mxu0
          %v1279 = vpop.f32.mrf.mxu0
          %v1280 = vadd.f32 %v454, %v1279
          %v1281 = vpop.f32.mrf.mxu0
          %1282 = vmatprep.mubr.bf16.mxu0 %v803
          %1283 = vmatmul.mubr.bf16.gmra.mxu0 %v802
          %v1284 = vpop.f32.mrf.mxu0
          %v1285 = vadd.f32 %v454, %v1284
          %v1286 = vpop.f32.mrf.mxu0
          %v1287 = vpop.f32.mrf.mxu0
          %v1288 = vadd.f32 %v454, %v1287
          %v1289 = vpop.f32.mrf.mxu0
          %1290 = vmatprep.mubr.bf16.mxu0 %v805
          %1291 = vmatmul.mubr.bf16.gmra.mxu0 %v804
          %v1292 = vpop.f32.mrf.mxu0
          %v1293 = vadd.f32 %v454, %v1292
          %v1294 = vpop.f32.mrf.mxu0
          %v1295 = vpop.f32.mrf.mxu0
          %v1296 = vadd.f32 %v454, %v1295
          %v1297 = vpop.f32.mrf.mxu0
          %1298 = vmatprep.mubr.bf16.mxu0 %v807
          %1299 = vmatmul.mubr.bf16.gmra.mxu0 %v806
          %v1300 = vpop.f32.mrf.mxu0
          %v1301 = vadd.f32 %v454, %v1300
          %v1302 = vpop.f32.mrf.mxu0
          %v1303 = vpop.f32.mrf.mxu0
          %v1304 = vadd.f32 %v454, %v1303
          %v1305 = vpop.f32.mrf.mxu0
          %1306 = vmatprep.mubr.bf16.mxu0 %v809
          %1307 = vmatmul.mubr.bf16.gmra.mxu0 %v808
          %v1308 = vpop.f32.mrf.mxu0
          %v1309 = vadd.f32 %v454, %v1308
          %v1310 = vpop.f32.mrf.mxu0
          %v1311 = vpop.f32.mrf.mxu0
          %v1312 = vadd.f32 %v454, %v1311
          %v1313 = vpop.f32.mrf.mxu0
          %1314 = vmatprep.mubr.bf16.mxu0 %v811
          %1315 = vmatmul.mubr.bf16.gmra.mxu0 %v810
          %v1316 = vpop.f32.mrf.mxu0
          %v1317 = vadd.f32 %v454, %v1316
          %v1318 = vpop.f32.mrf.mxu0
          %v1319 = vpop.f32.mrf.mxu0
          %v1320 = vadd.f32 %v454, %v1319
          %v1321 = vpop.f32.mrf.mxu0
          %1322 = vmatprep.mubr.bf16.mxu0 %v813
          %1323 = vmatmul.mubr.bf16.gmra.mxu0 %v812
          %v1324 = vpop.f32.mrf.mxu0
          %v1325 = vadd.f32 %v454, %v1324
          %v1326 = vpop.f32.mrf.mxu0
          %v1327 = vpop.f32.mrf.mxu0
          %v1328 = vadd.f32 %v454, %v1327
          %v1329 = vpop.f32.mrf.mxu0
          %1330 = vmatprep.mubr.bf16.mxu0 %v815
          %1331 = vmatmul.mubr.bf16.gmra.mxu0 %v814
          %v1332 = vpop.f32.mrf.mxu0
          %v1333 = vadd.f32 %v454, %v1332
          %v1334 = vpop.f32.mrf.mxu0
          %v1335 = vpop.f32.mrf.mxu0
          %v1336 = vadd.f32 %v454, %v1335
          %v1337 = vpop.f32.mrf.mxu0
          %1338 = vmatprep.mubr.bf16.mxu0 %v817
          %1339 = vmatmul.mubr.bf16.gmra.mxu0 %v816
          %v1340 = vpop.f32.mrf.mxu0
          %v1341 = vadd.f32 %v454, %v1340
          %v1342 = vpop.f32.mrf.mxu0
          %v1343 = vpop.f32.mrf.mxu0
          %v1344 = vadd.f32 %v454, %v1343
          %v1345 = vpop.f32.mrf.mxu0
          %1346 = vmatprep.mubr.bf16.mxu0 %v819
          %1347 = vmatmul.mubr.bf16.gmra.mxu0 %v818
          %v1348 = vpop.f32.mrf.mxu0
          %v1349 = vadd.f32 %v454, %v1348
          %v1350 = vpop.f32.mrf.mxu0
          %v1351 = vpop.f32.mrf.mxu0
          %v1352 = vadd.f32 %v454, %v1351
          %v1353 = vpop.f32.mrf.mxu0
          %1354 = vmatprep.mubr.bf16.mxu0 %v821
          %1355 = vmatmul.mubr.bf16.gmra.mxu0 %v820
          %v1356 = vpop.f32.mrf.mxu0
          %v1357 = vadd.f32 %v454, %v1356
          %v1358 = vpop.f32.mrf.mxu0
          %v1359 = vpop.f32.mrf.mxu0
          %v1360 = vadd.f32 %v454, %v1359
          %v1361 = vpop.f32.mrf.mxu0
          %1362 = vmatprep.mubr.bf16.mxu0 %v823
          %1363 = vmatmul.mubr.bf16.gmra.mxu0 %v822
          %v1364 = vpop.f32.mrf.mxu0
          %v1365 = vadd.f32 %v454, %v1364
          %v1366 = vpop.f32.mrf.mxu0
          %v1367 = vpop.f32.mrf.mxu0
          %v1368 = vadd.f32 %v454, %v1367
          %v1369 = vpop.f32.mrf.mxu0
          %1370 = vmatprep.mubr.bf16.mxu0 %v825
          %1371 = vmatmul.mubr.bf16.gmra.mxu0 %v824
          %v1372 = vpop.f32.mrf.mxu0
          %v1373 = vadd.f32 %v454, %v1372
          %v1374 = vpop.f32.mrf.mxu0
          %v1375 = vpop.f32.mrf.mxu0
          %v1376 = vadd.f32 %v454, %v1375
          %v1377 = vpop.f32.mrf.mxu0
          %1378 = vmatprep.mubr.bf16.mxu0 %v827
          %1379 = vmatmul.mubr.bf16.gmra.mxu0 %v826
          %v1380 = vpop.f32.mrf.mxu0
          %v1381 = vadd.f32 %v454, %v1380
          %v1382 = vpop.f32.mrf.mxu0
          %v1383 = vpop.f32.mrf.mxu0
          %v1384 = vadd.f32 %v454, %v1383
          %v1385 = vpop.f32.mrf.mxu0
          %1386 = vmatprep.mubr.bf16.mxu0 %v829
          %1387 = vmatmul.mubr.bf16.gmra.mxu0 %v828
          %v1388 = vpop.f32.mrf.mxu0
          %v1389 = vadd.f32 %v454, %v1388
          %v1390 = vpop.f32.mrf.mxu0
          %v1391 = vpop.f32.mrf.mxu0
          %v1392 = vadd.f32 %v454, %v1391
          %v1393 = vpop.f32.mrf.mxu0
          %1394 = vmatprep.mubr.bf16.mxu0 %v831
          %1395 = vmatmul.mubr.bf16.gmra.mxu0 %v830
          %v1396 = vpop.f32.mrf.mxu0
          %v1397 = vadd.f32 %v454, %v1396
          %v1398 = vpop.f32.mrf.mxu0
          %v1399 = vpop.f32.mrf.mxu0
          %v1400 = vadd.f32 %v454, %v1399
          %v1401 = vpop.f32.mrf.mxu0
          %1402 = vmatprep.mubr.bf16.mxu0 %v833
          %1403 = vmatmul.mubr.bf16.gmra.mxu0 %v832
          %v1404 = vpop.f32.mrf.mxu0
          %v1405 = vadd.f32 %v454, %v1404
          %v1406 = vpop.f32.mrf.mxu0
          %v1407 = vpop.f32.mrf.mxu0
          %v1408 = vadd.f32 %v454, %v1407
          %v1409 = vpop.f32.mrf.mxu0
          %1410 = vmatprep.mubr.bf16.mxu0 %v835
          %1411 = vmatmul.mubr.bf16.gmra.mxu0 %v834
          %v1412 = vpop.f32.mrf.mxu0
          %v1413 = vadd.f32 %v454, %v1412
          %v1414 = vpop.f32.mrf.mxu0
          %v1415 = vpop.f32.mrf.mxu0
          %v1416 = vadd.f32 %v454, %v1415
          %v1417 = vpop.f32.mrf.mxu0
          %1418 = vmatprep.mubr.bf16.mxu0 %v837
          %1419 = vmatmul.mubr.bf16.gmra.mxu0 %v836
          %v1420 = vpop.f32.mrf.mxu0
          %v1421 = vadd.f32 %v454, %v1420
          %v1422 = vpop.f32.mrf.mxu0
          %v1423 = vpop.f32.mrf.mxu0
          %v1424 = vadd.f32 %v454, %v1423
          %v1425 = vpop.f32.mrf.mxu0
          %1426 = vmatprep.mubr.bf16.mxu0 %v839
          %1427 = vmatmul.mubr.bf16.gmra.mxu0 %v838
          %v1428 = vpop.f32.mrf.mxu0
          %v1429 = vadd.f32 %v454, %v1428
          %v1430 = vpop.f32.mrf.mxu0
          %v1431 = vpop.f32.mrf.mxu0
          %v1432 = vadd.f32 %v454, %v1431
          %v1433 = vpop.f32.mrf.mxu0
          %1434 = vmatprep.mubr.bf16.mxu0 %v841
          %1435 = vmatmul.mubr.bf16.gmra.mxu0 %v840
          %v1436 = vpop.f32.mrf.mxu0
          %v1437 = vadd.f32 %v454, %v1436
          %v1438 = vpop.f32.mrf.mxu0
          %v1439 = vpop.f32.mrf.mxu0
          %v1440 = vadd.f32 %v454, %v1439
          %v1441 = vpop.f32.mrf.mxu0
          %1442 = vmatprep.mubr.bf16.mxu0 %v843
          %1443 = vmatmul.mubr.bf16.gmra.mxu0 %v842
          %v1444 = vpop.f32.mrf.mxu0
          %v1445 = vadd.f32 %v454, %v1444
          %v1446 = vpop.f32.mrf.mxu0
          %v1447 = vpop.f32.mrf.mxu0
          %v1448 = vadd.f32 %v454, %v1447
          %v1449 = vpop.f32.mrf.mxu0
          %1450 = vmatprep.mubr.bf16.mxu0 %v845
          %1451 = vmatmul.mubr.bf16.gmra.mxu0 %v844
          %v1452 = vpop.f32.mrf.mxu0
          %v1453 = vadd.f32 %v454, %v1452
          %v1454 = vpop.f32.mrf.mxu0
          %v1455 = vpop.f32.mrf.mxu0
          %v1456 = vadd.f32 %v454, %v1455
          %v1457 = vpop.f32.mrf.mxu0
          %1458 = vmatprep.mubr.bf16.mxu0 %v847
          %1459 = vmatmul.mubr.bf16.gmra.mxu0 %v846
          %v1460 = vpop.f32.mrf.mxu0
          %v1461 = vadd.f32 %v454, %v1460
          %v1462 = vpop.f32.mrf.mxu0
          %v1463 = vpop.f32.mrf.mxu0
          %v1464 = vadd.f32 %v454, %v1463
          %v1465 = vpop.f32.mrf.mxu0
          %1466 = vdwg.mxu0
          %v1467 = vpack.c.bf16 %v1080, %v1077
          %v1468 = vpack.c.bf16 %v1088, %v1085
          %v1469 = vpack.c.bf16 %v1096, %v1093
          %v1470 = vpack.c.bf16 %v1104, %v1101
          %v1471 = vpack.c.bf16 %v1112, %v1109
          %v1472 = vpack.c.bf16 %v1120, %v1117
          %v1473 = vpack.c.bf16 %v1128, %v1125
          %v1474 = vpack.c.bf16 %v1136, %v1133
          %v1475 = vpack.c.bf16 %v1144, %v1141
          %v1476 = vpack.c.bf16 %v1152, %v1149
          %v1477 = vpack.c.bf16 %v1160, %v1157
          %v1478 = vpack.c.bf16 %v1168, %v1165
          %v1479 = vpack.c.bf16 %v1176, %v1173
          %v1480 = vpack.c.bf16 %v1184, %v1181
          %v1481 = vpack.c.bf16 %v1192, %v1189
          %v1482 = vpack.c.bf16 %v1200, %v1197
          %v1483 = vpack.c.bf16 %v1208, %v1205
          %v1484 = vpack.c.bf16 %v1216, %v1213
          %v1485 = vpack.c.bf16 %v1224, %v1221
          %v1486 = vpack.c.bf16 %v1232, %v1229
          %v1487 = vpack.c.bf16 %v1240, %v1237
          %v1488 = vpack.c.bf16 %v1248, %v1245
          %v1489 = vpack.c.bf16 %v1256, %v1253
          %v1490 = vpack.c.bf16 %v1264, %v1261
          %v1491 = vpack.c.bf16 %v1272, %v1269
          %v1492 = vpack.c.bf16 %v1280, %v1277
          %v1493 = vpack.c.bf16 %v1288, %v1285
          %v1494 = vpack.c.bf16 %v1296, %v1293
          %v1495 = vpack.c.bf16 %v1304, %v1301
          %v1496 = vpack.c.bf16 %v1312, %v1309
          %v1497 = vpack.c.bf16 %v1320, %v1317
          %v1498 = vpack.c.bf16 %v1328, %v1325
          %v1499 = vpack.c.bf16 %v1336, %v1333
          %v1500 = vpack.c.bf16 %v1344, %v1341
          %v1501 = vpack.c.bf16 %v1352, %v1349
          %v1502 = vpack.c.bf16 %v1360, %v1357
          %v1503 = vpack.c.bf16 %v1368, %v1365
          %v1504 = vpack.c.bf16 %v1376, %v1373
          %v1505 = vpack.c.bf16 %v1384, %v1381
          %v1506 = vpack.c.bf16 %v1392, %v1389
          %v1507 = vpack.c.bf16 %v1400, %v1397
          %v1508 = vpack.c.bf16 %v1408, %v1405
          %v1509 = vpack.c.bf16 %v1416, %v1413
          %v1510 = vpack.c.bf16 %v1424, %v1421
          %v1511 = vpack.c.bf16 %v1432, %v1429
          %v1512 = vpack.c.bf16 %v1440, %v1437
          %v1513 = vpack.c.bf16 %v1448, %v1445
          %v1514 = vpack.c.bf16 %v1456, %v1453
          %v1515 = vpack.c.bf16 %v1464, %v1461
          %v1565 = vunpack.c.l.b16 %v1467
          %v1566 = vunpack.c.h.b16 %v1467
          %v1567 = vunpack.c.l.b16 %v1468
          %v1568 = vunpack.c.h.b16 %v1468
          %v1569 = vunpack.c.l.b16 %v1469
          %v1570 = vunpack.c.h.b16 %v1469
          %v1571 = vunpack.c.l.b16 %v1470
          %v1572 = vunpack.c.h.b16 %v1470
          %v1573 = vunpack.c.l.b16 %v1471
          %v1574 = vunpack.c.h.b16 %v1471
          %v1575 = vunpack.c.l.b16 %v1472
          %v1576 = vunpack.c.h.b16 %v1472
          %v1577 = vunpack.c.l.b16 %v1473
          %v1578 = vunpack.c.h.b16 %v1473
          %v1579 = vunpack.c.l.b16 %v1474
          %v1580 = vunpack.c.h.b16 %v1474
          %v1581 = vunpack.c.l.b16 %v1475
          %v1582 = vunpack.c.h.b16 %v1475
          %v1583 = vunpack.c.l.b16 %v1476
          %v1584 = vunpack.c.h.b16 %v1476
          %v1585 = vunpack.c.l.b16 %v1477
          %v1586 = vunpack.c.h.b16 %v1477
          %v1587 = vunpack.c.l.b16 %v1478
          %v1588 = vunpack.c.h.b16 %v1478
          %v1589 = vunpack.c.l.b16 %v1479
          %v1590 = vunpack.c.h.b16 %v1479
          %v1591 = vunpack.c.l.b16 %v1480
          %v1592 = vunpack.c.h.b16 %v1480
          %v1593 = vunpack.c.l.b16 %v1481
          %v1594 = vunpack.c.h.b16 %v1481
          %v1595 = vunpack.c.l.b16 %v1482
          %v1596 = vunpack.c.h.b16 %v1482
          %v1597 = vunpack.c.l.b16 %v1483
          %v1598 = vunpack.c.h.b16 %v1483
          %v1599 = vunpack.c.l.b16 %v1484
          %v1600 = vunpack.c.h.b16 %v1484
          %v1601 = vunpack.c.l.b16 %v1485
          %v1602 = vunpack.c.h.b16 %v1485
          %v1603 = vunpack.c.l.b16 %v1486
          %v1604 = vunpack.c.h.b16 %v1486
          %v1605 = vunpack.c.l.b16 %v1487
          %v1606 = vunpack.c.h.b16 %v1487
          %v1607 = vunpack.c.l.b16 %v1488
          %v1608 = vunpack.c.h.b16 %v1488
          %v1609 = vunpack.c.l.b16 %v1489
          %v1610 = vunpack.c.h.b16 %v1489
          %v1611 = vunpack.c.l.b16 %v1490
          %v1612 = vunpack.c.h.b16 %v1490
          %v1613 = vunpack.c.l.b16 %v1491
          %v1614 = vunpack.c.h.b16 %v1491
          %v1615 = vunpack.c.l.b16 %v1492
          %v1616 = vunpack.c.h.b16 %v1492
          %v1617 = vunpack.c.l.b16 %v1493
          %v1618 = vunpack.c.h.b16 %v1493
          %v1619 = vunpack.c.l.b16 %v1494
          %v1620 = vunpack.c.h.b16 %v1494
          %v1621 = vunpack.c.l.b16 %v1495
          %v1622 = vunpack.c.h.b16 %v1495
          %v1623 = vunpack.c.l.b16 %v1496
          %v1624 = vunpack.c.h.b16 %v1496
          %v1625 = vunpack.c.l.b16 %v1497
          %v1626 = vunpack.c.h.b16 %v1497
          %v1627 = vunpack.c.l.b16 %v1498
          %v1628 = vunpack.c.h.b16 %v1498
          %v1629 = vunpack.c.l.b16 %v1499
          %v1630 = vunpack.c.h.b16 %v1499
          %v1631 = vunpack.c.l.b16 %v1500
          %v1632 = vunpack.c.h.b16 %v1500
          %v1633 = vunpack.c.l.b16 %v1501
          %v1634 = vunpack.c.h.b16 %v1501
          %v1635 = vunpack.c.l.b16 %v1502
          %v1636 = vunpack.c.h.b16 %v1502
          %v1637 = vunpack.c.l.b16 %v1503
          %v1638 = vunpack.c.h.b16 %v1503
          %v1639 = vunpack.c.l.b16 %v1504
          %v1640 = vunpack.c.h.b16 %v1504
          %v1641 = vunpack.c.l.b16 %v1505
          %v1642 = vunpack.c.h.b16 %v1505
          %v1643 = vunpack.c.l.b16 %v1506
          %v1644 = vunpack.c.h.b16 %v1506
          %v1645 = vunpack.c.l.b16 %v1507
          %v1646 = vunpack.c.h.b16 %v1507
          %v1647 = vunpack.c.l.b16 %v1508
          %v1648 = vunpack.c.h.b16 %v1508
          %v1649 = vunpack.c.l.b16 %v1509
          %v1650 = vunpack.c.h.b16 %v1509
          %v1651 = vunpack.c.l.b16 %v1510
          %v1652 = vunpack.c.h.b16 %v1510
          %v1653 = vunpack.c.l.b16 %v1511
          %v1654 = vunpack.c.h.b16 %v1511
          %v1655 = vunpack.c.l.b16 %v1512
          %v1656 = vunpack.c.h.b16 %v1512
          %v1657 = vunpack.c.l.b16 %v1513
          %v1658 = vunpack.c.h.b16 %v1513
          %v1659 = vunpack.c.l.b16 %v1514
          %v1660 = vunpack.c.h.b16 %v1514
          %v1661 = vunpack.c.l.b16 %v1515
          %v1662 = vunpack.c.h.b16 %v1515
          %v1663 = vpack.c.b16 %v1565, %v1565
          %v1664 = vpack.c.b16 %v1566, %v1566
          %v1665 = vpack.c.b16 %v1567, %v1567
          %v1666 = vpack.c.b16 %v1568, %v1568
          %v1667 = vpack.c.b16 %v1569, %v1569
          %v1668 = vpack.c.b16 %v1570, %v1570
          %v1669 = vpack.c.b16 %v1571, %v1571
          %v1670 = vpack.c.b16 %v1572, %v1572
          %v1671 = vpack.c.b16 %v1573, %v1573
          %v1672 = vpack.c.b16 %v1574, %v1574
          %v1673 = vpack.c.b16 %v1575, %v1575
          %v1674 = vpack.c.b16 %v1576, %v1576
          %v1675 = vpack.c.b16 %v1577, %v1577
          %v1676 = vpack.c.b16 %v1578, %v1578
          %v1677 = vpack.c.b16 %v1579, %v1579
          %v1678 = vpack.c.b16 %v1580, %v1580
          %v1679 = vpack.c.b16 %v1581, %v1581
          %v1680 = vpack.c.b16 %v1582, %v1582
          %v1681 = vpack.c.b16 %v1583, %v1583
          %v1682 = vpack.c.b16 %v1584, %v1584
          %v1683 = vpack.c.b16 %v1585, %v1585
          %v1684 = vpack.c.b16 %v1586, %v1586
          %v1685 = vpack.c.b16 %v1587, %v1587
          %v1686 = vpack.c.b16 %v1588, %v1588
          %v1687 = vpack.c.b16 %v1589, %v1589
          %v1688 = vpack.c.b16 %v1590, %v1590
          %v1689 = vpack.c.b16 %v1591, %v1591
          %v1690 = vpack.c.b16 %v1592, %v1592
          %v1691 = vpack.c.b16 %v1593, %v1593
          %v1692 = vpack.c.b16 %v1594, %v1594
          %v1693 = vpack.c.b16 %v1595, %v1595
          %v1694 = vpack.c.b16 %v1596, %v1596
          %v1695 = vpack.c.b16 %v1597, %v1597
          %v1696 = vpack.c.b16 %v1598, %v1598
          %v1697 = vpack.c.b16 %v1599, %v1599
          %v1698 = vpack.c.b16 %v1600, %v1600
          %v1699 = vpack.c.b16 %v1601, %v1601
          %v1700 = vpack.c.b16 %v1602, %v1602
          %v1701 = vpack.c.b16 %v1603, %v1603
          %v1702 = vpack.c.b16 %v1604, %v1604
          %v1703 = vpack.c.b16 %v1605, %v1605
          %v1704 = vpack.c.b16 %v1606, %v1606
          %v1705 = vpack.c.b16 %v1607, %v1607
          %v1706 = vpack.c.b16 %v1608, %v1608
          %v1707 = vpack.c.b16 %v1609, %v1609
          %v1708 = vpack.c.b16 %v1610, %v1610
          %v1709 = vpack.c.b16 %v1611, %v1611
          %v1710 = vpack.c.b16 %v1612, %v1612
          %v1711 = vpack.c.b16 %v1613, %v1613
          %v1712 = vpack.c.b16 %v1614, %v1614
          %v1713 = vpack.c.b16 %v1615, %v1615
          %v1714 = vpack.c.b16 %v1616, %v1616
          %v1715 = vpack.c.b16 %v1617, %v1617
          %v1716 = vpack.c.b16 %v1618, %v1618
          %v1717 = vpack.c.b16 %v1619, %v1619
          %v1718 = vpack.c.b16 %v1620, %v1620
          %v1719 = vpack.c.b16 %v1621, %v1621
          %v1720 = vpack.c.b16 %v1622, %v1622
          %v1721 = vpack.c.b16 %v1623, %v1623
          %v1722 = vpack.c.b16 %v1624, %v1624
          %v1723 = vpack.c.b16 %v1625, %v1625
          %v1724 = vpack.c.b16 %v1626, %v1626
          %v1725 = vpack.c.b16 %v1627, %v1627
          %v1726 = vpack.c.b16 %v1628, %v1628
          %v1727 = vpack.c.b16 %v1629, %v1629
          %v1728 = vpack.c.b16 %v1630, %v1630
          %v1729 = vpack.c.b16 %v1631, %v1631
          %v1730 = vpack.c.b16 %v1632, %v1632
          %v1731 = vpack.c.b16 %v1633, %v1633
          %v1732 = vpack.c.b16 %v1634, %v1634
          %v1733 = vpack.c.b16 %v1635, %v1635
          %v1734 = vpack.c.b16 %v1636, %v1636
          %v1735 = vpack.c.b16 %v1637, %v1637
          %v1736 = vpack.c.b16 %v1638, %v1638
          %v1737 = vpack.c.b16 %v1639, %v1639
          %v1738 = vpack.c.b16 %v1640, %v1640
          %v1739 = vpack.c.b16 %v1641, %v1641
          %v1740 = vpack.c.b16 %v1642, %v1642
          %v1741 = vpack.c.b16 %v1643, %v1643
          %v1742 = vpack.c.b16 %v1644, %v1644
          %v1743 = vpack.c.b16 %v1645, %v1645
          %v1744 = vpack.c.b16 %v1646, %v1646
          %v1745 = vpack.c.b16 %v1647, %v1647
          %v1746 = vpack.c.b16 %v1648, %v1648
          %v1747 = vpack.c.b16 %v1649, %v1649
          %v1748 = vpack.c.b16 %v1650, %v1650
          %v1749 = vpack.c.b16 %v1651, %v1651
          %v1750 = vpack.c.b16 %v1652, %v1652
          %v1751 = vpack.c.b16 %v1653, %v1653
          %v1752 = vpack.c.b16 %v1654, %v1654
          %v1753 = vpack.c.b16 %v1655, %v1655
          %v1754 = vpack.c.b16 %v1656, %v1656
          %v1755 = vpack.c.b16 %v1657, %v1657
          %v1756 = vpack.c.b16 %v1658, %v1658
          %v1757 = vpack.c.b16 %v1659, %v1659
          %v1758 = vpack.c.b16 %v1660, %v1660
          %v1759 = vpack.c.b16 %v1661, %v1661
          %v1760 = vpack.c.b16 %v1662, %v1662
          %1859 = vst [vmem:[#allocation2] sm:$0xf] %v1663
          %1860 = vst [vmem:[#allocation2 + $0x4] sm:$0xf] %v1664
          %1861 = vst [vmem:[#allocation2 + $0x8] sm:$0xf] %v1665
          %1862 = vst [vmem:[#allocation2 + $0xc] sm:$0xf] %v1666
          %1863 = vst [vmem:[#allocation2 + $0x10] sm:$0xf] %v1667
          %1864 = vst [vmem:[#allocation2 + $0x14] sm:$0xf] %v1668
          %1865 = vst [vmem:[#allocation2 + $0x18] sm:$0xf] %v1669
          %1866 = vst [vmem:[#allocation2 + $0x1c] sm:$0xf] %v1670
          %1867 = vst [vmem:[#allocation2 + $0x20] sm:$0xf] %v1671
          %1868 = vst [vmem:[#allocation2 + $0x24] sm:$0xf] %v1672
          %1869 = vst [vmem:[#allocation2 + $0x28] sm:$0xf] %v1673
          %1870 = vst [vmem:[#allocation2 + $0x2c] sm:$0xf] %v1674
          %1871 = vst [vmem:[#allocation2 + $0x30] sm:$0xf] %v1675
          %1872 = vst [vmem:[#allocation2 + $0x34] sm:$0xf] %v1676
          %1873 = vst [vmem:[#allocation2 + $0x38] sm:$0xf] %v1677
          %1874 = vst [vmem:[#allocation2 + $0x3c] sm:$0xf] %v1678
          %1875 = vst [vmem:[#allocation2 + $0x40] sm:$0xf] %v1679
          %1876 = vst [vmem:[#allocation2 + $0x44] sm:$0xf] %v1680
          %1877 = vst [vmem:[#allocation2 + $0x48] sm:$0xf] %v1681
          %1878 = vst [vmem:[#allocation2 + $0x4c] sm:$0xf] %v1682
          %1879 = vst [vmem:[#allocation2 + $0x50] sm:$0xf] %v1683
          %1880 = vst [vmem:[#allocation2 + $0x54] sm:$0xf] %v1684
          %1881 = vst [vmem:[#allocation2 + $0x58] sm:$0xf] %v1685
          %1882 = vst [vmem:[#allocation2 + $0x5c] sm:$0xf] %v1686
          %1883 = vst [vmem:[#allocation2 + $0x60] sm:$0xf] %v1687
          %1884 = vst [vmem:[#allocation2 + $0x64] sm:$0xf] %v1688
          %1885 = vst [vmem:[#allocation2 + $0x68] sm:$0xf] %v1689
          %1886 = vst [vmem:[#allocation2 + $0x6c] sm:$0xf] %v1690
          %1887 = vst [vmem:[#allocation2 + $0x70] sm:$0xf] %v1691
          %1888 = vst [vmem:[#allocation2 + $0x74] sm:$0xf] %v1692
          %1889 = vst [vmem:[#allocation2 + $0x78] sm:$0xf] %v1693
          %1890 = vst [vmem:[#allocation2 + $0x7c] sm:$0xf] %v1694
          %1891 = vst [vmem:[#allocation2 + $0x80] sm:$0xf] %v1695
          %1892 = vst [vmem:[#allocation2 + $0x84] sm:$0xf] %v1696
          %1893 = vst [vmem:[#allocation2 + $0x88] sm:$0xf] %v1697
          %1894 = vst [vmem:[#allocation2 + $0x8c] sm:$0xf] %v1698
          %1895 = vst [vmem:[#allocation2 + $0x90] sm:$0xf] %v1699
          %1896 = vst [vmem:[#allocation2 + $0x94] sm:$0xf] %v1700
          %1897 = vst [vmem:[#allocation2 + $0x98] sm:$0xf] %v1701
          %1898 = vst [vmem:[#allocation2 + $0x9c] sm:$0xf] %v1702
          %1899 = vst [vmem:[#allocation2 + $0xa0] sm:$0xf] %v1703
          %1900 = vst [vmem:[#allocation2 + $0xa4] sm:$0xf] %v1704
          %1901 = vst [vmem:[#allocation2 + $0xa8] sm:$0xf] %v1705
          %1902 = vst [vmem:[#allocation2 + $0xac] sm:$0xf] %v1706
          %1903 = vst [vmem:[#allocation2 + $0xb0] sm:$0xf] %v1707
          %1904 = vst [vmem:[#allocation2 + $0xb4] sm:$0xf] %v1708
          %1905 = vst [vmem:[#allocation2 + $0xb8] sm:$0xf] %v1709
          %1906 = vst [vmem:[#allocation2 + $0xbc] sm:$0xf] %v1710
          %1907 = vst [vmem:[#allocation2 + $0xc0] sm:$0xf] %v1711
          %1908 = vst [vmem:[#allocation2 + $0xc4] sm:$0xf] %v1712
          %1909 = vst [vmem:[#allocation2 + $0xc8] sm:$0xf] %v1713
          %1910 = vst [vmem:[#allocation2 + $0xcc] sm:$0xf] %v1714
          %1911 = vst [vmem:[#allocation2 + $0xd0] sm:$0xf] %v1715
          %1912 = vst [vmem:[#allocation2 + $0xd4] sm:$0xf] %v1716
          %1913 = vst [vmem:[#allocation2 + $0xd8] sm:$0xf] %v1717
          %1914 = vst [vmem:[#allocation2 + $0xdc] sm:$0xf] %v1718
          %1915 = vst [vmem:[#allocation2 + $0xe0] sm:$0xf] %v1719
          %1916 = vst [vmem:[#allocation2 + $0xe4] sm:$0xf] %v1720
          %1917 = vst [vmem:[#allocation2 + $0xe8] sm:$0xf] %v1721
          %1918 = vst [vmem:[#allocation2 + $0xec] sm:$0xf] %v1722
          %1919 = vst [vmem:[#allocation2 + $0xf0] sm:$0xf] %v1723
          %1920 = vst [vmem:[#allocation2 + $0xf4] sm:$0xf] %v1724
          %1921 = vst [vmem:[#allocation2 + $0xf8] sm:$0xf] %v1725
          %1922 = vst [vmem:[#allocation2 + $0xfc] sm:$0xf] %v1726
          %1923 = vst [vmem:[#allocation2 + $0x100] sm:$0xf] %v1727
          %1924 = vst [vmem:[#allocation2 + $0x104] sm:$0xf] %v1728
          %1925 = vst [vmem:[#allocation2 + $0x108] sm:$0xf] %v1729
          %1926 = vst [vmem:[#allocation2 + $0x10c] sm:$0xf] %v1730
          %1927 = vst [vmem:[#allocation2 + $0x110] sm:$0xf] %v1731
          %1928 = vst [vmem:[#allocation2 + $0x114] sm:$0xf] %v1732
          %1929 = vst [vmem:[#allocation2 + $0x118] sm:$0xf] %v1733
          %1930 = vst [vmem:[#allocation2 + $0x11c] sm:$0xf] %v1734
          %1931 = vst [vmem:[#allocation2 + $0x120] sm:$0xf] %v1735
          %1932 = vst [vmem:[#allocation2 + $0x124] sm:$0xf] %v1736
          %1933 = vst [vmem:[#allocation2 + $0x128] sm:$0xf] %v1737
          %1934 = vst [vmem:[#allocation2 + $0x12c] sm:$0xf] %v1738
          %1935 = vst [vmem:[#allocation2 + $0x130] sm:$0xf] %v1739
          %1936 = vst [vmem:[#allocation2 + $0x134] sm:$0xf] %v1740
          %1937 = vst [vmem:[#allocation2 + $0x138] sm:$0xf] %v1741
          %1938 = vst [vmem:[#allocation2 + $0x13c] sm:$0xf] %v1742
          %1939 = vst [vmem:[#allocation2 + $0x140] sm:$0xf] %v1743
          %1940 = vst [vmem:[#allocation2 + $0x144] sm:$0xf] %v1744
          %1941 = vst [vmem:[#allocation2 + $0x148] sm:$0xf] %v1745
          %1942 = vst [vmem:[#allocation2 + $0x14c] sm:$0xf] %v1746
          %1943 = vst [vmem:[#allocation2 + $0x150] sm:$0xf] %v1747
          %1944 = vst [vmem:[#allocation2 + $0x154] sm:$0xf] %v1748
          %1945 = vst [vmem:[#allocation2 + $0x158] sm:$0xf] %v1749
          %1946 = vst [vmem:[#allocation2 + $0x15c] sm:$0xf] %v1750
          %1947 = vst [vmem:[#allocation2 + $0x160] sm:$0xf] %v1751
          %1948 = vst [vmem:[#allocation2 + $0x164] sm:$0xf] %v1752
          %1949 = vst [vmem:[#allocation2 + $0x168] sm:$0xf] %v1753
          %1950 = vst [vmem:[#allocation2 + $0x16c] sm:$0xf] %v1754
          %1951 = vst [vmem:[#allocation2 + $0x170] sm:$0xf] %v1755
          %1952 = vst [vmem:[#allocation2 + $0x174] sm:$0xf] %v1756
          %1953 = vst [vmem:[#allocation2 + $0x178] sm:$0xf] %v1757
          %1954 = vst [vmem:[#allocation2 + $0x17c] sm:$0xf] %v1758
          %1955 = vst [vmem:[#allocation2 + $0x180] sm:$0xf] %v1759
          %1956 = vst [vmem:[#allocation2 + $0x184] sm:$0xf] %v1760
          %v1957 = vld [vmem:[#allocation2] sm:$0xf]
          %v1958 = vld [vmem:[#allocation2 + $0x4] sm:$0xf]
          %1959 = vst [vmem:[#allocation3] sm:$0xf] %v1957
          %1960 = vst [vmem:[#allocation3 + $0xc4] sm:$0xf] %v1958
          %v1961 = vld [vmem:[#allocation2 + $0x8] sm:$0xf]
          %v1962 = vld [vmem:[#allocation2 + $0xc] sm:$0xf]
          %1963 = vst [vmem:[#allocation3 + $0x4] sm:$0xf] %v1961
          %1964 = vst [vmem:[#allocation3 + $0xc8] sm:$0xf] %v1962
          %v1965 = vld [vmem:[#allocation2 + $0x10] sm:$0xf]
          %v1966 = vld [vmem:[#allocation2 + $0x14] sm:$0xf]
          %1967 = vst [vmem:[#allocation3 + $0x8] sm:$0xf] %v1965
          %1968 = vst [vmem:[#allocation3 + $0xcc] sm:$0xf] %v1966
          %v1969 = vld [vmem:[#allocation2 + $0x18] sm:$0xf]
          %v1970 = vld [vmem:[#allocation2 + $0x1c] sm:$0xf]
          %1971 = vst [vmem:[#allocation3 + $0xc] sm:$0xf] %v1969
          %1972 = vst [vmem:[#allocation3 + $0xd0] sm:$0xf] %v1970
          %v1973 = vld [vmem:[#allocation2 + $0x20] sm:$0xf]
          %v1974 = vld [vmem:[#allocation2 + $0x24] sm:$0xf]
          %1975 = vst [vmem:[#allocation3 + $0x10] sm:$0xf] %v1973
          %1976 = vst [vmem:[#allocation3 + $0xd4] sm:$0xf] %v1974
          %v1977 = vld [vmem:[#allocation2 + $0x28] sm:$0xf]
          %v1978 = vld [vmem:[#allocation2 + $0x2c] sm:$0xf]
          %1979 = vst [vmem:[#allocation3 + $0x14] sm:$0xf] %v1977
          %1980 = vst [vmem:[#allocation3 + $0xd8] sm:$0xf] %v1978
          %v1981 = vld [vmem:[#allocation2 + $0x30] sm:$0xf]
          %v1982 = vld [vmem:[#allocation2 + $0x34] sm:$0xf]
          %1983 = vst [vmem:[#allocation3 + $0x18] sm:$0xf] %v1981
          %1984 = vst [vmem:[#allocation3 + $0xdc] sm:$0xf] %v1982
          %v1985 = vld [vmem:[#allocation2 + $0x38] sm:$0xf]
          %v1986 = vld [vmem:[#allocation2 + $0x3c] sm:$0xf]
          %1987 = vst [vmem:[#allocation3 + $0x1c] sm:$0xf] %v1985
          %1988 = vst [vmem:[#allocation3 + $0xe0] sm:$0xf] %v1986
          %v1989 = vld [vmem:[#allocation2 + $0x40] sm:$0xf]
          %v1990 = vld [vmem:[#allocation2 + $0x44] sm:$0xf]
          %1991 = vst [vmem:[#allocation3 + $0x20] sm:$0xf] %v1989
          %1992 = vst [vmem:[#allocation3 + $0xe4] sm:$0xf] %v1990
          %v1993 = vld [vmem:[#allocation2 + $0x48] sm:$0xf]
          %v1994 = vld [vmem:[#allocation2 + $0x4c] sm:$0xf]
          %1995 = vst [vmem:[#allocation3 + $0x24] sm:$0xf] %v1993
          %1996 = vst [vmem:[#allocation3 + $0xe8] sm:$0xf] %v1994
          %v1997 = vld [vmem:[#allocation2 + $0x50] sm:$0xf]
          %v1998 = vld [vmem:[#allocation2 + $0x54] sm:$0xf]
          %1999 = vst [vmem:[#allocation3 + $0x28] sm:$0xf] %v1997
          %2000 = vst [vmem:[#allocation3 + $0xec] sm:$0xf] %v1998
          %v2001 = vld [vmem:[#allocation2 + $0x58] sm:$0xf]
          %v2002 = vld [vmem:[#allocation2 + $0x5c] sm:$0xf]
          %2003 = vst [vmem:[#allocation3 + $0x2c] sm:$0xf] %v2001
          %2004 = vst [vmem:[#allocation3 + $0xf0] sm:$0xf] %v2002
          %v2005 = vld [vmem:[#allocation2 + $0x60] sm:$0xf]
          %v2006 = vld [vmem:[#allocation2 + $0x64] sm:$0xf]
          %2007 = vst [vmem:[#allocation3 + $0x30] sm:$0xf] %v2005
          %2008 = vst [vmem:[#allocation3 + $0xf4] sm:$0xf] %v2006
          %v2009 = vld [vmem:[#allocation2 + $0x68] sm:$0xf]
          %v2010 = vld [vmem:[#allocation2 + $0x6c] sm:$0xf]
          %2011 = vst [vmem:[#allocation3 + $0x34] sm:$0xf] %v2009
          %2012 = vst [vmem:[#allocation3 + $0xf8] sm:$0xf] %v2010
          %v2013 = vld [vmem:[#allocation2 + $0x70] sm:$0xf]
          %v2014 = vld [vmem:[#allocation2 + $0x74] sm:$0xf]
          %2015 = vst [vmem:[#allocation3 + $0x38] sm:$0xf] %v2013
          %2016 = vst [vmem:[#allocation3 + $0xfc] sm:$0xf] %v2014
          %v2017 = vld [vmem:[#allocation2 + $0x78] sm:$0xf]
          %v2018 = vld [vmem:[#allocation2 + $0x7c] sm:$0xf]
          %2019 = vst [vmem:[#allocation3 + $0x3c] sm:$0xf] %v2017
          %2020 = vst [vmem:[#allocation3 + $0x100] sm:$0xf] %v2018
          %v2021 = vld [vmem:[#allocation2 + $0x80] sm:$0xf]
          %v2022 = vld [vmem:[#allocation2 + $0x84] sm:$0xf]
          %2023 = vst [vmem:[#allocation3 + $0x40] sm:$0xf] %v2021
          %2024 = vst [vmem:[#allocation3 + $0x104] sm:$0xf] %v2022
          %v2025 = vld [vmem:[#allocation2 + $0x88] sm:$0xf]
          %v2026 = vld [vmem:[#allocation2 + $0x8c] sm:$0xf]
          %2027 = vst [vmem:[#allocation3 + $0x44] sm:$0xf] %v2025
          %2028 = vst [vmem:[#allocation3 + $0x108] sm:$0xf] %v2026
          %v2029 = vld [vmem:[#allocation2 + $0x90] sm:$0xf]
          %v2030 = vld [vmem:[#allocation2 + $0x94] sm:$0xf]
          %2031 = vst [vmem:[#allocation3 + $0x48] sm:$0xf] %v2029
          %2032 = vst [vmem:[#allocation3 + $0x10c] sm:$0xf] %v2030
          %v2033 = vld [vmem:[#allocation2 + $0x98] sm:$0xf]
          %v2034 = vld [vmem:[#allocation2 + $0x9c] sm:$0xf]
          %2035 = vst [vmem:[#allocation3 + $0x4c] sm:$0xf] %v2033
          %2036 = vst [vmem:[#allocation3 + $0x110] sm:$0xf] %v2034
          %v2037 = vld [vmem:[#allocation2 + $0xa0] sm:$0xf]
          %v2038 = vld [vmem:[#allocation2 + $0xa4] sm:$0xf]
          %2039 = vst [vmem:[#allocation3 + $0x50] sm:$0xf] %v2037
          %2040 = vst [vmem:[#allocation3 + $0x114] sm:$0xf] %v2038
          %v2041 = vld [vmem:[#allocation2 + $0xa8] sm:$0xf]
          %v2042 = vld [vmem:[#allocation2 + $0xac] sm:$0xf]
          %2043 = vst [vmem:[#allocation3 + $0x54] sm:$0xf] %v2041
          %2044 = vst [vmem:[#allocation3 + $0x118] sm:$0xf] %v2042
          %v2045 = vld [vmem:[#allocation2 + $0xb0] sm:$0xf]
          %v2046 = vld [vmem:[#allocation2 + $0xb4] sm:$0xf]
          %2047 = vst [vmem:[#allocation3 + $0x58] sm:$0xf] %v2045
          %2048 = vst [vmem:[#allocation3 + $0x11c] sm:$0xf] %v2046
          %v2049 = vld [vmem:[#allocation2 + $0xb8] sm:$0xf]
          %v2050 = vld [vmem:[#allocation2 + $0xbc] sm:$0xf]
          %2051 = vst [vmem:[#allocation3 + $0x5c] sm:$0xf] %v2049
          %2052 = vst [vmem:[#allocation3 + $0x120] sm:$0xf] %v2050
          %v2053 = vld [vmem:[#allocation2 + $0xc0] sm:$0xf]
          %v2054 = vld [vmem:[#allocation2 + $0xc4] sm:$0xf]
          %2055 = vst [vmem:[#allocation3 + $0x60] sm:$0xf] %v2053
          %2056 = vst [vmem:[#allocation3 + $0x124] sm:$0xf] %v2054
          %v2057 = vld [vmem:[#allocation2 + $0xc8] sm:$0xf]
          %v2058 = vld [vmem:[#allocation2 + $0xcc] sm:$0xf]
          %2059 = vst [vmem:[#allocation3 + $0x64] sm:$0xf] %v2057
          %2060 = vst [vmem:[#allocation3 + $0x128] sm:$0xf] %v2058
          %v2061 = vld [vmem:[#allocation2 + $0xd0] sm:$0xf]
          %v2062 = vld [vmem:[#allocation2 + $0xd4] sm:$0xf]
          %2063 = vst [vmem:[#allocation3 + $0x68] sm:$0xf] %v2061
          %2064 = vst [vmem:[#allocation3 + $0x12c] sm:$0xf] %v2062
          %v2065 = vld [vmem:[#allocation2 + $0xd8] sm:$0xf]
          %v2066 = vld [vmem:[#allocation2 + $0xdc] sm:$0xf]
          %2067 = vst [vmem:[#allocation3 + $0x6c] sm:$0xf] %v2065
          %2068 = vst [vmem:[#allocation3 + $0x130] sm:$0xf] %v2066
          %v2069 = vld [vmem:[#allocation2 + $0xe0] sm:$0xf]
          %v2070 = vld [vmem:[#allocation2 + $0xe4] sm:$0xf]
          %2071 = vst [vmem:[#allocation3 + $0x70] sm:$0xf] %v2069
          %2072 = vst [vmem:[#allocation3 + $0x134] sm:$0xf] %v2070
          %v2073 = vld [vmem:[#allocation2 + $0xe8] sm:$0xf]
          %v2074 = vld [vmem:[#allocation2 + $0xec] sm:$0xf]
          %2075 = vst [vmem:[#allocation3 + $0x74] sm:$0xf] %v2073
          %2076 = vst [vmem:[#allocation3 + $0x138] sm:$0xf] %v2074
          %v2077 = vld [vmem:[#allocation2 + $0xf0] sm:$0xf]
          %v2078 = vld [vmem:[#allocation2 + $0xf4] sm:$0xf]
          %2079 = vst [vmem:[#allocation3 + $0x78] sm:$0xf] %v2077
          %2080 = vst [vmem:[#allocation3 + $0x13c] sm:$0xf] %v2078
          %v2081 = vld [vmem:[#allocation2 + $0xf8] sm:$0xf]
          %v2082 = vld [vmem:[#allocation2 + $0xfc] sm:$0xf]
          %2083 = vst [vmem:[#allocation3 + $0x7c] sm:$0xf] %v2081
          %2084 = vst [vmem:[#allocation3 + $0x140] sm:$0xf] %v2082
          %v2085 = vld [vmem:[#allocation2 + $0x100] sm:$0xf]
          %v2086 = vld [vmem:[#allocation2 + $0x104] sm:$0xf]
          %2087 = vst [vmem:[#allocation3 + $0x80] sm:$0xf] %v2085
          %2088 = vst [vmem:[#allocation3 + $0x144] sm:$0xf] %v2086
          %v2089 = vld [vmem:[#allocation2 + $0x108] sm:$0xf]
          %v2090 = vld [vmem:[#allocation2 + $0x10c] sm:$0xf]
          %2091 = vst [vmem:[#allocation3 + $0x84] sm:$0xf] %v2089
          %2092 = vst [vmem:[#allocation3 + $0x148] sm:$0xf] %v2090
          %v2093 = vld [vmem:[#allocation2 + $0x110] sm:$0xf]
          %v2094 = vld [vmem:[#allocation2 + $0x114] sm:$0xf]
          %2095 = vst [vmem:[#allocation3 + $0x88] sm:$0xf] %v2093
          %2096 = vst [vmem:[#allocation3 + $0x14c] sm:$0xf] %v2094
          %v2097 = vld [vmem:[#allocation2 + $0x118] sm:$0xf]
          %v2098 = vld [vmem:[#allocation2 + $0x11c] sm:$0xf]
          %2099 = vst [vmem:[#allocation3 + $0x8c] sm:$0xf] %v2097
          %2100 = vst [vmem:[#allocation3 + $0x150] sm:$0xf] %v2098
          %v2101 = vld [vmem:[#allocation2 + $0x120] sm:$0xf]
          %v2102 = vld [vmem:[#allocation2 + $0x124] sm:$0xf]
          %2103 = vst [vmem:[#allocation3 + $0x90] sm:$0xf] %v2101
          %2104 = vst [vmem:[#allocation3 + $0x154] sm:$0xf] %v2102
          %v2105 = vld [vmem:[#allocation2 + $0x128] sm:$0xf]
          %v2106 = vld [vmem:[#allocation2 + $0x12c] sm:$0xf]
          %2107 = vst [vmem:[#allocation3 + $0x94] sm:$0xf] %v2105
          %2108 = vst [vmem:[#allocation3 + $0x158] sm:$0xf] %v2106
          %v2109 = vld [vmem:[#allocation2 + $0x130] sm:$0xf]
          %v2110 = vld [vmem:[#allocation2 + $0x134] sm:$0xf]
          %2111 = vst [vmem:[#allocation3 + $0x98] sm:$0xf] %v2109
          %2112 = vst [vmem:[#allocation3 + $0x15c] sm:$0xf] %v2110
          %v2113 = vld [vmem:[#allocation2 + $0x138] sm:$0xf]
          %v2114 = vld [vmem:[#allocation2 + $0x13c] sm:$0xf]
          %2115 = vst [vmem:[#allocation3 + $0x9c] sm:$0xf] %v2113
          %2116 = vst [vmem:[#allocation3 + $0x160] sm:$0xf] %v2114
          %v2117 = vld [vmem:[#allocation2 + $0x140] sm:$0xf]
          %v2118 = vld [vmem:[#allocation2 + $0x144] sm:$0xf]
          %2119 = vst [vmem:[#allocation3 + $0xa0] sm:$0xf] %v2117
          %2120 = vst [vmem:[#allocation3 + $0x164] sm:$0xf] %v2118
          %v2121 = vld [vmem:[#allocation2 + $0x148] sm:$0xf]
          %v2122 = vld [vmem:[#allocation2 + $0x14c] sm:$0xf]
          %2123 = vst [vmem:[#allocation3 + $0xa4] sm:$0xf] %v2121
          %2124 = vst [vmem:[#allocation3 + $0x168] sm:$0xf] %v2122
          %v2125 = vld [vmem:[#allocation2 + $0x150] sm:$0xf]
          %v2126 = vld [vmem:[#allocation2 + $0x154] sm:$0xf]
          %2127 = vst [vmem:[#allocation3 + $0xa8] sm:$0xf] %v2125
          %2128 = vst [vmem:[#allocation3 + $0x16c] sm:$0xf] %v2126
          %v2129 = vld [vmem:[#allocation2 + $0x158] sm:$0xf]
          %v2130 = vld [vmem:[#allocation2 + $0x15c] sm:$0xf]
          %2131 = vst [vmem:[#allocation3 + $0xac] sm:$0xf] %v2129
          %2132 = vst [vmem:[#allocation3 + $0x170] sm:$0xf] %v2130
          %v2133 = vld [vmem:[#allocation2 + $0x160] sm:$0xf]
          %v2134 = vld [vmem:[#allocation2 + $0x164] sm:$0xf]
          %2135 = vst [vmem:[#allocation3 + $0xb0] sm:$0xf] %v2133
          %2136 = vst [vmem:[#allocation3 + $0x174] sm:$0xf] %v2134
          %v2137 = vld [vmem:[#allocation2 + $0x168] sm:$0xf]
          %v2138 = vld [vmem:[#allocation2 + $0x16c] sm:$0xf]
          %2139 = vst [vmem:[#allocation3 + $0xb4] sm:$0xf] %v2137
          %2140 = vst [vmem:[#allocation3 + $0x178] sm:$0xf] %v2138
          %v2141 = vld [vmem:[#allocation2 + $0x170] sm:$0xf]
          %v2142 = vld [vmem:[#allocation2 + $0x174] sm:$0xf]
          %2143 = vst [vmem:[#allocation3 + $0xb8] sm:$0xf] %v2141
          %2144 = vst [vmem:[#allocation3 + $0x17c] sm:$0xf] %v2142
          %v2145 = vld [vmem:[#allocation2 + $0x178] sm:$0xf]
          %v2146 = vld [vmem:[#allocation2 + $0x17c] sm:$0xf]
          %2147 = vst [vmem:[#allocation3 + $0xbc] sm:$0xf] %v2145
          %2148 = vst [vmem:[#allocation3 + $0x180] sm:$0xf] %v2146
          %v2149 = vld [vmem:[#allocation2 + $0x180] sm:$0xf]
          %v2150 = vld [vmem:[#allocation2 + $0x184] sm:$0xf]
          %2151 = vst [vmem:[#allocation3 + $0xc0] sm:$0xf] %v2149
          %2152 = vst [vmem:[#allocation3 + $0x184] sm:$0xf] %v2150
        $region60: #{image_encoder_forward.1} parent=39 // pred_fallthru
          _
        %v2153 = vld [vmem:[#allocation3] sm:$0xff]
        %v2154 = vld [vmem:[#allocation3 + $0x8] sm:$0xff]
        %v2155 = vld [vmem:[#allocation3 + $0x10] sm:$0xff]
        %v2156 = vld [vmem:[#allocation3 + $0x18] sm:$0xff]
        %v2157 = vld [vmem:[#allocation3 + $0x20] sm:$0xff]
        %v2158 = vld [vmem:[#allocation3 + $0x28] sm:$0xff]
        %v2159 = vld [vmem:[#allocation3 + $0x30] sm:$0xff]
        %v2160 = vld [vmem:[#allocation3 + $0x38] sm:$0xff]
        %v2161 = vld [vmem:[#allocation3 + $0x40] sm:$0xff]
        %v2162 = vld [vmem:[#allocation3 + $0x48] sm:$0xff]
        %v2163 = vld [vmem:[#allocation3 + $0x50] sm:$0xff]
        %v2164 = vld [vmem:[#allocation3 + $0x58] sm:$0xff]
        %v2165 = vld [vmem:[#allocation3 + $0x60] sm:$0xff]
        %v2166 = vld [vmem:[#allocation3 + $0x68] sm:$0xff]
        %v2167 = vld [vmem:[#allocation3 + $0x70] sm:$0xff]
        %v2168 = vld [vmem:[#allocation3 + $0x78] sm:$0xff]
        %v2169 = vld [vmem:[#allocation3 + $0x80] sm:$0xff]
        %v2170 = vld [vmem:[#allocation3 + $0x88] sm:$0xff]
        %v2171 = vld [vmem:[#allocation3 + $0x90] sm:$0xff]
        %v2172 = vld [vmem:[#allocation3 + $0x98] sm:$0xff]
        %v2173 = vld [vmem:[#allocation3 + $0xa0] sm:$0xff]
        %v2174 = vld [vmem:[#allocation3 + $0xa8] sm:$0xff]
        %v2175 = vld [vmem:[#allocation3 + $0xb0] sm:$0xff]
        %v2176 = vld [vmem:[#allocation3 + $0xb8] sm:$0xff]
        %v2177 = vld [vmem:[#allocation3 + $0xc0] sm:$0xf]
        %v2178 = vld [vmem:[#allocation3 + $0xc4] sm:$0xff]
        %v2179 = vld [vmem:[#allocation3 + $0xcc] sm:$0xff]
        %v2180 = vld [vmem:[#allocation3 + $0xd4] sm:$0xff]
        %v2181 = vld [vmem:[#allocation3 + $0xdc] sm:$0xff]
        %v2182 = vld [vmem:[#allocation3 + $0xe4] sm:$0xff]
        %v2183 = vld [vmem:[#allocation3 + $0xec] sm:$0xff]
        %v2184 = vld [vmem:[#allocation3 + $0xf4] sm:$0xff]
        %v2185 = vld [vmem:[#allocation3 + $0xfc] sm:$0xff]
        %v2186 = vld [vmem:[#allocation3 + $0x104] sm:$0xff]
        %v2187 = vld [vmem:[#allocation3 + $0x10c] sm:$0xff]
        %v2188 = vld [vmem:[#allocation3 + $0x114] sm:$0xff]
        %v2189 = vld [vmem:[#allocation3 + $0x11c] sm:$0xff]
        %v2190 = vld [vmem:[#allocation3 + $0x124] sm:$0xff]
        %v2191 = vld [vmem:[#allocation3 + $0x12c] sm:$0xff]
        %v2192 = vld [vmem:[#allocation3 + $0x134] sm:$0xff]
        %v2193 = vld [vmem:[#allocation3 + $0x13c] sm:$0xff]
        %v2194 = vld [vmem:[#allocation3 + $0x144] sm:$0xff]
        %v2195 = vld [vmem:[#allocation3 + $0x14c] sm:$0xff]
        %v2196 = vld [vmem:[#allocation3 + $0x154] sm:$0xff]
        %v2197 = vld [vmem:[#allocation3 + $0x15c] sm:$0xff]
        %v2198 = vld [vmem:[#allocation3 + $0x164] sm:$0xff]
        %v2199 = vld [vmem:[#allocation3 + $0x16c] sm:$0xff]
        %v2200 = vld [vmem:[#allocation3 + $0x174] sm:$0xff]
        %v2201 = vld [vmem:[#allocation3 + $0x17c] sm:$0xff]
        %v2202 = vld [vmem:[#allocation3 + $0x184] sm:$0xf]
        %v2203 = vld [vmem:[#allocation4] sm:$0xff]
        %v2204 = vld [vmem:[#allocation4 + $0x8] sm:$0xff]
        %v2205 = vld [vmem:[%s273] sm:$0xf]
        %v2206 = vld [vmem:[%s273 + $0x4] sm:$0xf]
        %v2207 = vld [vmem:[%s273 + $0x8] sm:$0xf]
        %v2208 = vld [vmem:[%s273 + $0xc] sm:$0xf]
        %v2209 = vld [vmem:[%s273 + $0x10] sm:$0xf]
        %v2210 = vld [vmem:[%s273 + $0x14] sm:$0xf]
        %v2211 = vld [vmem:[%s273 + $0x18] sm:$0xf]
        %v2212 = vld [vmem:[%s273 + $0x1c] sm:$0xf]
        %v2213 = vld [vmem:[%s273 + $0x20] sm:$0xf]
        %v2214 = vld [vmem:[%s273 + $0x24] sm:$0xf]
        %v2215 = vld [vmem:[%s273 + $0x28] sm:$0xf]
        %v2216 = vld [vmem:[%s273 + $0x2c] sm:$0xf]
        %v2217 = vld [vmem:[%s273 + $0x30] sm:$0xf]
        %v2218 = vld [vmem:[%s273 + $0x34] sm:$0xf]
        %v2219 = vld [vmem:[%s273 + $0x38] sm:$0xf]
        %v2220 = vld [vmem:[%s273 + $0x3c] sm:$0xf]
        %v2221 = vld [vmem:[%s273 + $0x40] sm:$0xf]
        %v2222 = vld [vmem:[%s273 + $0x44] sm:$0xf]
        %v2223 = vld [vmem:[%s273 + $0x48] sm:$0xf]
        %v2224 = vld [vmem:[%s273 + $0x4c] sm:$0xf]
        %v2225 = vld [vmem:[%s273 + $0x50] sm:$0xf]
        %v2226 = vld [vmem:[%s273 + $0x54] sm:$0xf]
        %v2227 = vld [vmem:[%s273 + $0x58] sm:$0xf]
        %v2228 = vld [vmem:[%s273 + $0x5c] sm:$0xf]
        %v2229 = vld [vmem:[%s273 + $0x60] sm:$0xf]
        %v2230 = vld [vmem:[%s273 + $0x64] sm:$0xf]
        %v2231 = vld [vmem:[%s273 + $0x68] sm:$0xf]
        %v2232 = vld [vmem:[%s273 + $0x6c] sm:$0xf]
        %v2233 = vld [vmem:[%s273 + $0x70] sm:$0xf]
        %v2234 = vld [vmem:[%s273 + $0x74] sm:$0xf]
        %v2235 = vld [vmem:[%s273 + $0x78] sm:$0xf]
        %v2236 = vld [vmem:[%s273 + $0x7c] sm:$0xf]
        %v2237 = vld [vmem:[%s273 + $0x80] sm:$0xf]
        %v2238 = vld [vmem:[%s273 + $0x84] sm:$0xf]
        %v2239 = vld [vmem:[%s273 + $0x88] sm:$0xf]
        %v2240 = vld [vmem:[%s273 + $0x8c] sm:$0xf]
        %v2241 = vld [vmem:[%s273 + $0x90] sm:$0xf]
        %v2242 = vld [vmem:[%s273 + $0x94] sm:$0xf]
        %v2243 = vld [vmem:[%s273 + $0x98] sm:$0xf]
        %v2244 = vld [vmem:[%s273 + $0x9c] sm:$0xf]
        %v2245 = vld [vmem:[%s273 + $0xa0] sm:$0xf]
        %v2246 = vld [vmem:[%s273 + $0xa4] sm:$0xf]
        %v2247 = vld [vmem:[%s273 + $0xa8] sm:$0xf]
        %v2248 = vld [vmem:[%s273 + $0xac] sm:$0xf]
        %v2249 = vld [vmem:[%s273 + $0xb0] sm:$0xf]
        %v2250 = vld [vmem:[%s273 + $0xb4] sm:$0xf]
        %v2251 = vld [vmem:[%s273 + $0xb8] sm:$0xf]
        %v2252 = vld [vmem:[%s273 + $0xbc] sm:$0xf]
        %v2253 = vld [vmem:[%s273 + $0xc0] sm:$0xf]
        %v2254 = vld [vmem:[%s273 + $0xc4] sm:$0xf]
        %v2255 = vld [vmem:[%s273 + $0xc8] sm:$0xf]
        %v2256 = vld [vmem:[%s273 + $0xcc] sm:$0xf]
        %v2257 = vld [vmem:[%s273 + $0xd0] sm:$0xf]
        %v2258 = vld [vmem:[%s273 + $0xd4] sm:$0xf]
        %v2259 = vld [vmem:[%s273 + $0xd8] sm:$0xf]
        %v2260 = vld [vmem:[%s273 + $0xdc] sm:$0xf]
        %v2261 = vld [vmem:[%s273 + $0xe0] sm:$0xf]
        %v2262 = vld [vmem:[%s273 + $0xe4] sm:$0xf]
        %v2263 = vld [vmem:[%s273 + $0xe8] sm:$0xf]
        %v2264 = vld [vmem:[%s273 + $0xec] sm:$0xf]
        %v2265 = vld [vmem:[%s273 + $0xf0] sm:$0xf]
        %v2266 = vld [vmem:[%s273 + $0xf4] sm:$0xf]
        %v2267 = vld [vmem:[%s273 + $0xf8] sm:$0xf]
        %v2268 = vld [vmem:[%s273 + $0xfc] sm:$0xf]
        %v2269 = vld [vmem:[%s273 + $0x100] sm:$0xf]
        %v2270 = vld [vmem:[%s273 + $0x104] sm:$0xf]
        %v2271 = vld [vmem:[%s273 + $0x108] sm:$0xf]
        %v2272 = vld [vmem:[%s273 + $0x10c] sm:$0xf]
        %v2273 = vld [vmem:[%s273 + $0x110] sm:$0xf]
        %v2274 = vld [vmem:[%s273 + $0x114] sm:$0xf]
        %v2275 = vld [vmem:[%s273 + $0x118] sm:$0xf]
        %v2276 = vld [vmem:[%s273 + $0x11c] sm:$0xf]
        %v2277 = vld [vmem:[%s273 + $0x120] sm:$0xf]
        %v2278 = vld [vmem:[%s273 + $0x124] sm:$0xf]
        %v2279 = vld [vmem:[%s273 + $0x128] sm:$0xf]
        %v2280 = vld [vmem:[%s273 + $0x12c] sm:$0xf]
        %v2281 = vld [vmem:[%s273 + $0x130] sm:$0xf]
        %v2282 = vld [vmem:[%s273 + $0x134] sm:$0xf]
        %v2283 = vld [vmem:[%s273 + $0x138] sm:$0xf]
        %v2284 = vld [vmem:[%s273 + $0x13c] sm:$0xf]
        %v2285 = vld [vmem:[%s273 + $0x140] sm:$0xf]
        %v2286 = vld [vmem:[%s273 + $0x144] sm:$0xf]
        %v2287 = vld [vmem:[%s273 + $0x148] sm:$0xf]
        %v2288 = vld [vmem:[%s273 + $0x14c] sm:$0xf]
        %v2289 = vld [vmem:[%s273 + $0x150] sm:$0xf]
        %v2290 = vld [vmem:[%s273 + $0x154] sm:$0xf]
        %v2291 = vld [vmem:[%s273 + $0x158] sm:$0xf]
        %v2292 = vld [vmem:[%s273 + $0x15c] sm:$0xf]
        %v2293 = vld [vmem:[%s273 + $0x160] sm:$0xf]
        %v2294 = vld [vmem:[%s273 + $0x164] sm:$0xf]
        %v2295 = vld [vmem:[%s273 + $0x168] sm:$0xf]
        %v2296 = vld [vmem:[%s273 + $0x16c] sm:$0xf]
        %v2297 = vld [vmem:[%s273 + $0x170] sm:$0xf]
        %v2298 = vld [vmem:[%s273 + $0x174] sm:$0xf]
        %v2299 = vld [vmem:[%s273 + $0x178] sm:$0xf]
        %v2300 = vld [vmem:[%s273 + $0x17c] sm:$0xf]
        %v2301 = vld [vmem:[%s273 + $0x180] sm:$0xf]
        %v2302 = vld [vmem:[%s273 + $0x184] sm:$0xf]
        %v2303 = vld [vmem:[%s273 + $0x188] sm:$0xf]
        %v2304 = vld [vmem:[%s273 + $0x18c] sm:$0xf]
        %v2305 = vld [vmem:[%s273 + $0x190] sm:$0xf]
        %v2306 = vld [vmem:[%s273 + $0x194] sm:$0xf]
        %v2307 = vld [vmem:[%s273 + $0x198] sm:$0xf]
        %v2308 = vld [vmem:[%s273 + $0x19c] sm:$0xf]
        %v2309 = vld [vmem:[%s273 + $0x1a0] sm:$0xf]
        %v2310 = vld [vmem:[%s273 + $0x1a4] sm:$0xf]
        %v2311 = vld [vmem:[%s273 + $0x1a8] sm:$0xf]
        %v2312 = vld [vmem:[%s273 + $0x1ac] sm:$0xf]
        %v2313 = vld [vmem:[%s273 + $0x1b0] sm:$0xf]
        %v2314 = vld [vmem:[%s273 + $0x1b4] sm:$0xf]
        %v2315 = vld [vmem:[%s273 + $0x1b8] sm:$0xf]
        %v2316 = vld [vmem:[%s273 + $0x1bc] sm:$0xf]
        %v2317 = vld [vmem:[%s273 + $0x1c0] sm:$0xf]
        %v2318 = vld [vmem:[%s273 + $0x1c4] sm:$0xf]
        %v2319 = vld [vmem:[%s273 + $0x1c8] sm:$0xf]
        %v2320 = vld [vmem:[%s273 + $0x1cc] sm:$0xf]
        %v2321 = vld [vmem:[%s273 + $0x1d0] sm:$0xf]
        %v2322 = vld [vmem:[%s273 + $0x1d4] sm:$0xf]
        %v2323 = vld [vmem:[%s273 + $0x1d8] sm:$0xf]
        %v2324 = vld [vmem:[%s273 + $0x1dc] sm:$0xf]
        %v2325 = vld [vmem:[%s273 + $0x1e0] sm:$0xf]
        %v2326 = vld [vmem:[%s273 + $0x1e4] sm:$0xf]
        %v2327 = vld [vmem:[%s273 + $0x1e8] sm:$0xf]
        %v2328 = vld [vmem:[%s273 + $0x1ec] sm:$0xf]
        %v2329 = vld [vmem:[%s273 + $0x1f0] sm:$0xf]
        %v2330 = vld [vmem:[%s273 + $0x1f4] sm:$0xf]
        %v2331 = vld [vmem:[%s273 + $0x1f8] sm:$0xf]
        %v2332 = vld [vmem:[%s273 + $0x1fc] sm:$0xf]
        %v2333 = vld [vmem:[%s273 + $0x200] sm:$0xf]
        %v2334 = vld [vmem:[%s273 + $0x204] sm:$0xf]
        %v2335 = vld [vmem:[%s273 + $0x208] sm:$0xf]
        %v2336 = vld [vmem:[%s273 + $0x20c] sm:$0xf]
        %v2337 = vld [vmem:[%s273 + $0x210] sm:$0xf]
        %v2338 = vld [vmem:[%s273 + $0x214] sm:$0xf]
        %v2339 = vld [vmem:[%s273 + $0x218] sm:$0xf]
        %v2340 = vld [vmem:[%s273 + $0x21c] sm:$0xf]
        %v2341 = vld [vmem:[%s273 + $0x220] sm:$0xf]
        %v2342 = vld [vmem:[%s273 + $0x224] sm:$0xf]
        %v2343 = vld [vmem:[%s273 + $0x228] sm:$0xf]
        %v2344 = vld [vmem:[%s273 + $0x22c] sm:$0xf]
        %v2345 = vld [vmem:[%s273 + $0x230] sm:$0xf]
        %v2346 = vld [vmem:[%s273 + $0x234] sm:$0xf]
        %v2347 = vld [vmem:[%s273 + $0x238] sm:$0xf]
        %v2348 = vld [vmem:[%s273 + $0x23c] sm:$0xf]
        %v2349 = vld [vmem:[%s273 + $0x240] sm:$0xf]
        %v2350 = vld [vmem:[%s273 + $0x244] sm:$0xf]
        %v2351 = vld [vmem:[%s273 + $0x248] sm:$0xf]
        %v2352 = vld [vmem:[%s273 + $0x24c] sm:$0xf]
        %v2353 = vld [vmem:[%s273 + $0x250] sm:$0xf]
        %v2354 = vld [vmem:[%s273 + $0x254] sm:$0xf]
        %v2355 = vld [vmem:[%s273 + $0x258] sm:$0xf]
        %v2356 = vld [vmem:[%s273 + $0x25c] sm:$0xf]
        %v2357 = vld [vmem:[%s273 + $0x260] sm:$0xf]
        %v2358 = vld [vmem:[%s273 + $0x264] sm:$0xf]
        %v2359 = vld [vmem:[%s273 + $0x268] sm:$0xf]
        %v2360 = vld [vmem:[%s273 + $0x26c] sm:$0xf]
        %v2361 = vld [vmem:[%s273 + $0x270] sm:$0xf]
        %v2362 = vld [vmem:[%s273 + $0x274] sm:$0xf]
        %v2363 = vld [vmem:[%s273 + $0x278] sm:$0xf]
        %v2364 = vld [vmem:[%s273 + $0x27c] sm:$0xf]
        %v2365 = vld [vmem:[%s273 + $0x280] sm:$0xf]
        %v2366 = vld [vmem:[%s273 + $0x284] sm:$0xf]
        %v2367 = vld [vmem:[%s273 + $0x288] sm:$0xf]
        %v2368 = vld [vmem:[%s273 + $0x28c] sm:$0xf]
        %v2369 = vld [vmem:[%s273 + $0x290] sm:$0xf]
        %v2370 = vld [vmem:[%s273 + $0x294] sm:$0xf]
        %v2371 = vld [vmem:[%s273 + $0x298] sm:$0xf]
        %v2372 = vld [vmem:[%s273 + $0x29c] sm:$0xf]
        %v2373 = vld [vmem:[%s273 + $0x2a0] sm:$0xf]
        %v2374 = vld [vmem:[%s273 + $0x2a4] sm:$0xf]
        %v2375 = vld [vmem:[%s273 + $0x2a8] sm:$0xf]
        %v2376 = vld [vmem:[%s273 + $0x2ac] sm:$0xf]
        %v2377 = vld [vmem:[%s273 + $0x2b0] sm:$0xf]
        %v2378 = vld [vmem:[%s273 + $0x2b4] sm:$0xf]
        %v2379 = vld [vmem:[%s273 + $0x2b8] sm:$0xf]
        %v2380 = vld [vmem:[%s273 + $0x2bc] sm:$0xf]
        %v2381 = vld [vmem:[%s273 + $0x2c0] sm:$0xf]
        %v2382 = vld [vmem:[%s273 + $0x2c4] sm:$0xf]
        %v2383 = vld [vmem:[%s273 + $0x2c8] sm:$0xf]
        %v2384 = vld [vmem:[%s273 + $0x2cc] sm:$0xf]
        %v2385 = vld [vmem:[%s273 + $0x2d0] sm:$0xf]
        %v2386 = vld [vmem:[%s273 + $0x2d4] sm:$0xf]
        %v2387 = vld [vmem:[%s273 + $0x2d8] sm:$0xf]
        %v2388 = vld [vmem:[%s273 + $0x2dc] sm:$0xf]
        %v2389 = vld [vmem:[%s273 + $0x2e0] sm:$0xf]
        %v2390 = vld [vmem:[%s273 + $0x2e4] sm:$0xf]
        %v2391 = vld [vmem:[%s273 + $0x2e8] sm:$0xf]
        %v2392 = vld [vmem:[%s273 + $0x2ec] sm:$0xf]
        %v2393 = vld [vmem:[%s273 + $0x2f0] sm:$0xf]
        %v2394 = vld [vmem:[%s273 + $0x2f4] sm:$0xf]
        %v2395 = vld [vmem:[%s273 + $0x2f8] sm:$0xf]
        %v2396 = vld [vmem:[%s273 + $0x2fc] sm:$0xf]
        %v2397 = vld [vmem:[%s273 + $0x300] sm:$0xf]
        %v2398 = vld [vmem:[%s273 + $0x304] sm:$0xf]
        %v2399 = vld [vmem:[%s273 + $0x308] sm:$0xf]
        %v2400 = vld [vmem:[%s273 + $0x30c] sm:$0xf]
        %v2401 = vld [vmem:[%s273 + $0x310] sm:$0xf]
        %v2402 = vld [vmem:[%s273 + $0x314] sm:$0xf]
        %v2403 = vld [vmem:[%s273 + $0x318] sm:$0xf]
        %v2404 = vld [vmem:[%s273 + $0x31c] sm:$0xf]
        %v2405 = vld [vmem:[%s273 + $0x320] sm:$0xf]
        %v2406 = vld [vmem:[%s273 + $0x324] sm:$0xf]
        %v2407 = vld [vmem:[%s273 + $0x328] sm:$0xf]
        %v2408 = vld [vmem:[%s273 + $0x32c] sm:$0xf]
        %v2409 = vld [vmem:[%s273 + $0x330] sm:$0xf]
        %v2410 = vld [vmem:[%s273 + $0x334] sm:$0xf]
        %v2411 = vld [vmem:[%s273 + $0x338] sm:$0xf]
        %v2412 = vld [vmem:[%s273 + $0x33c] sm:$0xf]
        %v2413 = vld [vmem:[%s273 + $0x340] sm:$0xf]
        %v2414 = vld [vmem:[%s273 + $0x344] sm:$0xf]
        %v2415 = vld [vmem:[%s273 + $0x348] sm:$0xf]
        %v2416 = vld [vmem:[%s273 + $0x34c] sm:$0xf]
        %v2417 = vld [vmem:[%s273 + $0x350] sm:$0xf]
        %v2418 = vld [vmem:[%s273 + $0x354] sm:$0xf]
        %v2419 = vld [vmem:[%s273 + $0x358] sm:$0xf]
        %v2420 = vld [vmem:[%s273 + $0x35c] sm:$0xf]
        %v2421 = vld [vmem:[%s273 + $0x360] sm:$0xf]
        %v2422 = vld [vmem:[%s273 + $0x364] sm:$0xf]
        %v2423 = vld [vmem:[%s273 + $0x368] sm:$0xf]
        %v2424 = vld [vmem:[%s273 + $0x36c] sm:$0xf]
        %v2425 = vld [vmem:[%s273 + $0x370] sm:$0xf]
        %v2426 = vld [vmem:[%s273 + $0x374] sm:$0xf]
        %v2427 = vld [vmem:[%s273 + $0x378] sm:$0xf]
        %v2428 = vld [vmem:[%s273 + $0x37c] sm:$0xf]
        %v2429 = vld [vmem:[%s273 + $0x380] sm:$0xf]
        %v2430 = vld [vmem:[%s273 + $0x384] sm:$0xf]
        %v2431 = vld [vmem:[%s273 + $0x388] sm:$0xf]
        %v2432 = vld [vmem:[%s273 + $0x38c] sm:$0xf]
        %v2433 = vld [vmem:[%s273 + $0x390] sm:$0xf]
        %v2434 = vld [vmem:[%s273 + $0x394] sm:$0xf]
        %v2435 = vld [vmem:[%s273 + $0x398] sm:$0xf]
        %v2436 = vld [vmem:[%s273 + $0x39c] sm:$0xf]
        %v2437 = vld [vmem:[%s273 + $0x3a0] sm:$0xf]
        %v2438 = vld [vmem:[%s273 + $0x3a4] sm:$0xf]
        %v2439 = vld [vmem:[%s273 + $0x3a8] sm:$0xf]
        %v2440 = vld [vmem:[%s273 + $0x3ac] sm:$0xf]
        %v2441 = vld [vmem:[%s273 + $0x3b0] sm:$0xf]
        %v2442 = vld [vmem:[%s273 + $0x3b4] sm:$0xf]
        %v2443 = vld [vmem:[%s273 + $0x3b8] sm:$0xf]
        %v2444 = vld [vmem:[%s273 + $0x3bc] sm:$0xf]
        %v2445 = vld [vmem:[%s273 + $0x3c0] sm:$0xf]
        %v2446 = vld [vmem:[%s273 + $0x3c4] sm:$0xf]
        %v2447 = vld [vmem:[%s273 + $0x3c8] sm:$0xf]
        %v2448 = vld [vmem:[%s273 + $0x3cc] sm:$0xf]
        %v2449 = vld [vmem:[%s273 + $0x3d0] sm:$0xf]
        %v2450 = vld [vmem:[%s273 + $0x3d4] sm:$0xf]
        %v2451 = vld [vmem:[%s273 + $0x3d8] sm:$0xf]
        %v2452 = vld [vmem:[%s273 + $0x3dc] sm:$0xf]
        %v2453 = vld [vmem:[%s273 + $0x3e0] sm:$0xf]
        %v2454 = vld [vmem:[%s273 + $0x3e4] sm:$0xf]
        %v2455 = vld [vmem:[%s273 + $0x3e8] sm:$0xf]
        %v2456 = vld [vmem:[%s273 + $0x3ec] sm:$0xf]
        %v2457 = vld [vmem:[%s273 + $0x3f0] sm:$0xf]
        %v2458 = vld [vmem:[%s273 + $0x3f4] sm:$0xf]
        %v2459 = vld [vmem:[%s273 + $0x3f8] sm:$0xf]
        %v2460 = vld [vmem:[%s273 + $0x3fc] sm:$0xf]
        %v2461 = vld [vmem:[%s273 + $0x400] sm:$0xf]
        %v2462 = vld [vmem:[%s273 + $0x404] sm:$0xf]
        %v2463 = vld [vmem:[%s273 + $0x408] sm:$0xf]
        %v2464 = vld [vmem:[%s273 + $0x40c] sm:$0xf]
        %v2465 = vld [vmem:[%s273 + $0x410] sm:$0xf]
        %v2466 = vld [vmem:[%s273 + $0x414] sm:$0xf]
        %v2467 = vld [vmem:[%s273 + $0x418] sm:$0xf]
        %v2468 = vld [vmem:[%s273 + $0x41c] sm:$0xf]
        %v2469 = vld [vmem:[%s273 + $0x420] sm:$0xf]
        %v2470 = vld [vmem:[%s273 + $0x424] sm:$0xf]
        %v2471 = vld [vmem:[%s273 + $0x428] sm:$0xf]
        %v2472 = vld [vmem:[%s273 + $0x42c] sm:$0xf]
        %v2473 = vld [vmem:[%s273 + $0x430] sm:$0xf]
        %v2474 = vld [vmem:[%s273 + $0x434] sm:$0xf]
        %v2475 = vld [vmem:[%s273 + $0x438] sm:$0xf]
        %v2476 = vld [vmem:[%s273 + $0x43c] sm:$0xf]
        %v2477 = vld [vmem:[%s273 + $0x440] sm:$0xf]
        %v2478 = vld [vmem:[%s273 + $0x444] sm:$0xf]
        %v2479 = vld [vmem:[%s273 + $0x448] sm:$0xf]
        %v2480 = vld [vmem:[%s273 + $0x44c] sm:$0xf]
        %v2481 = vld [vmem:[%s273 + $0x450] sm:$0xf]
        %v2482 = vld [vmem:[%s273 + $0x454] sm:$0xf]
        %v2483 = vld [vmem:[%s273 + $0x458] sm:$0xf]
        %v2484 = vld [vmem:[%s273 + $0x45c] sm:$0xf]
        %v2485 = vld [vmem:[%s273 + $0x460] sm:$0xf]
        %v2486 = vld [vmem:[%s273 + $0x464] sm:$0xf]
        %v2487 = vld [vmem:[%s273 + $0x468] sm:$0xf]
        %v2488 = vld [vmem:[%s273 + $0x46c] sm:$0xf]
        %v2489 = vld [vmem:[%s273 + $0x470] sm:$0xf]
        %v2490 = vld [vmem:[%s273 + $0x474] sm:$0xf]
        %v2491 = vld [vmem:[%s273 + $0x478] sm:$0xf]
        %v2492 = vld [vmem:[%s273 + $0x47c] sm:$0xf]
        %v2493 = vld [vmem:[%s273 + $0x480] sm:$0xf]
        %v2494 = vld [vmem:[%s273 + $0x484] sm:$0xf]
        %v2495 = vld [vmem:[%s273 + $0x488] sm:$0xf]
        %v2496 = vld [vmem:[%s273 + $0x48c] sm:$0xf]
        %v2497 = vld [vmem:[%s273 + $0x490] sm:$0xf]
        %v2498 = vld [vmem:[%s273 + $0x494] sm:$0xf]
        %v2499 = vld [vmem:[%s273 + $0x498] sm:$0xf]
        %v2500 = vld [vmem:[%s273 + $0x49c] sm:$0xf]
        %v2501 = vld [vmem:[%s273 + $0x4a0] sm:$0xf]
        %v2502 = vld [vmem:[%s273 + $0x4a4] sm:$0xf]
        %v2503 = vld [vmem:[%s273 + $0x4a8] sm:$0xf]
        %v2504 = vld [vmem:[%s273 + $0x4ac] sm:$0xf]
        %v2505 = vld [vmem:[%s273 + $0x4b0] sm:$0xf]
        %v2506 = vld [vmem:[%s273 + $0x4b4] sm:$0xf]
        %v2507 = vld [vmem:[%s273 + $0x4b8] sm:$0xf]
        %v2508 = vld [vmem:[%s273 + $0x4bc] sm:$0xf]
        %v2509 = vld [vmem:[%s273 + $0x4c0] sm:$0xf]
        %v2510 = vld [vmem:[%s273 + $0x4c4] sm:$0xf]
        %v2511 = vld [vmem:[%s273 + $0x4c8] sm:$0xf]
        %v2512 = vld [vmem:[%s273 + $0x4cc] sm:$0xf]
        %v2513 = vld [vmem:[%s273 + $0x4d0] sm:$0xf]
        %v2514 = vld [vmem:[%s273 + $0x4d4] sm:$0xf]
        %v2515 = vld [vmem:[%s273 + $0x4d8] sm:$0xf]
        %v2516 = vld [vmem:[%s273 + $0x4dc] sm:$0xf]
        %v2517 = vld [vmem:[%s273 + $0x4e0] sm:$0xf]
        %v2518 = vld [vmem:[%s273 + $0x4e4] sm:$0xf]
        %v2519 = vld [vmem:[%s273 + $0x4e8] sm:$0xf]
        %v2520 = vld [vmem:[%s273 + $0x4ec] sm:$0xf]
        %v2521 = vld [vmem:[%s273 + $0x4f0] sm:$0xf]
        %v2522 = vld [vmem:[%s273 + $0x4f4] sm:$0xf]
        %v2523 = vld [vmem:[%s273 + $0x4f8] sm:$0xf]
        %v2524 = vld [vmem:[%s273 + $0x4fc] sm:$0xf]
        %v2525 = vld [vmem:[%s273 + $0x500] sm:$0xf]
        %v2526 = vld [vmem:[%s273 + $0x504] sm:$0xf]
        %v2527 = vld [vmem:[%s273 + $0x508] sm:$0xf]
        %v2528 = vld [vmem:[%s273 + $0x50c] sm:$0xf]
        %v2529 = vld [vmem:[%s273 + $0x510] sm:$0xf]
        %v2530 = vld [vmem:[%s273 + $0x514] sm:$0xf]
        %v2531 = vld [vmem:[%s273 + $0x518] sm:$0xf]
        %v2532 = vld [vmem:[%s273 + $0x51c] sm:$0xf]
        %v2533 = vld [vmem:[%s273 + $0x520] sm:$0xf]
        %v2534 = vld [vmem:[%s273 + $0x524] sm:$0xf]
        %v2535 = vld [vmem:[%s273 + $0x528] sm:$0xf]
        %v2536 = vld [vmem:[%s273 + $0x52c] sm:$0xf]
        %v2537 = vld [vmem:[%s273 + $0x530] sm:$0xf]
        %v2538 = vld [vmem:[%s273 + $0x534] sm:$0xf]
        %v2539 = vld [vmem:[%s273 + $0x538] sm:$0xf]
        %v2540 = vld [vmem:[%s273 + $0x53c] sm:$0xf]
        %v2541 = vld [vmem:[%s273 + $0x540] sm:$0xf]
        %v2542 = vld [vmem:[%s273 + $0x544] sm:$0xf]
        %v2543 = vld [vmem:[%s273 + $0x548] sm:$0xf]
        %v2544 = vld [vmem:[%s273 + $0x54c] sm:$0xf]
        %v2545 = vld [vmem:[%s273 + $0x550] sm:$0xf]
        %v2546 = vld [vmem:[%s273 + $0x554] sm:$0xf]
        %v2547 = vld [vmem:[%s273 + $0x558] sm:$0xf]
        %v2548 = vld [vmem:[%s273 + $0x55c] sm:$0xf]
        %v2549 = vld [vmem:[%s273 + $0x560] sm:$0xf]
        %v2550 = vld [vmem:[%s273 + $0x564] sm:$0xf]
        %v2551 = vld [vmem:[%s273 + $0x568] sm:$0xf]
        %v2552 = vld [vmem:[%s273 + $0x56c] sm:$0xf]
        %v2553 = vld [vmem:[%s273 + $0x570] sm:$0xf]
        %v2554 = vld [vmem:[%s273 + $0x574] sm:$0xf]
        %v2555 = vld [vmem:[%s273 + $0x578] sm:$0xf]
        %v2556 = vld [vmem:[%s273 + $0x57c] sm:$0xf]
        %v2557 = vld [vmem:[%s273 + $0x580] sm:$0xf]
        %v2558 = vld [vmem:[%s273 + $0x584] sm:$0xf]
        %v2559 = vld [vmem:[%s273 + $0x588] sm:$0xf]
        %v2560 = vld [vmem:[%s273 + $0x58c] sm:$0xf]
        %v2561 = vld [vmem:[%s273 + $0x590] sm:$0xf]
        %v2562 = vld [vmem:[%s273 + $0x594] sm:$0xf]
        %v2563 = vld [vmem:[%s273 + $0x598] sm:$0xf]
        %v2564 = vld [vmem:[%s273 + $0x59c] sm:$0xf]
        %v2565 = vld [vmem:[%s273 + $0x5a0] sm:$0xf]
        %v2566 = vld [vmem:[%s273 + $0x5a4] sm:$0xf]
        %v2567 = vld [vmem:[%s273 + $0x5a8] sm:$0xf]
        %v2568 = vld [vmem:[%s273 + $0x5ac] sm:$0xf]
        %v2569 = vld [vmem:[%s273 + $0x5b0] sm:$0xf]
        %v2570 = vld [vmem:[%s273 + $0x5b4] sm:$0xf]
        %v2571 = vld [vmem:[%s273 + $0x5b8] sm:$0xf]
        %v2572 = vld [vmem:[%s273 + $0x5bc] sm:$0xf]
        %v2573 = vld [vmem:[%s273 + $0x5c0] sm:$0xf]
        %v2574 = vld [vmem:[%s273 + $0x5c4] sm:$0xf]
        %v2575 = vld [vmem:[%s273 + $0x5c8] sm:$0xf]
        %v2576 = vld [vmem:[%s273 + $0x5cc] sm:$0xf]
        %v2577 = vld [vmem:[%s273 + $0x5d0] sm:$0xf]
        %v2578 = vld [vmem:[%s273 + $0x5d4] sm:$0xf]
        %v2579 = vld [vmem:[%s273 + $0x5d8] sm:$0xf]
        %v2580 = vld [vmem:[%s273 + $0x5dc] sm:$0xf]
        %v2581 = vld [vmem:[%s273 + $0x5e0] sm:$0xf]
        %v2582 = vld [vmem:[%s273 + $0x5e4] sm:$0xf]
        %v2583 = vld [vmem:[%s273 + $0x5e8] sm:$0xf]
        %v2584 = vld [vmem:[%s273 + $0x5ec] sm:$0xf]
        %v2585 = vld [vmem:[%s273 + $0x5f0] sm:$0xf]
        %v2586 = vld [vmem:[%s273 + $0x5f4] sm:$0xf]
        %v2587 = vld [vmem:[%s273 + $0x5f8] sm:$0xf]
        %v2588 = vld [vmem:[%s273 + $0x5fc] sm:$0xf]
        %v2589 = vld [vmem:[%s273 + $0x600] sm:$0xf]
        %v2590 = vld [vmem:[%s273 + $0x604] sm:$0xf]
        %v2591 = vld [vmem:[%s273 + $0x608] sm:$0xf]
        %v2592 = vld [vmem:[%s273 + $0x60c] sm:$0xf]
        %v2593 = vld [vmem:[%s273 + $0x610] sm:$0xf]
        %v2594 = vld [vmem:[%s273 + $0x614] sm:$0xf]
        %v2595 = vld [vmem:[%s273 + $0x618] sm:$0xf]
        %v2596 = vld [vmem:[%s273 + $0x61c] sm:$0xf]
        %v2597 = vld [vmem:[%s273 + $0x620] sm:$0xf]
        %v2598 = vld [vmem:[%s273 + $0x624] sm:$0xf]
        %v2599 = vld [vmem:[%s273 + $0x628] sm:$0xf]
        %v2600 = vld [vmem:[%s273 + $0x62c] sm:$0xf]
        %v2601 = vld [vmem:[%s273 + $0x630] sm:$0xf]
        %v2602 = vld [vmem:[%s273 + $0x634] sm:$0xf]
        %v2603 = vld [vmem:[%s273 + $0x638] sm:$0xf]
        %v2604 = vld [vmem:[%s273 + $0x63c] sm:$0xf]
        %v2605 = vld [vmem:[%s273 + $0x640] sm:$0xf]
        %v2606 = vld [vmem:[%s273 + $0x644] sm:$0xf]
        %v2607 = vld [vmem:[%s273 + $0x648] sm:$0xf]
        %v2608 = vld [vmem:[%s273 + $0x64c] sm:$0xf]
        %v2609 = vld [vmem:[%s273 + $0x650] sm:$0xf]
        %v2610 = vld [vmem:[%s273 + $0x654] sm:$0xf]
        %v2611 = vld [vmem:[%s273 + $0x658] sm:$0xf]
        %v2612 = vld [vmem:[%s273 + $0x65c] sm:$0xf]
        %v2613 = vld [vmem:[%s273 + $0x660] sm:$0xf]
        %v2614 = vld [vmem:[%s273 + $0x664] sm:$0xf]
        %v2615 = vld [vmem:[%s273 + $0x668] sm:$0xf]
        %v2616 = vld [vmem:[%s273 + $0x66c] sm:$0xf]
        %v2617 = vld [vmem:[%s273 + $0x670] sm:$0xf]
        %v2618 = vld [vmem:[%s273 + $0x674] sm:$0xf]
        %v2619 = vld [vmem:[%s273 + $0x678] sm:$0xf]
        %v2620 = vld [vmem:[%s273 + $0x67c] sm:$0xf]
        %v2621 = vld [vmem:[%s273 + $0x680] sm:$0xf]
        %v2622 = vld [vmem:[%s273 + $0x684] sm:$0xf]
        %v2623 = vld [vmem:[%s273 + $0x688] sm:$0xf]
        %v2624 = vld [vmem:[%s273 + $0x68c] sm:$0xf]
        %v2625 = vld [vmem:[%s273 + $0x690] sm:$0xf]
        %v2626 = vld [vmem:[%s273 + $0x694] sm:$0xf]
        %v2627 = vld [vmem:[%s273 + $0x698] sm:$0xf]
        %v2628 = vld [vmem:[%s273 + $0x69c] sm:$0xf]
        %v2629 = vld [vmem:[%s273 + $0x6a0] sm:$0xf]
        %v2630 = vld [vmem:[%s273 + $0x6a4] sm:$0xf]
        %v2631 = vld [vmem:[%s273 + $0x6a8] sm:$0xf]
        %v2632 = vld [vmem:[%s273 + $0x6ac] sm:$0xf]
        %v2633 = vld [vmem:[%s273 + $0x6b0] sm:$0xf]
        %v2634 = vld [vmem:[%s273 + $0x6b4] sm:$0xf]
        %v2635 = vld [vmem:[%s273 + $0x6b8] sm:$0xf]
        %v2636 = vld [vmem:[%s273 + $0x6bc] sm:$0xf]
        %v2637 = vld [vmem:[%s273 + $0x6c0] sm:$0xf]
        %v2638 = vld [vmem:[%s273 + $0x6c4] sm:$0xf]
        %v2639 = vld [vmem:[%s273 + $0x6c8] sm:$0xf]
        %v2640 = vld [vmem:[%s273 + $0x6cc] sm:$0xf]
        %v2641 = vld [vmem:[%s273 + $0x6d0] sm:$0xf]
        %v2642 = vld [vmem:[%s273 + $0x6d4] sm:$0xf]
        %v2643 = vld [vmem:[%s273 + $0x6d8] sm:$0xf]
        %v2644 = vld [vmem:[%s273 + $0x6dc] sm:$0xf]
        %v2645 = vld [vmem:[%s273 + $0x6e0] sm:$0xf]
        %v2646 = vld [vmem:[%s273 + $0x6e4] sm:$0xf]
        %v2647 = vld [vmem:[%s273 + $0x6e8] sm:$0xf]
        %v2648 = vld [vmem:[%s273 + $0x6ec] sm:$0xf]
        %v2649 = vld [vmem:[%s273 + $0x6f0] sm:$0xf]
        %v2650 = vld [vmem:[%s273 + $0x6f4] sm:$0xf]
        %v2651 = vld [vmem:[%s273 + $0x6f8] sm:$0xf]
        %v2652 = vld [vmem:[%s273 + $0x6fc] sm:$0xf]
        %v2653 = vld [vmem:[%s273 + $0x700] sm:$0xf]
        %v2654 = vld [vmem:[%s273 + $0x704] sm:$0xf]
        %v2655 = vld [vmem:[%s273 + $0x708] sm:$0xf]
        %v2656 = vld [vmem:[%s273 + $0x70c] sm:$0xf]
        %v2657 = vld [vmem:[%s273 + $0x710] sm:$0xf]
        %v2658 = vld [vmem:[%s273 + $0x714] sm:$0xf]
        %v2659 = vld [vmem:[%s273 + $0x718] sm:$0xf]
        %v2660 = vld [vmem:[%s273 + $0x71c] sm:$0xf]
        %v2661 = vld [vmem:[%s273 + $0x720] sm:$0xf]
        %v2662 = vld [vmem:[%s273 + $0x724] sm:$0xf]
        %v2663 = vld [vmem:[%s273 + $0x728] sm:$0xf]
        %v2664 = vld [vmem:[%s273 + $0x72c] sm:$0xf]
        %v2665 = vld [vmem:[%s273 + $0x730] sm:$0xf]
        %v2666 = vld [vmem:[%s273 + $0x734] sm:$0xf]
        %v2667 = vld [vmem:[%s273 + $0x738] sm:$0xf]
        %v2668 = vld [vmem:[%s273 + $0x73c] sm:$0xf]
        %v2669 = vld [vmem:[%s273 + $0x740] sm:$0xf]
        %v2670 = vld [vmem:[%s273 + $0x744] sm:$0xf]
        %v2671 = vld [vmem:[%s273 + $0x748] sm:$0xf]
        %v2672 = vld [vmem:[%s273 + $0x74c] sm:$0xf]
        %v2673 = vld [vmem:[%s273 + $0x750] sm:$0xf]
        %v2674 = vld [vmem:[%s273 + $0x754] sm:$0xf]
        %v2675 = vld [vmem:[%s273 + $0x758] sm:$0xf]
        %v2676 = vld [vmem:[%s273 + $0x75c] sm:$0xf]
        %v2677 = vld [vmem:[%s273 + $0x760] sm:$0xf]
        %v2678 = vld [vmem:[%s273 + $0x764] sm:$0xf]
        %v2679 = vld [vmem:[%s273 + $0x768] sm:$0xf]
        %v2680 = vld [vmem:[%s273 + $0x76c] sm:$0xf]
        %v2681 = vld [vmem:[%s273 + $0x770] sm:$0xf]
        %v2682 = vld [vmem:[%s273 + $0x774] sm:$0xf]
        %v2683 = vld [vmem:[%s273 + $0x778] sm:$0xf]
        %v2684 = vld [vmem:[%s273 + $0x77c] sm:$0xf]
        %v2685 = vld [vmem:[%s273 + $0x780] sm:$0xf]
        %v2686 = vld [vmem:[%s273 + $0x784] sm:$0xf]
        %v2687 = vld [vmem:[%s273 + $0x788] sm:$0xf]
        %v2688 = vld [vmem:[%s273 + $0x78c] sm:$0xf]
        %v2689 = vld [vmem:[%s273 + $0x790] sm:$0xf]
        %v2690 = vld [vmem:[%s273 + $0x794] sm:$0xf]
        %v2691 = vld [vmem:[%s273 + $0x798] sm:$0xf]
        %v2692 = vld [vmem:[%s273 + $0x79c] sm:$0xf]
        %v2693 = vld [vmem:[%s273 + $0x7a0] sm:$0xf]
        %v2694 = vld [vmem:[%s273 + $0x7a4] sm:$0xf]
        %v2695 = vld [vmem:[%s273 + $0x7a8] sm:$0xf]
        %v2696 = vld [vmem:[%s273 + $0x7ac] sm:$0xf]
        %v2697 = vld [vmem:[%s273 + $0x7b0] sm:$0xf]
        %v2698 = vld [vmem:[%s273 + $0x7b4] sm:$0xf]
        %v2699 = vld [vmem:[%s273 + $0x7b8] sm:$0xf]
        %v2700 = vld [vmem:[%s273 + $0x7bc] sm:$0xf]
        %v2701 = vld [vmem:[%s273 + $0x7c0] sm:$0xf]
        %v2702 = vld [vmem:[%s273 + $0x7c4] sm:$0xf]
        %v2703 = vld [vmem:[%s273 + $0x7c8] sm:$0xf]
        %v2704 = vld [vmem:[%s273 + $0x7cc] sm:$0xf]
        %v2705 = vld [vmem:[%s273 + $0x7d0] sm:$0xf]
        %v2706 = vld [vmem:[%s273 + $0x7d4] sm:$0xf]
        %v2707 = vld [vmem:[%s273 + $0x7d8] sm:$0xf]
        %v2708 = vld [vmem:[%s273 + $0x7dc] sm:$0xf]
        %v2709 = vld [vmem:[%s273 + $0x7e0] sm:$0xf]
        %v2710 = vld [vmem:[%s273 + $0x7e4] sm:$0xf]
        %v2711 = vld [vmem:[%s273 + $0x7e8] sm:$0xf]
        %v2712 = vld [vmem:[%s273 + $0x7ec] sm:$0xf]
        %v2713 = vld [vmem:[%s273 + $0x7f0] sm:$0xf]
        %v2714 = vld [vmem:[%s273 + $0x7f4] sm:$0xf]
        %v2715 = vld [vmem:[%s273 + $0x7f8] sm:$0xf]
        %v2716 = vld [vmem:[%s273 + $0x7fc] sm:$0xf]
        %v2717 = vld [vmem:[%s273 + $0x800] sm:$0xf]
        %v2718 = vld [vmem:[%s273 + $0x804] sm:$0xf]
        %v2719 = vld [vmem:[%s273 + $0x808] sm:$0xf]
        %v2720 = vld [vmem:[%s273 + $0x80c] sm:$0xf]
        %v2721 = vld [vmem:[%s273 + $0x810] sm:$0xf]
        %v2722 = vld [vmem:[%s273 + $0x814] sm:$0xf]
        %v2723 = vld [vmem:[%s273 + $0x818] sm:$0xf]
        %v2724 = vld [vmem:[%s273 + $0x81c] sm:$0xf]
        %v2725 = vld [vmem:[%s273 + $0x820] sm:$0xf]
        %v2726 = vld [vmem:[%s273 + $0x824] sm:$0xf]
        %v2727 = vld [vmem:[%s273 + $0x828] sm:$0xf]
        %v2728 = vld [vmem:[%s273 + $0x82c] sm:$0xf]
        %v2729 = vld [vmem:[%s273 + $0x830] sm:$0xf]
        %v2730 = vld [vmem:[%s273 + $0x834] sm:$0xf]
        %v2731 = vld [vmem:[%s273 + $0x838] sm:$0xf]
        %v2732 = vld [vmem:[%s273 + $0x83c] sm:$0xf]
        %v2733 = vld [vmem:[%s273 + $0x840] sm:$0xf]
        %v2734 = vld [vmem:[%s273 + $0x844] sm:$0xf]
        %v2735 = vld [vmem:[%s273 + $0x848] sm:$0xf]
        %v2736 = vld [vmem:[%s273 + $0x84c] sm:$0xf]
        %v2737 = vld [vmem:[%s273 + $0x850] sm:$0xf]
        %v2738 = vld [vmem:[%s273 + $0x854] sm:$0xf]
        %v2739 = vld [vmem:[%s273 + $0x858] sm:$0xf]
        %v2740 = vld [vmem:[%s273 + $0x85c] sm:$0xf]
        %v2741 = vld [vmem:[%s273 + $0x860] sm:$0xf]
        %v2742 = vld [vmem:[%s273 + $0x864] sm:$0xf]
        %v2743 = vld [vmem:[%s273 + $0x868] sm:$0xf]
        %v2744 = vld [vmem:[%s273 + $0x86c] sm:$0xf]
        %v2745 = vld [vmem:[%s273 + $0x870] sm:$0xf]
        %v2746 = vld [vmem:[%s273 + $0x874] sm:$0xf]
        %v2747 = vld [vmem:[%s273 + $0x878] sm:$0xf]
        %v2748 = vld [vmem:[%s273 + $0x87c] sm:$0xf]
        %v2749 = vld [vmem:[%s273 + $0x880] sm:$0xf]
        %v2750 = vld [vmem:[%s273 + $0x884] sm:$0xf]
        %v2751 = vld [vmem:[%s273 + $0x888] sm:$0xf]
        %v2752 = vld [vmem:[%s273 + $0x88c] sm:$0xf]
        %v2753 = vld [vmem:[%s273 + $0x890] sm:$0xf]
        %v2754 = vld [vmem:[%s273 + $0x894] sm:$0xf]
        %v2755 = vld [vmem:[%s273 + $0x898] sm:$0xf]
        %v2756 = vld [vmem:[%s273 + $0x89c] sm:$0xf]
        %v2757 = vld [vmem:[%s273 + $0x8a0] sm:$0xf]
        %v2758 = vld [vmem:[%s273 + $0x8a4] sm:$0xf]
        %v2759 = vld [vmem:[%s273 + $0x8a8] sm:$0xf]
        %v2760 = vld [vmem:[%s273 + $0x8ac] sm:$0xf]
        %v2761 = vld [vmem:[%s273 + $0x8b0] sm:$0xf]
        %v2762 = vld [vmem:[%s273 + $0x8b4] sm:$0xf]
        %v2763 = vld [vmem:[%s273 + $0x8b8] sm:$0xf]
        %v2764 = vld [vmem:[%s273 + $0x8bc] sm:$0xf]
        %v2765 = vld [vmem:[%s273 + $0x8c0] sm:$0xf]
        %v2766 = vld [vmem:[%s273 + $0x8c4] sm:$0xf]
        %v2767 = vld [vmem:[%s273 + $0x8c8] sm:$0xf]
        %v2768 = vld [vmem:[%s273 + $0x8cc] sm:$0xf]
        %v2769 = vld [vmem:[%s273 + $0x8d0] sm:$0xf]
        %v2770 = vld [vmem:[%s273 + $0x8d4] sm:$0xf]
        %v2771 = vld [vmem:[%s273 + $0x8d8] sm:$0xf]
        %v2772 = vld [vmem:[%s273 + $0x8dc] sm:$0xf]
        %v2773 = vld [vmem:[%s273 + $0x8e0] sm:$0xf]
        %v2774 = vld [vmem:[%s273 + $0x8e4] sm:$0xf]
        %v2775 = vld [vmem:[%s273 + $0x8e8] sm:$0xf]
        %v2776 = vld [vmem:[%s273 + $0x8ec] sm:$0xf]
        %v2777 = vld [vmem:[%s273 + $0x8f0] sm:$0xf]
        %v2778 = vld [vmem:[%s273 + $0x8f4] sm:$0xf]
        %v2779 = vld [vmem:[%s273 + $0x8f8] sm:$0xf]
        %v2780 = vld [vmem:[%s273 + $0x8fc] sm:$0xf]
        %v2781 = vld [vmem:[%s273 + $0x900] sm:$0xf]
        %v2782 = vld [vmem:[%s273 + $0x904] sm:$0xf]
        %v2783 = vld [vmem:[%s273 + $0x908] sm:$0xf]
        %v2784 = vld [vmem:[%s273 + $0x90c] sm:$0xf]
        %v2785 = vld [vmem:[%s273 + $0x910] sm:$0xf]
        %v2786 = vld [vmem:[%s273 + $0x914] sm:$0xf]
        %v2787 = vld [vmem:[%s273 + $0x918] sm:$0xf]
        %v2788 = vld [vmem:[%s273 + $0x91c] sm:$0xf]
        %v2789 = vld [vmem:[%s273 + $0x920] sm:$0xf]
        %v2790 = vld [vmem:[%s273 + $0x924] sm:$0xf]
        %v2791 = vld [vmem:[%s273 + $0x928] sm:$0xf]
        %v2792 = vld [vmem:[%s273 + $0x92c] sm:$0xf]
        %v2793 = vld [vmem:[%s273 + $0x930] sm:$0xf]
        %v2794 = vld [vmem:[%s273 + $0x934] sm:$0xf]
        %v2795 = vld [vmem:[%s273 + $0x938] sm:$0xf]
        %v2796 = vld [vmem:[%s273 + $0x93c] sm:$0xf]
        %v2797 = vld [vmem:[%s273 + $0x940] sm:$0xf]
        %v2798 = vld [vmem:[%s273 + $0x944] sm:$0xf]
        %v2799 = vld [vmem:[%s273 + $0x948] sm:$0xf]
        %v2800 = vld [vmem:[%s273 + $0x94c] sm:$0xf]
        %v2801 = vld [vmem:[%s273 + $0x950] sm:$0xf]
        %v2802 = vld [vmem:[%s273 + $0x954] sm:$0xf]
        %v2803 = vld [vmem:[%s273 + $0x958] sm:$0xf]
        %v2804 = vld [vmem:[%s273 + $0x95c] sm:$0xf]
        %v2805 = vld [vmem:[%s273 + $0x960] sm:$0xf]
        %v2806 = vld [vmem:[%s273 + $0x964] sm:$0xf]
        %v2807 = vld [vmem:[%s273 + $0x968] sm:$0xf]
        %v2808 = vld [vmem:[%s273 + $0x96c] sm:$0xf]
        %v2809 = vld [vmem:[%s273 + $0x970] sm:$0xf]
        %v2810 = vld [vmem:[%s273 + $0x974] sm:$0xf]
        %v2811 = vld [vmem:[%s273 + $0x978] sm:$0xf]
        %v2812 = vld [vmem:[%s273 + $0x97c] sm:$0xf]
        %v2813 = vld [vmem:[%s273 + $0x980] sm:$0xf]
        %v2814 = vld [vmem:[%s273 + $0x984] sm:$0xf]
        %v2815 = vld [vmem:[%s273 + $0x988] sm:$0xf]
        %v2816 = vld [vmem:[%s273 + $0x98c] sm:$0xf]
        %v2817 = vld [vmem:[%s273 + $0x990] sm:$0xf]
        %v2818 = vld [vmem:[%s273 + $0x994] sm:$0xf]
        %v2819 = vld [vmem:[%s273 + $0x998] sm:$0xf]
        %v2820 = vld [vmem:[%s273 + $0x99c] sm:$0xf]
        %v2821 = vld [vmem:[%s273 + $0x9a0] sm:$0xf]
        %v2822 = vld [vmem:[%s273 + $0x9a4] sm:$0xf]
        %v2823 = vld [vmem:[%s273 + $0x9a8] sm:$0xf]
        %v2824 = vld [vmem:[%s273 + $0x9ac] sm:$0xf]
        %v2825 = vld [vmem:[%s273 + $0x9b0] sm:$0xf]
        %v2826 = vld [vmem:[%s273 + $0x9b4] sm:$0xf]
        %v2827 = vld [vmem:[%s273 + $0x9b8] sm:$0xf]
        %v2828 = vld [vmem:[%s273 + $0x9bc] sm:$0xf]
        %v2829 = vld [vmem:[%s273 + $0x9c0] sm:$0xf]
        %v2830 = vld [vmem:[%s273 + $0x9c4] sm:$0xf]
        %v2831 = vld [vmem:[%s273 + $0x9c8] sm:$0xf]
        %v2832 = vld [vmem:[%s273 + $0x9cc] sm:$0xf]
        %v2833 = vld [vmem:[%s273 + $0x9d0] sm:$0xf]
        %v2834 = vld [vmem:[%s273 + $0x9d4] sm:$0xf]
        %v2835 = vld [vmem:[%s273 + $0x9d8] sm:$0xf]
        %v2836 = vld [vmem:[%s273 + $0x9dc] sm:$0xf]
        %v2837 = vld [vmem:[%s273 + $0x9e0] sm:$0xf]
        %v2838 = vld [vmem:[%s273 + $0x9e4] sm:$0xf]
        %v2839 = vld [vmem:[%s273 + $0x9e8] sm:$0xf]
        %v2840 = vld [vmem:[%s273 + $0x9ec] sm:$0xf]
        %v2841 = vld [vmem:[%s273 + $0x9f0] sm:$0xf]
        %v2842 = vld [vmem:[%s273 + $0x9f4] sm:$0xf]
        %v2843 = vld [vmem:[%s273 + $0x9f8] sm:$0xf]
        %v2844 = vld [vmem:[%s273 + $0x9fc] sm:$0xf]
        %v2845 = vld [vmem:[%s273 + $0xa00] sm:$0xf]
        %v2846 = vld [vmem:[%s273 + $0xa04] sm:$0xf]
        %v2847 = vld [vmem:[%s273 + $0xa08] sm:$0xf]
        %v2848 = vld [vmem:[%s273 + $0xa0c] sm:$0xf]
        %v2849 = vld [vmem:[%s273 + $0xa10] sm:$0xf]
        %v2850 = vld [vmem:[%s273 + $0xa14] sm:$0xf]
        %v2851 = vld [vmem:[%s273 + $0xa18] sm:$0xf]
        %v2852 = vld [vmem:[%s273 + $0xa1c] sm:$0xf]
        %v2853 = vld [vmem:[%s273 + $0xa20] sm:$0xf]
        %v2854 = vld [vmem:[%s273 + $0xa24] sm:$0xf]
        %v2855 = vld [vmem:[%s273 + $0xa28] sm:$0xf]
        %v2856 = vld [vmem:[%s273 + $0xa2c] sm:$0xf]
        %v2857 = vld [vmem:[%s273 + $0xa30] sm:$0xf]
        %v2858 = vld [vmem:[%s273 + $0xa34] sm:$0xf]
        %v2859 = vld [vmem:[%s273 + $0xa38] sm:$0xf]
        %v2860 = vld [vmem:[%s273 + $0xa3c] sm:$0xf]
        %v2861 = vld [vmem:[%s273 + $0xa40] sm:$0xf]
        %v2862 = vld [vmem:[%s273 + $0xa44] sm:$0xf]
        %v2863 = vld [vmem:[%s273 + $0xa48] sm:$0xf]
        %v2864 = vld [vmem:[%s273 + $0xa4c] sm:$0xf]
        %v2865 = vld [vmem:[%s273 + $0xa50] sm:$0xf]
        %v2866 = vld [vmem:[%s273 + $0xa54] sm:$0xf]
        %v2867 = vld [vmem:[%s273 + $0xa58] sm:$0xf]
        %v2868 = vld [vmem:[%s273 + $0xa5c] sm:$0xf]
        %v2869 = vld [vmem:[%s273 + $0xa60] sm:$0xf]
        %v2870 = vld [vmem:[%s273 + $0xa64] sm:$0xf]
        %v2871 = vld [vmem:[%s273 + $0xa68] sm:$0xf]
        %v2872 = vld [vmem:[%s273 + $0xa6c] sm:$0xf]
        %v2873 = vld [vmem:[%s273 + $0xa70] sm:$0xf]
        %v2874 = vld [vmem:[%s273 + $0xa74] sm:$0xf]
        %v2875 = vld [vmem:[%s273 + $0xa78] sm:$0xf]
        %v2876 = vld [vmem:[%s273 + $0xa7c] sm:$0xf]
        %v2877 = vld [vmem:[%s273 + $0xa80] sm:$0xf]
        %v2878 = vld [vmem:[%s273 + $0xa84] sm:$0xf]
        %v2879 = vld [vmem:[%s273 + $0xa88] sm:$0xf]
        %v2880 = vld [vmem:[%s273 + $0xa8c] sm:$0xf]
        %v2881 = vld [vmem:[%s273 + $0xa90] sm:$0xf]
        %v2882 = vld [vmem:[%s273 + $0xa94] sm:$0xf]
        %v2883 = vld [vmem:[%s273 + $0xa98] sm:$0xf]
        %v2884 = vld [vmem:[%s273 + $0xa9c] sm:$0xf]
        %v2885 = vld [vmem:[%s273 + $0xaa0] sm:$0xf]
        %v2886 = vld [vmem:[%s273 + $0xaa4] sm:$0xf]
        %v2887 = vld [vmem:[%s273 + $0xaa8] sm:$0xf]
        %v2888 = vld [vmem:[%s273 + $0xaac] sm:$0xf]
        %v2889 = vld [vmem:[%s273 + $0xab0] sm:$0xf]
        %v2890 = vld [vmem:[%s273 + $0xab4] sm:$0xf]
        %v2891 = vld [vmem:[%s273 + $0xab8] sm:$0xf]
        %v2892 = vld [vmem:[%s273 + $0xabc] sm:$0xf]
        %v2893 = vld [vmem:[%s273 + $0xac0] sm:$0xf]
        %v2894 = vld [vmem:[%s273 + $0xac4] sm:$0xf]
        %v2895 = vld [vmem:[%s273 + $0xac8] sm:$0xf]
        %v2896 = vld [vmem:[%s273 + $0xacc] sm:$0xf]
        %v2897 = vld [vmem:[%s273 + $0xad0] sm:$0xf]
        %v2898 = vld [vmem:[%s273 + $0xad4] sm:$0xf]
        %v2899 = vld [vmem:[%s273 + $0xad8] sm:$0xf]
        %v2900 = vld [vmem:[%s273 + $0xadc] sm:$0xf]
        %v2901 = vld [vmem:[%s273 + $0xae0] sm:$0xf]
        %v2902 = vld [vmem:[%s273 + $0xae4] sm:$0xf]
        %v2903 = vld [vmem:[%s273 + $0xae8] sm:$0xf]
        %v2904 = vld [vmem:[%s273 + $0xaec] sm:$0xf]
        %v2905 = vld [vmem:[%s273 + $0xaf0] sm:$0xf]
        %v2906 = vld [vmem:[%s273 + $0xaf4] sm:$0xf]
        %v2907 = vld [vmem:[%s273 + $0xaf8] sm:$0xf]
        %v2908 = vld [vmem:[%s273 + $0xafc] sm:$0xf]
        %v2909 = vld [vmem:[%s273 + $0xb00] sm:$0xf]
        %v2910 = vld [vmem:[%s273 + $0xb04] sm:$0xf]
        %v2911 = vld [vmem:[%s273 + $0xb08] sm:$0xf]
        %v2912 = vld [vmem:[%s273 + $0xb0c] sm:$0xf]
        %v2913 = vld [vmem:[%s273 + $0xb10] sm:$0xf]
        %v2914 = vld [vmem:[%s273 + $0xb14] sm:$0xf]
        %v2915 = vld [vmem:[%s273 + $0xb18] sm:$0xf]
        %v2916 = vld [vmem:[%s273 + $0xb1c] sm:$0xf]
        %v2917 = vld [vmem:[%s273 + $0xb20] sm:$0xf]
        %v2918 = vld [vmem:[%s273 + $0xb24] sm:$0xf]
        %v2919 = vld [vmem:[%s273 + $0xb28] sm:$0xf]
        %v2920 = vld [vmem:[%s273 + $0xb2c] sm:$0xf]
        %v2921 = vld [vmem:[%s273 + $0xb30] sm:$0xf]
        %v2922 = vld [vmem:[%s273 + $0xb34] sm:$0xf]
        %v2923 = vld [vmem:[%s273 + $0xb38] sm:$0xf]
        %v2924 = vld [vmem:[%s273 + $0xb3c] sm:$0xf]
        %v2925 = vld [vmem:[%s273 + $0xb40] sm:$0xf]
        %v2926 = vld [vmem:[%s273 + $0xb44] sm:$0xf]
        %v2927 = vld [vmem:[%s273 + $0xb48] sm:$0xf]
        %v2928 = vld [vmem:[%s273 + $0xb4c] sm:$0xf]
        %v2929 = vld [vmem:[%s273 + $0xb50] sm:$0xf]
        %v2930 = vld [vmem:[%s273 + $0xb54] sm:$0xf]
        %v2931 = vld [vmem:[%s273 + $0xb58] sm:$0xf]
        %v2932 = vld [vmem:[%s273 + $0xb5c] sm:$0xf]
        %v2933 = vld [vmem:[%s273 + $0xb60] sm:$0xf]
        %v2934 = vld [vmem:[%s273 + $0xb64] sm:$0xf]
        %v2935 = vld [vmem:[%s273 + $0xb68] sm:$0xf]
        %v2936 = vld [vmem:[%s273 + $0xb6c] sm:$0xf]
        %v2937 = vld [vmem:[%s273 + $0xb70] sm:$0xf]
        %v2938 = vld [vmem:[%s273 + $0xb74] sm:$0xf]
        %v2939 = vld [vmem:[%s273 + $0xb78] sm:$0xf]
        %v2940 = vld [vmem:[%s273 + $0xb7c] sm:$0xf]
        %v2941 = vld [vmem:[%s273 + $0xb80] sm:$0xf]
        %v2942 = vld [vmem:[%s273 + $0xb84] sm:$0xf]
        %v2943 = vld [vmem:[%s273 + $0xb88] sm:$0xf]
        %v2944 = vld [vmem:[%s273 + $0xb8c] sm:$0xf]
        %v2945 = vld [vmem:[%s273 + $0xb90] sm:$0xf]
        %v2946 = vld [vmem:[%s273 + $0xb94] sm:$0xf]
        %v2947 = vld [vmem:[%s273 + $0xb98] sm:$0xf]
        %v2948 = vld [vmem:[%s273 + $0xb9c] sm:$0xf]
        %v2949 = vld [vmem:[%s273 + $0xba0] sm:$0xf]
        %v2950 = vld [vmem:[%s273 + $0xba4] sm:$0xf]
        %v2951 = vld [vmem:[%s273 + $0xba8] sm:$0xf]
        %v2952 = vld [vmem:[%s273 + $0xbac] sm:$0xf]
        %v2953 = vld [vmem:[%s273 + $0xbb0] sm:$0xf]
        %v2954 = vld [vmem:[%s273 + $0xbb4] sm:$0xf]
        %v2955 = vld [vmem:[%s273 + $0xbb8] sm:$0xf]
        %v2956 = vld [vmem:[%s273 + $0xbbc] sm:$0xf]
        %v2957 = vld [vmem:[%s273 + $0xbc0] sm:$0xf]
        %v2958 = vld [vmem:[%s273 + $0xbc4] sm:$0xf]
        %v2959 = vld [vmem:[%s273 + $0xbc8] sm:$0xf]
        %v2960 = vld [vmem:[%s273 + $0xbcc] sm:$0xf]
        %v2961 = vld [vmem:[%s273 + $0xbd0] sm:$0xf]
        %v2962 = vld [vmem:[%s273 + $0xbd4] sm:$0xf]
        %v2963 = vld [vmem:[%s273 + $0xbd8] sm:$0xf]
        %v2964 = vld [vmem:[%s273 + $0xbdc] sm:$0xf]
        %v2965 = vld [vmem:[%s273 + $0xbe0] sm:$0xf]
        %v2966 = vld [vmem:[%s273 + $0xbe4] sm:$0xf]
        %v2967 = vld [vmem:[%s273 + $0xbe8] sm:$0xf]
        %v2968 = vld [vmem:[%s273 + $0xbec] sm:$0xf]
        %v2969 = vld [vmem:[%s273 + $0xbf0] sm:$0xf]
        %v2970 = vld [vmem:[%s273 + $0xbf4] sm:$0xf]
        %v2971 = vld [vmem:[%s273 + $0xbf8] sm:$0xf]
        %v2972 = vld [vmem:[%s273 + $0xbfc] sm:$0xf]
        %v2973 = vld [vmem:[%s273 + $0xc00] sm:$0xf]
        %v2974 = vld [vmem:[%s273 + $0xc04] sm:$0xf]
        %v2975 = vld [vmem:[%s273 + $0xc08] sm:$0xf]
        %v2976 = vld [vmem:[%s273 + $0xc0c] sm:$0xf]
        %v2977 = vld [vmem:[%s273 + $0xc10] sm:$0xf]
        %v2978 = vld [vmem:[%s273 + $0xc14] sm:$0xf]
        %v2979 = vld [vmem:[%s273 + $0xc18] sm:$0xf]
        %v2980 = vld [vmem:[%s273 + $0xc1c] sm:$0xf]
        %v2981 = vld [vmem:[%s273 + $0xc20] sm:$0xf]
        %v2982 = vld [vmem:[%s273 + $0xc24] sm:$0xf]
        %v2983 = vld [vmem:[%s273 + $0xc28] sm:$0xf]
        %v2984 = vld [vmem:[%s273 + $0xc2c] sm:$0xf]
        %v2985 = vld [vmem:[%s273 + $0xc30] sm:$0xf]
        %v2986 = vld [vmem:[%s273 + $0xc34] sm:$0xf]
        %v2987 = vld [vmem:[%s273 + $0xc38] sm:$0xf]
        %v2988 = vld [vmem:[%s273 + $0xc3c] sm:$0xf]
        %v3039 = vunpack.c.l.b16 %v2153
        %v3040 = vunpack.c.h.b16 %v2153
        %v3041 = vunpack.c.l.b16 %v2154
        %v3042 = vunpack.c.h.b16 %v2154
        %v3043 = vunpack.c.l.b16 %v2155
        %v3044 = vunpack.c.h.b16 %v2155
        %v3045 = vunpack.c.l.b16 %v2156
        %v3046 = vunpack.c.h.b16 %v2156
        %v3047 = vunpack.c.l.b16 %v2157
        %v3048 = vunpack.c.h.b16 %v2157
        %v3049 = vunpack.c.l.b16 %v2158
        %v3050 = vunpack.c.h.b16 %v2158
        %v3051 = vunpack.c.l.b16 %v2159
        %v3052 = vunpack.c.h.b16 %v2159
        %v3053 = vunpack.c.l.b16 %v2160
        %v3054 = vunpack.c.h.b16 %v2160
        %v3055 = vunpack.c.l.b16 %v2161
        %v3056 = vunpack.c.h.b16 %v2161
        %v3057 = vunpack.c.l.b16 %v2162
        %v3058 = vunpack.c.h.b16 %v2162
        %v3059 = vunpack.c.l.b16 %v2163
        %v3060 = vunpack.c.h.b16 %v2163
        %v3061 = vunpack.c.l.b16 %v2164
        %v3062 = vunpack.c.h.b16 %v2164
        %v3063 = vunpack.c.l.b16 %v2165
        %v3064 = vunpack.c.h.b16 %v2165
        %v3065 = vunpack.c.l.b16 %v2166
        %v3066 = vunpack.c.h.b16 %v2166
        %v3067 = vunpack.c.l.b16 %v2167
        %v3068 = vunpack.c.h.b16 %v2167
        %v3069 = vunpack.c.l.b16 %v2168
        %v3070 = vunpack.c.h.b16 %v2168
        %v3071 = vunpack.c.l.b16 %v2169
        %v3072 = vunpack.c.h.b16 %v2169
        %v3073 = vunpack.c.l.b16 %v2170
        %v3074 = vunpack.c.h.b16 %v2170
        %v3075 = vunpack.c.l.b16 %v2171
        %v3076 = vunpack.c.h.b16 %v2171
        %v3077 = vunpack.c.l.b16 %v2172
        %v3078 = vunpack.c.h.b16 %v2172
        %v3079 = vunpack.c.l.b16 %v2173
        %v3080 = vunpack.c.h.b16 %v2173
        %v3081 = vunpack.c.l.b16 %v2174
        %v3082 = vunpack.c.h.b16 %v2174
        %v3083 = vunpack.c.l.b16 %v2175
        %v3084 = vunpack.c.h.b16 %v2175
        %v3085 = vunpack.c.l.b16 %v2176
        %v3086 = vunpack.c.h.b16 %v2176
        %v3087 = vunpack.c.l.b16 %v2177
        %v3088 = vunpack.c.l.b16 %v2178
        %v3089 = vunpack.c.h.b16 %v2178
        %v3090 = vunpack.c.l.b16 %v2179
        %v3091 = vunpack.c.h.b16 %v2179
        %v3092 = vunpack.c.l.b16 %v2180
        %v3093 = vunpack.c.h.b16 %v2180
        %v3094 = vunpack.c.l.b16 %v2181
        %v3095 = vunpack.c.h.b16 %v2181
        %v3096 = vunpack.c.l.b16 %v2182
        %v3097 = vunpack.c.h.b16 %v2182
        %v3098 = vunpack.c.l.b16 %v2183
        %v3099 = vunpack.c.h.b16 %v2183
        %v3100 = vunpack.c.l.b16 %v2184
        %v3101 = vunpack.c.h.b16 %v2184
        %v3102 = vunpack.c.l.b16 %v2185
        %v3103 = vunpack.c.h.b16 %v2185
        %v3104 = vunpack.c.l.b16 %v2186
        %v3105 = vunpack.c.h.b16 %v2186
        %v3106 = vunpack.c.l.b16 %v2187
        %v3107 = vunpack.c.h.b16 %v2187
        %v3108 = vunpack.c.l.b16 %v2188
        %v3109 = vunpack.c.h.b16 %v2188
        %v3110 = vunpack.c.l.b16 %v2189
        %v3111 = vunpack.c.h.b16 %v2189
        %v3112 = vunpack.c.l.b16 %v2190
        %v3113 = vunpack.c.h.b16 %v2190
        %v3114 = vunpack.c.l.b16 %v2191
        %v3115 = vunpack.c.h.b16 %v2191
        %v3116 = vunpack.c.l.b16 %v2192
        %v3117 = vunpack.c.h.b16 %v2192
        %v3118 = vunpack.c.l.b16 %v2193
        %v3119 = vunpack.c.h.b16 %v2193
        %v3120 = vunpack.c.l.b16 %v2194
        %v3121 = vunpack.c.h.b16 %v2194
        %v3122 = vunpack.c.l.b16 %v2195
        %v3123 = vunpack.c.h.b16 %v2195
        %v3124 = vunpack.c.l.b16 %v2196
        %v3125 = vunpack.c.h.b16 %v2196
        %v3126 = vunpack.c.l.b16 %v2197
        %v3127 = vunpack.c.h.b16 %v2197
        %v3128 = vunpack.c.l.b16 %v2198
        %v3129 = vunpack.c.h.b16 %v2198
        %v3130 = vunpack.c.l.b16 %v2199
        %v3131 = vunpack.c.h.b16 %v2199
        %v3132 = vunpack.c.l.b16 %v2200
        %v3133 = vunpack.c.h.b16 %v2200
        %v3134 = vunpack.c.l.b16 %v2201
        %v3135 = vunpack.c.h.b16 %v2201
        %v3136 = vunpack.c.l.b16 %v2202
        %v3137 = vpack.c.b16 %v3088, %v3039
        %v3138 = vpack.c.b16 %v3089, %v3040
        %v3139 = vpack.c.b16 %v3090, %v3041
        %v3140 = vpack.c.b16 %v3091, %v3042
        %v3141 = vpack.c.b16 %v3092, %v3043
        %v3142 = vpack.c.b16 %v3093, %v3044
        %v3143 = vpack.c.b16 %v3094, %v3045
        %v3144 = vpack.c.b16 %v3095, %v3046
        %v3145 = vpack.c.b16 %v3096, %v3047
        %v3146 = vpack.c.b16 %v3097, %v3048
        %v3147 = vpack.c.b16 %v3098, %v3049
        %v3148 = vpack.c.b16 %v3099, %v3050
        %v3149 = vpack.c.b16 %v3100, %v3051
        %v3150 = vpack.c.b16 %v3101, %v3052
        %v3151 = vpack.c.b16 %v3102, %v3053
        %v3152 = vpack.c.b16 %v3103, %v3054
        %v3153 = vpack.c.b16 %v3104, %v3055
        %v3154 = vpack.c.b16 %v3105, %v3056
        %v3155 = vpack.c.b16 %v3106, %v3057
        %v3156 = vpack.c.b16 %v3107, %v3058
        %v3157 = vpack.c.b16 %v3108, %v3059
        %v3158 = vpack.c.b16 %v3109, %v3060
        %v3159 = vpack.c.b16 %v3110, %v3061
        %v3160 = vpack.c.b16 %v3111, %v3062
        %v3161 = vpack.c.b16 %v3112, %v3063
        %v3162 = vpack.c.b16 %v3113, %v3064
        %v3163 = vpack.c.b16 %v3114, %v3065
        %v3164 = vpack.c.b16 %v3115, %v3066
        %v3165 = vpack.c.b16 %v3116, %v3067
        %v3166 = vpack.c.b16 %v3117, %v3068
        %v3167 = vpack.c.b16 %v3118, %v3069
        %v3168 = vpack.c.b16 %v3119, %v3070
        %v3169 = vpack.c.b16 %v3120, %v3071
        %v3170 = vpack.c.b16 %v3121, %v3072
        %v3171 = vpack.c.b16 %v3122, %v3073
        %v3172 = vpack.c.b16 %v3123, %v3074
        %v3173 = vpack.c.b16 %v3124, %v3075
        %v3174 = vpack.c.b16 %v3125, %v3076
        %v3175 = vpack.c.b16 %v3126, %v3077
        %v3176 = vpack.c.b16 %v3127, %v3078
        %v3177 = vpack.c.b16 %v3128, %v3079
        %v3178 = vpack.c.b16 %v3129, %v3080
        %v3179 = vpack.c.b16 %v3130, %v3081
        %v3180 = vpack.c.b16 %v3131, %v3082
        %v3181 = vpack.c.b16 %v3132, %v3083
        %v3182 = vpack.c.b16 %v3133, %v3084
        %v3183 = vpack.c.b16 %v3134, %v3085
        %v3184 = vpack.c.b16 %v3135, %v3086
        %v3185 = vpack.c.b16 %v3136, %v3087
        %v4019 = vunpack.c.l.b16 %v2205
        %v4020 = vunpack.c.l.b16 %v2206
        %v4021 = vunpack.c.l.b16 %v2207
        %v4022 = vunpack.c.l.b16 %v2208
        %v4023 = vunpack.c.l.b16 %v2209
        %v4024 = vunpack.c.l.b16 %v2210
        %v4025 = vunpack.c.l.b16 %v2211
        %v4026 = vunpack.c.l.b16 %v2212
        %v4027 = vunpack.c.l.b16 %v2213
        %v4028 = vunpack.c.l.b16 %v2214
        %v4029 = vunpack.c.l.b16 %v2215
        %v4030 = vunpack.c.l.b16 %v2216
        %v4031 = vunpack.c.l.b16 %v2217
        %v4032 = vunpack.c.l.b16 %v2218
        %v4033 = vunpack.c.l.b16 %v2219
        %v4034 = vunpack.c.l.b16 %v2220
        %v4035 = vunpack.c.l.b16 %v2221
        %v4036 = vunpack.c.l.b16 %v2222
        %v4037 = vunpack.c.l.b16 %v2223
        %v4038 = vunpack.c.l.b16 %v2224
        %v4039 = vunpack.c.l.b16 %v2225
        %v4040 = vunpack.c.l.b16 %v2226
        %v4041 = vunpack.c.l.b16 %v2227
        %v4042 = vunpack.c.l.b16 %v2228
        %v4043 = vunpack.c.l.b16 %v2229
        %v4044 = vunpack.c.l.b16 %v2230
        %v4045 = vunpack.c.l.b16 %v2231
        %v4046 = vunpack.c.l.b16 %v2232
        %v4047 = vunpack.c.l.b16 %v2233
        %v4048 = vunpack.c.l.b16 %v2234
        %v4049 = vunpack.c.l.b16 %v2235
        %v4050 = vunpack.c.l.b16 %v2236
        %v4051 = vunpack.c.l.b16 %v2237
        %v4052 = vunpack.c.l.b16 %v2238
        %v4053 = vunpack.c.l.b16 %v2239
        %v4054 = vunpack.c.l.b16 %v2240
        %v4055 = vunpack.c.l.b16 %v2241
        %v4056 = vunpack.c.l.b16 %v2242
        %v4057 = vunpack.c.l.b16 %v2243
        %v4058 = vunpack.c.l.b16 %v2244
        %v4059 = vunpack.c.l.b16 %v2245
        %v4060 = vunpack.c.l.b16 %v2246
        %v4061 = vunpack.c.l.b16 %v2247
        %v4062 = vunpack.c.l.b16 %v2248
        %v4063 = vunpack.c.l.b16 %v2249
        %v4064 = vunpack.c.l.b16 %v2250
        %v4065 = vunpack.c.l.b16 %v2251
        %v4066 = vunpack.c.l.b16 %v2252
        %v4067 = vunpack.c.l.b16 %v2253
        %v4068 = vunpack.c.l.b16 %v2254
        %v4069 = vunpack.c.l.b16 %v2255
        %v4070 = vunpack.c.l.b16 %v2256
        %v4071 = vunpack.c.l.b16 %v2257
        %v4072 = vunpack.c.l.b16 %v2258
        %v4073 = vunpack.c.l.b16 %v2259
        %v4074 = vunpack.c.l.b16 %v2260
        %v4075 = vunpack.c.l.b16 %v2261
        %v4076 = vunpack.c.l.b16 %v2262
        %v4077 = vunpack.c.l.b16 %v2263
        %v4078 = vunpack.c.l.b16 %v2264
        %v4079 = vunpack.c.l.b16 %v2265
        %v4080 = vunpack.c.l.b16 %v2266
        %v4081 = vunpack.c.l.b16 %v2267
        %v4082 = vunpack.c.l.b16 %v2268
        %v4083 = vunpack.c.l.b16 %v2269
        %v4084 = vunpack.c.l.b16 %v2270
        %v4085 = vunpack.c.l.b16 %v2271
        %v4086 = vunpack.c.l.b16 %v2272
        %v4087 = vunpack.c.l.b16 %v2273
        %v4088 = vunpack.c.l.b16 %v2274
        %v4089 = vunpack.c.l.b16 %v2275
        %v4090 = vunpack.c.l.b16 %v2276
        %v4091 = vunpack.c.l.b16 %v2277
        %v4092 = vunpack.c.l.b16 %v2278
        %v4093 = vunpack.c.l.b16 %v2279
        %v4094 = vunpack.c.l.b16 %v2280
        %v4095 = vunpack.c.l.b16 %v2281
        %v4096 = vunpack.c.l.b16 %v2282
        %v4097 = vunpack.c.l.b16 %v2283
        %v4098 = vunpack.c.l.b16 %v2284
        %v4099 = vunpack.c.l.b16 %v2285
        %v4100 = vunpack.c.l.b16 %v2286
        %v4101 = vunpack.c.l.b16 %v2287
        %v4102 = vunpack.c.l.b16 %v2288
        %v4103 = vunpack.c.l.b16 %v2289
        %v4104 = vunpack.c.l.b16 %v2290
        %v4105 = vunpack.c.l.b16 %v2291
        %v4106 = vunpack.c.l.b16 %v2292
        %v4107 = vunpack.c.l.b16 %v2293
        %v4108 = vunpack.c.l.b16 %v2294
        %v4109 = vunpack.c.l.b16 %v2295
        %v4110 = vunpack.c.l.b16 %v2296
        %v4111 = vunpack.c.l.b16 %v2297
        %v4112 = vunpack.c.l.b16 %v2298
        %v4113 = vunpack.c.l.b16 %v2299
        %v4114 = vunpack.c.l.b16 %v2300
        %v4115 = vunpack.c.l.b16 %v2301
        %v4116 = vunpack.c.l.b16 %v2302
        %v4117 = vunpack.c.l.b16 %v2303
        %v4118 = vunpack.c.l.b16 %v2304
        %v4119 = vunpack.c.l.b16 %v2305
        %v4120 = vunpack.c.l.b16 %v2306
        %v4121 = vunpack.c.l.b16 %v2307
        %v4122 = vunpack.c.l.b16 %v2308
        %v4123 = vunpack.c.l.b16 %v2309
        %v4124 = vunpack.c.l.b16 %v2310
        %v4125 = vunpack.c.l.b16 %v2311
        %v4126 = vunpack.c.l.b16 %v2312
        %v4127 = vunpack.c.l.b16 %v2313
        %v4128 = vunpack.c.l.b16 %v2314
        %v4129 = vunpack.c.l.b16 %v2315
        %v4130 = vunpack.c.l.b16 %v2316
        %v4131 = vunpack.c.l.b16 %v2317
        %v4132 = vunpack.c.l.b16 %v2318
        %v4133 = vunpack.c.l.b16 %v2319
        %v4134 = vunpack.c.l.b16 %v2320
        %v4135 = vunpack.c.l.b16 %v2321
        %v4136 = vunpack.c.l.b16 %v2322
        %v4137 = vunpack.c.l.b16 %v2323
        %v4138 = vunpack.c.l.b16 %v2324
        %v4139 = vunpack.c.l.b16 %v2325
        %v4140 = vunpack.c.l.b16 %v2326
        %v4141 = vunpack.c.l.b16 %v2327
        %v4142 = vunpack.c.l.b16 %v2328
        %v4143 = vunpack.c.l.b16 %v2329
        %v4144 = vunpack.c.l.b16 %v2330
        %v4145 = vunpack.c.l.b16 %v2331
        %v4146 = vunpack.c.l.b16 %v2332
        %v4147 = vunpack.c.l.b16 %v2333
        %v4148 = vunpack.c.l.b16 %v2334
        %v4149 = vunpack.c.l.b16 %v2335
        %v4150 = vunpack.c.l.b16 %v2336
        %v4151 = vunpack.c.l.b16 %v2337
        %v4152 = vunpack.c.l.b16 %v2338
        %v4153 = vunpack.c.l.b16 %v2339
        %v4154 = vunpack.c.l.b16 %v2340
        %v4155 = vunpack.c.l.b16 %v2341
        %v4156 = vunpack.c.l.b16 %v2342
        %v4157 = vunpack.c.l.b16 %v2343
        %v4158 = vunpack.c.l.b16 %v2344
        %v4159 = vunpack.c.l.b16 %v2345
        %v4160 = vunpack.c.l.b16 %v2346
        %v4161 = vunpack.c.l.b16 %v2347
        %v4162 = vunpack.c.l.b16 %v2348
        %v4163 = vunpack.c.l.b16 %v2349
        %v4164 = vunpack.c.l.b16 %v2350
        %v4165 = vunpack.c.l.b16 %v2351
        %v4166 = vunpack.c.l.b16 %v2352
        %v4167 = vunpack.c.l.b16 %v2353
        %v4168 = vunpack.c.l.b16 %v2354
        %v4169 = vunpack.c.l.b16 %v2355
        %v4170 = vunpack.c.l.b16 %v2356
        %v4171 = vunpack.c.l.b16 %v2357
        %v4172 = vunpack.c.l.b16 %v2358
        %v4173 = vunpack.c.l.b16 %v2359
        %v4174 = vunpack.c.l.b16 %v2360
        %v4175 = vunpack.c.l.b16 %v2361
        %v4176 = vunpack.c.l.b16 %v2362
        %v4177 = vunpack.c.l.b16 %v2363
        %v4178 = vunpack.c.l.b16 %v2364
        %v4179 = vunpack.c.l.b16 %v2365
        %v4180 = vunpack.c.l.b16 %v2366
        %v4181 = vunpack.c.l.b16 %v2367
        %v4182 = vunpack.c.l.b16 %v2368
        %v4183 = vunpack.c.l.b16 %v2369
        %v4184 = vunpack.c.l.b16 %v2370
        %v4185 = vunpack.c.l.b16 %v2371
        %v4186 = vunpack.c.l.b16 %v2372
        %v4187 = vunpack.c.l.b16 %v2373
        %v4188 = vunpack.c.l.b16 %v2374
        %v4189 = vunpack.c.l.b16 %v2375
        %v4190 = vunpack.c.l.b16 %v2376
        %v4191 = vunpack.c.l.b16 %v2377
        %v4192 = vunpack.c.l.b16 %v2378
        %v4193 = vunpack.c.l.b16 %v2379
        %v4194 = vunpack.c.l.b16 %v2380
        %v4195 = vunpack.c.l.b16 %v2381
        %v4196 = vunpack.c.l.b16 %v2382
        %v4197 = vunpack.c.l.b16 %v2383
        %v4198 = vunpack.c.l.b16 %v2384
        %v4199 = vunpack.c.l.b16 %v2385
        %v4200 = vunpack.c.l.b16 %v2386
        %v4201 = vunpack.c.l.b16 %v2387
        %v4202 = vunpack.c.l.b16 %v2388
        %v4203 = vunpack.c.l.b16 %v2389
        %v4204 = vunpack.c.l.b16 %v2390
        %v4205 = vunpack.c.l.b16 %v2391
        %v4206 = vunpack.c.l.b16 %v2392
        %v4207 = vunpack.c.l.b16 %v2393
        %v4208 = vunpack.c.l.b16 %v2394
        %v4209 = vunpack.c.l.b16 %v2395
        %v4210 = vunpack.c.l.b16 %v2396
        %v4211 = vunpack.c.l.b16 %v2397
        %v4212 = vunpack.c.l.b16 %v2398
        %v4213 = vunpack.c.l.b16 %v2399
        %v4214 = vunpack.c.l.b16 %v2400
        %v4215 = vunpack.c.l.b16 %v2401
        %v4216 = vunpack.c.l.b16 %v2402
        %v4217 = vunpack.c.l.b16 %v2403
        %v4218 = vunpack.c.l.b16 %v2404
        %v4219 = vunpack.c.l.b16 %v2405
        %v4220 = vunpack.c.l.b16 %v2406
        %v4221 = vunpack.c.l.b16 %v2407
        %v4222 = vunpack.c.l.b16 %v2408
        %v4223 = vunpack.c.l.b16 %v2409
        %v4224 = vunpack.c.l.b16 %v2410
        %v4225 = vunpack.c.l.b16 %v2411
        %v4226 = vunpack.c.l.b16 %v2412
        %v4227 = vunpack.c.l.b16 %v2413
        %v4228 = vunpack.c.l.b16 %v2414
        %v4229 = vunpack.c.l.b16 %v2415
        %v4230 = vunpack.c.l.b16 %v2416
        %v4231 = vunpack.c.l.b16 %v2417
        %v4232 = vunpack.c.l.b16 %v2418
        %v4233 = vunpack.c.l.b16 %v2419
        %v4234 = vunpack.c.l.b16 %v2420
        %v4235 = vunpack.c.l.b16 %v2421
        %v4236 = vunpack.c.l.b16 %v2422
        %v4237 = vunpack.c.l.b16 %v2423
        %v4238 = vunpack.c.l.b16 %v2424
        %v4239 = vunpack.c.l.b16 %v2425
        %v4240 = vunpack.c.l.b16 %v2426
        %v4241 = vunpack.c.l.b16 %v2427
        %v4242 = vunpack.c.l.b16 %v2428
        %v4243 = vunpack.c.l.b16 %v2429
        %v4244 = vunpack.c.l.b16 %v2430
        %v4245 = vunpack.c.l.b16 %v2431
        %v4246 = vunpack.c.l.b16 %v2432
        %v4247 = vunpack.c.l.b16 %v2433
        %v4248 = vunpack.c.l.b16 %v2434
        %v4249 = vunpack.c.l.b16 %v2435
        %v4250 = vunpack.c.l.b16 %v2436
        %v4251 = vunpack.c.l.b16 %v2437
        %v4252 = vunpack.c.l.b16 %v2438
        %v4253 = vunpack.c.l.b16 %v2439
        %v4254 = vunpack.c.l.b16 %v2440
        %v4255 = vunpack.c.l.b16 %v2441
        %v4256 = vunpack.c.l.b16 %v2442
        %v4257 = vunpack.c.l.b16 %v2443
        %v4258 = vunpack.c.l.b16 %v2444
        %v4259 = vunpack.c.l.b16 %v2445
        %v4260 = vunpack.c.l.b16 %v2446
        %v4261 = vunpack.c.l.b16 %v2447
        %v4262 = vunpack.c.l.b16 %v2448
        %v4263 = vunpack.c.l.b16 %v2449
        %v4264 = vunpack.c.l.b16 %v2450
        %v4265 = vunpack.c.l.b16 %v2451
        %v4266 = vunpack.c.l.b16 %v2452
        %v4267 = vunpack.c.l.b16 %v2453
        %v4268 = vunpack.c.l.b16 %v2454
        %v4269 = vunpack.c.l.b16 %v2455
        %v4270 = vunpack.c.l.b16 %v2456
        %v4271 = vunpack.c.l.b16 %v2457
        %v4272 = vunpack.c.l.b16 %v2458
        %v4273 = vunpack.c.l.b16 %v2459
        %v4274 = vunpack.c.l.b16 %v2460
        %v4275 = vunpack.c.l.b16 %v2461
        %v4276 = vunpack.c.l.b16 %v2462
        %v4277 = vunpack.c.l.b16 %v2463
        %v4278 = vunpack.c.l.b16 %v2464
        %v4279 = vunpack.c.l.b16 %v2465
        %v4280 = vunpack.c.l.b16 %v2466
        %v4281 = vunpack.c.l.b16 %v2467
        %v4282 = vunpack.c.l.b16 %v2468
        %v4283 = vunpack.c.l.b16 %v2469
        %v4284 = vunpack.c.l.b16 %v2470
        %v4285 = vunpack.c.l.b16 %v2471
        %v4286 = vunpack.c.l.b16 %v2472
        %v4287 = vunpack.c.l.b16 %v2473
        %v4288 = vunpack.c.l.b16 %v2474
        %v4289 = vunpack.c.l.b16 %v2475
        %v4290 = vunpack.c.l.b16 %v2476
        %v4291 = vunpack.c.l.b16 %v2477
        %v4292 = vunpack.c.l.b16 %v2478
        %v4293 = vunpack.c.l.b16 %v2479
        %v4294 = vunpack.c.l.b16 %v2480
        %v4295 = vunpack.c.l.b16 %v2481
        %v4296 = vunpack.c.l.b16 %v2482
        %v4297 = vunpack.c.l.b16 %v2483
        %v4298 = vunpack.c.l.b16 %v2484
        %v4299 = vunpack.c.l.b16 %v2485
        %v4300 = vunpack.c.l.b16 %v2486
        %v4301 = vunpack.c.l.b16 %v2487
        %v4302 = vunpack.c.l.b16 %v2488
        %v4303 = vunpack.c.l.b16 %v2489
        %v4304 = vunpack.c.l.b16 %v2490
        %v4305 = vunpack.c.l.b16 %v2491
        %v4306 = vunpack.c.l.b16 %v2492
        %v4307 = vunpack.c.l.b16 %v2493
        %v4308 = vunpack.c.l.b16 %v2494
        %v4309 = vunpack.c.l.b16 %v2495
        %v4310 = vunpack.c.l.b16 %v2496
        %v4311 = vunpack.c.l.b16 %v2497
        %v4312 = vunpack.c.l.b16 %v2498
        %v4313 = vunpack.c.l.b16 %v2499
        %v4314 = vunpack.c.l.b16 %v2500
        %v4315 = vunpack.c.l.b16 %v2501
        %v4316 = vunpack.c.l.b16 %v2502
        %v4317 = vunpack.c.l.b16 %v2503
        %v4318 = vunpack.c.l.b16 %v2504
        %v4319 = vunpack.c.l.b16 %v2505
        %v4320 = vunpack.c.l.b16 %v2506
        %v4321 = vunpack.c.l.b16 %v2507
        %v4322 = vunpack.c.l.b16 %v2508
        %v4323 = vunpack.c.l.b16 %v2509
        %v4324 = vunpack.c.l.b16 %v2510
        %v4325 = vunpack.c.l.b16 %v2511
        %v4326 = vunpack.c.l.b16 %v2512
        %v4327 = vunpack.c.l.b16 %v2513
        %v4328 = vunpack.c.l.b16 %v2514
        %v4329 = vunpack.c.l.b16 %v2515
        %v4330 = vunpack.c.l.b16 %v2516
        %v4331 = vunpack.c.l.b16 %v2517
        %v4332 = vunpack.c.l.b16 %v2518
        %v4333 = vunpack.c.l.b16 %v2519
        %v4334 = vunpack.c.l.b16 %v2520
        %v4335 = vunpack.c.l.b16 %v2521
        %v4336 = vunpack.c.l.b16 %v2522
        %v4337 = vunpack.c.l.b16 %v2523
        %v4338 = vunpack.c.l.b16 %v2524
        %v4339 = vunpack.c.l.b16 %v2525
        %v4340 = vunpack.c.l.b16 %v2526
        %v4341 = vunpack.c.l.b16 %v2527
        %v4342 = vunpack.c.l.b16 %v2528
        %v4343 = vunpack.c.l.b16 %v2529
        %v4344 = vunpack.c.l.b16 %v2530
        %v4345 = vunpack.c.l.b16 %v2531
        %v4346 = vunpack.c.l.b16 %v2532
        %v4347 = vunpack.c.l.b16 %v2533
        %v4348 = vunpack.c.l.b16 %v2534
        %v4349 = vunpack.c.l.b16 %v2535
        %v4350 = vunpack.c.l.b16 %v2536
        %v4351 = vunpack.c.l.b16 %v2537
        %v4352 = vunpack.c.l.b16 %v2538
        %v4353 = vunpack.c.l.b16 %v2539
        %v4354 = vunpack.c.l.b16 %v2540
        %v4355 = vunpack.c.l.b16 %v2541
        %v4356 = vunpack.c.l.b16 %v2542
        %v4357 = vunpack.c.l.b16 %v2543
        %v4358 = vunpack.c.l.b16 %v2544
        %v4359 = vunpack.c.l.b16 %v2545
        %v4360 = vunpack.c.l.b16 %v2546
        %v4361 = vunpack.c.l.b16 %v2547
        %v4362 = vunpack.c.l.b16 %v2548
        %v4363 = vunpack.c.l.b16 %v2549
        %v4364 = vunpack.c.l.b16 %v2550
        %v4365 = vunpack.c.l.b16 %v2551
        %v4366 = vunpack.c.l.b16 %v2552
        %v4367 = vunpack.c.l.b16 %v2553
        %v4368 = vunpack.c.l.b16 %v2554
        %v4369 = vunpack.c.l.b16 %v2555
        %v4370 = vunpack.c.l.b16 %v2556
        %v4371 = vunpack.c.l.b16 %v2557
        %v4372 = vunpack.c.l.b16 %v2558
        %v4373 = vunpack.c.l.b16 %v2559
        %v4374 = vunpack.c.l.b16 %v2560
        %v4375 = vunpack.c.l.b16 %v2561
        %v4376 = vunpack.c.l.b16 %v2562
        %v4377 = vunpack.c.l.b16 %v2563
        %v4378 = vunpack.c.l.b16 %v2564
        %v4379 = vunpack.c.l.b16 %v2565
        %v4380 = vunpack.c.l.b16 %v2566
        %v4381 = vunpack.c.l.b16 %v2567
        %v4382 = vunpack.c.l.b16 %v2568
        %v4383 = vunpack.c.l.b16 %v2569
        %v4384 = vunpack.c.l.b16 %v2570
        %v4385 = vunpack.c.l.b16 %v2571
        %v4386 = vunpack.c.l.b16 %v2572
        %v4387 = vunpack.c.l.b16 %v2573
        %v4388 = vunpack.c.l.b16 %v2574
        %v4389 = vunpack.c.l.b16 %v2575
        %v4390 = vunpack.c.l.b16 %v2576
        %v4391 = vunpack.c.l.b16 %v2577
        %v4392 = vunpack.c.l.b16 %v2578
        %v4393 = vunpack.c.l.b16 %v2579
        %v4394 = vunpack.c.l.b16 %v2580
        %v4395 = vunpack.c.l.b16 %v2581
        %v4396 = vunpack.c.l.b16 %v2582
        %v4397 = vunpack.c.l.b16 %v2583
        %v4398 = vunpack.c.l.b16 %v2584
        %v4399 = vunpack.c.l.b16 %v2585
        %v4400 = vunpack.c.l.b16 %v2586
        %v4401 = vunpack.c.l.b16 %v2587
        %v4402 = vunpack.c.l.b16 %v2588
        %v4403 = vunpack.c.l.b16 %v2589
        %v4404 = vunpack.c.l.b16 %v2590
        %v4405 = vunpack.c.l.b16 %v2591
        %v4406 = vunpack.c.l.b16 %v2592
        %v4407 = vunpack.c.l.b16 %v2593
        %v4408 = vunpack.c.l.b16 %v2594
        %v4409 = vunpack.c.l.b16 %v2595
        %v4410 = vunpack.c.l.b16 %v2596
        %v4411 = vunpack.c.l.b16 %v2597
        %v4412 = vunpack.c.l.b16 %v2598
        %v4413 = vunpack.c.l.b16 %v2599
        %v4414 = vunpack.c.l.b16 %v2600
        %v4415 = vunpack.c.l.b16 %v2601
        %v4416 = vunpack.c.l.b16 %v2602
        %v4417 = vunpack.c.l.b16 %v2603
        %v4418 = vunpack.c.l.b16 %v2604
        %v4419 = vunpack.c.l.b16 %v2605
        %v4420 = vunpack.c.l.b16 %v2606
        %v4421 = vunpack.c.l.b16 %v2607
        %v4422 = vunpack.c.l.b16 %v2608
        %v4423 = vunpack.c.l.b16 %v2609
        %v4424 = vunpack.c.l.b16 %v2610
        %v4425 = vunpack.c.l.b16 %v2611
        %v4426 = vunpack.c.l.b16 %v2612
        %v4427 = vunpack.c.l.b16 %v2613
        %v4428 = vunpack.c.l.b16 %v2614
        %v4429 = vunpack.c.l.b16 %v2615
        %v4430 = vunpack.c.l.b16 %v2616
        %v4431 = vunpack.c.l.b16 %v2617
        %v4432 = vunpack.c.l.b16 %v2618
        %v4433 = vunpack.c.l.b16 %v2619
        %v4434 = vunpack.c.l.b16 %v2620
        %v4435 = vunpack.c.l.b16 %v2621
        %v4436 = vunpack.c.l.b16 %v2622
        %v4437 = vunpack.c.l.b16 %v2623
        %v4438 = vunpack.c.l.b16 %v2624
        %v4439 = vunpack.c.l.b16 %v2625
        %v4440 = vunpack.c.l.b16 %v2626
        %v4441 = vunpack.c.l.b16 %v2627
        %v4442 = vunpack.c.l.b16 %v2628
        %v4443 = vunpack.c.l.b16 %v2629
        %v4444 = vunpack.c.l.b16 %v2630
        %v4445 = vunpack.c.l.b16 %v2631
        %v4446 = vunpack.c.l.b16 %v2632
        %v4447 = vunpack.c.l.b16 %v2633
        %v4448 = vunpack.c.l.b16 %v2634
        %v4449 = vunpack.c.l.b16 %v2635
        %v4450 = vunpack.c.l.b16 %v2636
        %v4451 = vunpack.c.l.b16 %v2637
        %v4452 = vunpack.c.l.b16 %v2638
        %v4453 = vunpack.c.l.b16 %v2639
        %v4454 = vunpack.c.l.b16 %v2640
        %v4455 = vunpack.c.l.b16 %v2641
        %v4456 = vunpack.c.l.b16 %v2642
        %v4457 = vunpack.c.l.b16 %v2643
        %v4458 = vunpack.c.l.b16 %v2644
        %v4459 = vunpack.c.l.b16 %v2645
        %v4460 = vunpack.c.l.b16 %v2646
        %v4461 = vunpack.c.l.b16 %v2647
        %v4462 = vunpack.c.l.b16 %v2648
        %v4463 = vunpack.c.l.b16 %v2649
        %v4464 = vunpack.c.l.b16 %v2650
        %v4465 = vunpack.c.l.b16 %v2651
        %v4466 = vunpack.c.l.b16 %v2652
        %v4467 = vunpack.c.l.b16 %v2653
        %v4468 = vunpack.c.l.b16 %v2654
        %v4469 = vunpack.c.l.b16 %v2655
        %v4470 = vunpack.c.l.b16 %v2656
        %v4471 = vunpack.c.l.b16 %v2657
        %v4472 = vunpack.c.l.b16 %v2658
        %v4473 = vunpack.c.l.b16 %v2659
        %v4474 = vunpack.c.l.b16 %v2660
        %v4475 = vunpack.c.l.b16 %v2661
        %v4476 = vunpack.c.l.b16 %v2662
        %v4477 = vunpack.c.l.b16 %v2663
        %v4478 = vunpack.c.l.b16 %v2664
        %v4479 = vunpack.c.l.b16 %v2665
        %v4480 = vunpack.c.l.b16 %v2666
        %v4481 = vunpack.c.l.b16 %v2667
        %v4482 = vunpack.c.l.b16 %v2668
        %v4483 = vunpack.c.l.b16 %v2669
        %v4484 = vunpack.c.l.b16 %v2670
        %v4485 = vunpack.c.l.b16 %v2671
        %v4486 = vunpack.c.l.b16 %v2672
        %v4487 = vunpack.c.l.b16 %v2673
        %v4488 = vunpack.c.l.b16 %v2674
        %v4489 = vunpack.c.l.b16 %v2675
        %v4490 = vunpack.c.l.b16 %v2676
        %v4491 = vunpack.c.l.b16 %v2677
        %v4492 = vunpack.c.l.b16 %v2678
        %v4493 = vunpack.c.l.b16 %v2679
        %v4494 = vunpack.c.l.b16 %v2680
        %v4495 = vunpack.c.l.b16 %v2681
        %v4496 = vunpack.c.l.b16 %v2682
        %v4497 = vunpack.c.l.b16 %v2683
        %v4498 = vunpack.c.l.b16 %v2684
        %v4499 = vunpack.c.l.b16 %v2685
        %v4500 = vunpack.c.l.b16 %v2686
        %v4501 = vunpack.c.l.b16 %v2687
        %v4502 = vunpack.c.l.b16 %v2688
        %v4503 = vunpack.c.l.b16 %v2689
        %v4504 = vunpack.c.l.b16 %v2690
        %v4505 = vunpack.c.l.b16 %v2691
        %v4506 = vunpack.c.l.b16 %v2692
        %v4507 = vunpack.c.l.b16 %v2693
        %v4508 = vunpack.c.l.b16 %v2694
        %v4509 = vunpack.c.l.b16 %v2695
        %v4510 = vunpack.c.l.b16 %v2696
        %v4511 = vunpack.c.l.b16 %v2697
        %v4512 = vunpack.c.l.b16 %v2698
        %v4513 = vunpack.c.l.b16 %v2699
        %v4514 = vunpack.c.l.b16 %v2700
        %v4515 = vunpack.c.l.b16 %v2701
        %v4516 = vunpack.c.l.b16 %v2702
        %v4517 = vunpack.c.l.b16 %v2703
        %v4518 = vunpack.c.l.b16 %v2704
        %v4519 = vunpack.c.l.b16 %v2705
        %v4520 = vunpack.c.l.b16 %v2706
        %v4521 = vunpack.c.l.b16 %v2707
        %v4522 = vunpack.c.l.b16 %v2708
        %v4523 = vunpack.c.l.b16 %v2709
        %v4524 = vunpack.c.l.b16 %v2710
        %v4525 = vunpack.c.l.b16 %v2711
        %v4526 = vunpack.c.l.b16 %v2712
        %v4527 = vunpack.c.l.b16 %v2713
        %v4528 = vunpack.c.l.b16 %v2714
        %v4529 = vunpack.c.l.b16 %v2715
        %v4530 = vunpack.c.l.b16 %v2716
        %v4531 = vunpack.c.l.b16 %v2717
        %v4532 = vunpack.c.l.b16 %v2718
        %v4533 = vunpack.c.l.b16 %v2719
        %v4534 = vunpack.c.l.b16 %v2720
        %v4535 = vunpack.c.l.b16 %v2721
        %v4536 = vunpack.c.l.b16 %v2722
        %v4537 = vunpack.c.l.b16 %v2723
        %v4538 = vunpack.c.l.b16 %v2724
        %v4539 = vunpack.c.l.b16 %v2725
        %v4540 = vunpack.c.l.b16 %v2726
        %v4541 = vunpack.c.l.b16 %v2727
        %v4542 = vunpack.c.l.b16 %v2728
        %v4543 = vunpack.c.l.b16 %v2729
        %v4544 = vunpack.c.l.b16 %v2730
        %v4545 = vunpack.c.l.b16 %v2731
        %v4546 = vunpack.c.l.b16 %v2732
        %v4547 = vunpack.c.l.b16 %v2733
        %v4548 = vunpack.c.l.b16 %v2734
        %v4549 = vunpack.c.l.b16 %v2735
        %v4550 = vunpack.c.l.b16 %v2736
        %v4551 = vunpack.c.l.b16 %v2737
        %v4552 = vunpack.c.l.b16 %v2738
        %v4553 = vunpack.c.l.b16 %v2739
        %v4554 = vunpack.c.l.b16 %v2740
        %v4555 = vunpack.c.l.b16 %v2741
        %v4556 = vunpack.c.l.b16 %v2742
        %v4557 = vunpack.c.l.b16 %v2743
        %v4558 = vunpack.c.l.b16 %v2744
        %v4559 = vunpack.c.l.b16 %v2745
        %v4560 = vunpack.c.l.b16 %v2746
        %v4561 = vunpack.c.l.b16 %v2747
        %v4562 = vunpack.c.l.b16 %v2748
        %v4563 = vunpack.c.l.b16 %v2749
        %v4564 = vunpack.c.l.b16 %v2750
        %v4565 = vunpack.c.l.b16 %v2751
        %v4566 = vunpack.c.l.b16 %v2752
        %v4567 = vunpack.c.l.b16 %v2753
        %v4568 = vunpack.c.l.b16 %v2754
        %v4569 = vunpack.c.l.b16 %v2755
        %v4570 = vunpack.c.l.b16 %v2756
        %v4571 = vunpack.c.l.b16 %v2757
        %v4572 = vunpack.c.l.b16 %v2758
        %v4573 = vunpack.c.l.b16 %v2759
        %v4574 = vunpack.c.l.b16 %v2760
        %v4575 = vunpack.c.l.b16 %v2761
        %v4576 = vunpack.c.l.b16 %v2762
        %v4577 = vunpack.c.l.b16 %v2763
        %v4578 = vunpack.c.l.b16 %v2764
        %v4579 = vunpack.c.l.b16 %v2765
        %v4580 = vunpack.c.l.b16 %v2766
        %v4581 = vunpack.c.l.b16 %v2767
        %v4582 = vunpack.c.l.b16 %v2768
        %v4583 = vunpack.c.l.b16 %v2769
        %v4584 = vunpack.c.l.b16 %v2770
        %v4585 = vunpack.c.l.b16 %v2771
        %v4586 = vunpack.c.l.b16 %v2772
        %v4587 = vunpack.c.l.b16 %v2773
        %v4588 = vunpack.c.l.b16 %v2774
        %v4589 = vunpack.c.l.b16 %v2775
        %v4590 = vunpack.c.l.b16 %v2776
        %v4591 = vunpack.c.l.b16 %v2777
        %v4592 = vunpack.c.l.b16 %v2778
        %v4593 = vunpack.c.l.b16 %v2779
        %v4594 = vunpack.c.l.b16 %v2780
        %v4595 = vunpack.c.l.b16 %v2781
        %v4596 = vunpack.c.l.b16 %v2782
        %v4597 = vunpack.c.l.b16 %v2783
        %v4598 = vunpack.c.l.b16 %v2784
        %v4599 = vunpack.c.l.b16 %v2785
        %v4600 = vunpack.c.l.b16 %v2786
        %v4601 = vunpack.c.l.b16 %v2787
        %v4602 = vunpack.c.l.b16 %v2788
        %v4603 = vunpack.c.l.b16 %v2789
        %v4604 = vunpack.c.l.b16 %v2790
        %v4605 = vunpack.c.l.b16 %v2791
        %v4606 = vunpack.c.l.b16 %v2792
        %v4607 = vunpack.c.l.b16 %v2793
        %v4608 = vunpack.c.l.b16 %v2794
        %v4609 = vunpack.c.l.b16 %v2795
        %v4610 = vunpack.c.l.b16 %v2796
        %v4611 = vunpack.c.l.b16 %v2797
        %v4612 = vunpack.c.l.b16 %v2798
        %v4613 = vunpack.c.l.b16 %v2799
        %v4614 = vunpack.c.l.b16 %v2800
        %v4615 = vunpack.c.l.b16 %v2801
        %v4616 = vunpack.c.l.b16 %v2802
        %v4617 = vunpack.c.l.b16 %v2803
        %v4618 = vunpack.c.l.b16 %v2804
        %v4619 = vunpack.c.l.b16 %v2805
        %v4620 = vunpack.c.l.b16 %v2806
        %v4621 = vunpack.c.l.b16 %v2807
        %v4622 = vunpack.c.l.b16 %v2808
        %v4623 = vunpack.c.l.b16 %v2809
        %v4624 = vunpack.c.l.b16 %v2810
        %v4625 = vunpack.c.l.b16 %v2811
        %v4626 = vunpack.c.l.b16 %v2812
        %v4627 = vunpack.c.l.b16 %v2813
        %v4628 = vunpack.c.l.b16 %v2814
        %v4629 = vunpack.c.l.b16 %v2815
        %v4630 = vunpack.c.l.b16 %v2816
        %v4631 = vunpack.c.l.b16 %v2817
        %v4632 = vunpack.c.l.b16 %v2818
        %v4633 = vunpack.c.l.b16 %v2819
        %v4634 = vunpack.c.l.b16 %v2820
        %v4635 = vunpack.c.l.b16 %v2821
        %v4636 = vunpack.c.l.b16 %v2822
        %v4637 = vunpack.c.l.b16 %v2823
        %v4638 = vunpack.c.l.b16 %v2824
        %v4639 = vunpack.c.l.b16 %v2825
        %v4640 = vunpack.c.l.b16 %v2826
        %v4641 = vunpack.c.l.b16 %v2827
        %v4642 = vunpack.c.l.b16 %v2828
        %v4643 = vunpack.c.l.b16 %v2829
        %v4644 = vunpack.c.l.b16 %v2830
        %v4645 = vunpack.c.l.b16 %v2831
        %v4646 = vunpack.c.l.b16 %v2832
        %v4647 = vunpack.c.l.b16 %v2833
        %v4648 = vunpack.c.l.b16 %v2834
        %v4649 = vunpack.c.l.b16 %v2835
        %v4650 = vunpack.c.l.b16 %v2836
        %v4651 = vunpack.c.l.b16 %v2837
        %v4652 = vunpack.c.l.b16 %v2838
        %v4653 = vunpack.c.l.b16 %v2839
        %v4654 = vunpack.c.l.b16 %v2840
        %v4655 = vunpack.c.l.b16 %v2841
        %v4656 = vunpack.c.l.b16 %v2842
        %v4657 = vunpack.c.l.b16 %v2843
        %v4658 = vunpack.c.l.b16 %v2844
        %v4659 = vunpack.c.l.b16 %v2845
        %v4660 = vunpack.c.l.b16 %v2846
        %v4661 = vunpack.c.l.b16 %v2847
        %v4662 = vunpack.c.l.b16 %v2848
        %v4663 = vunpack.c.l.b16 %v2849
        %v4664 = vunpack.c.l.b16 %v2850
        %v4665 = vunpack.c.l.b16 %v2851
        %v4666 = vunpack.c.l.b16 %v2852
        %v4667 = vunpack.c.l.b16 %v2853
        %v4668 = vunpack.c.l.b16 %v2854
        %v4669 = vunpack.c.l.b16 %v2855
        %v4670 = vunpack.c.l.b16 %v2856
        %v4671 = vunpack.c.l.b16 %v2857
        %v4672 = vunpack.c.l.b16 %v2858
        %v4673 = vunpack.c.l.b16 %v2859
        %v4674 = vunpack.c.l.b16 %v2860
        %v4675 = vunpack.c.l.b16 %v2861
        %v4676 = vunpack.c.l.b16 %v2862
        %v4677 = vunpack.c.l.b16 %v2863
        %v4678 = vunpack.c.l.b16 %v2864
        %v4679 = vunpack.c.l.b16 %v2865
        %v4680 = vunpack.c.l.b16 %v2866
        %v4681 = vunpack.c.l.b16 %v2867
        %v4682 = vunpack.c.l.b16 %v2868
        %v4683 = vunpack.c.l.b16 %v2869
        %v4684 = vunpack.c.l.b16 %v2870
        %v4685 = vunpack.c.l.b16 %v2871
        %v4686 = vunpack.c.l.b16 %v2872
        %v4687 = vunpack.c.l.b16 %v2873
        %v4688 = vunpack.c.l.b16 %v2874
        %v4689 = vunpack.c.l.b16 %v2875
        %v4690 = vunpack.c.l.b16 %v2876
        %v4691 = vunpack.c.l.b16 %v2877
        %v4692 = vunpack.c.l.b16 %v2878
        %v4693 = vunpack.c.l.b16 %v2879
        %v4694 = vunpack.c.l.b16 %v2880
        %v4695 = vunpack.c.l.b16 %v2881
        %v4696 = vunpack.c.l.b16 %v2882
        %v4697 = vunpack.c.l.b16 %v2883
        %v4698 = vunpack.c.l.b16 %v2884
        %v4699 = vunpack.c.l.b16 %v2885
        %v4700 = vunpack.c.l.b16 %v2886
        %v4701 = vunpack.c.l.b16 %v2887
        %v4702 = vunpack.c.l.b16 %v2888
        %v4703 = vunpack.c.l.b16 %v2889
        %v4704 = vunpack.c.l.b16 %v2890
        %v4705 = vunpack.c.l.b16 %v2891
        %v4706 = vunpack.c.l.b16 %v2892
        %v4707 = vunpack.c.l.b16 %v2893
        %v4708 = vunpack.c.l.b16 %v2894
        %v4709 = vunpack.c.l.b16 %v2895
        %v4710 = vunpack.c.l.b16 %v2896
        %v4711 = vunpack.c.l.b16 %v2897
        %v4712 = vunpack.c.l.b16 %v2898
        %v4713 = vunpack.c.l.b16 %v2899
        %v4714 = vunpack.c.l.b16 %v2900
        %v4715 = vunpack.c.l.b16 %v2901
        %v4716 = vunpack.c.l.b16 %v2902
        %v4717 = vunpack.c.l.b16 %v2903
        %v4718 = vunpack.c.l.b16 %v2904
        %v4719 = vunpack.c.l.b16 %v2905
        %v4720 = vunpack.c.l.b16 %v2906
        %v4721 = vunpack.c.l.b16 %v2907
        %v4722 = vunpack.c.l.b16 %v2908
        %v4723 = vunpack.c.l.b16 %v2909
        %v4724 = vunpack.c.l.b16 %v2910
        %v4725 = vunpack.c.l.b16 %v2911
        %v4726 = vunpack.c.l.b16 %v2912
        %v4727 = vunpack.c.l.b16 %v2913
        %v4728 = vunpack.c.l.b16 %v2914
        %v4729 = vunpack.c.l.b16 %v2915
        %v4730 = vunpack.c.l.b16 %v2916
        %v4731 = vunpack.c.l.b16 %v2917
        %v4732 = vunpack.c.l.b16 %v2918
        %v4733 = vunpack.c.l.b16 %v2919
        %v4734 = vunpack.c.l.b16 %v2920
        %v4735 = vunpack.c.l.b16 %v2921
        %v4736 = vunpack.c.l.b16 %v2922
        %v4737 = vunpack.c.l.b16 %v2923
        %v4738 = vunpack.c.l.b16 %v2924
        %v4739 = vunpack.c.l.b16 %v2925
        %v4740 = vunpack.c.l.b16 %v2926
        %v4741 = vunpack.c.l.b16 %v2927
        %v4742 = vunpack.c.l.b16 %v2928
        %v4743 = vunpack.c.l.b16 %v2929
        %v4744 = vunpack.c.l.b16 %v2930
        %v4745 = vunpack.c.l.b16 %v2931
        %v4746 = vunpack.c.l.b16 %v2932
        %v4747 = vunpack.c.l.b16 %v2933
        %v4748 = vunpack.c.l.b16 %v2934
        %v4749 = vunpack.c.l.b16 %v2935
        %v4750 = vunpack.c.l.b16 %v2936
        %v4751 = vunpack.c.l.b16 %v2937
        %v4752 = vunpack.c.l.b16 %v2938
        %v4753 = vunpack.c.l.b16 %v2939
        %v4754 = vunpack.c.l.b16 %v2940
        %v4755 = vunpack.c.l.b16 %v2941
        %v4756 = vunpack.c.l.b16 %v2942
        %v4757 = vunpack.c.l.b16 %v2943
        %v4758 = vunpack.c.l.b16 %v2944
        %v4759 = vunpack.c.l.b16 %v2945
        %v4760 = vunpack.c.l.b16 %v2946
        %v4761 = vunpack.c.l.b16 %v2947
        %v4762 = vunpack.c.l.b16 %v2948
        %v4763 = vunpack.c.l.b16 %v2949
        %v4764 = vunpack.c.l.b16 %v2950
        %v4765 = vunpack.c.l.b16 %v2951
        %v4766 = vunpack.c.l.b16 %v2952
        %v4767 = vunpack.c.l.b16 %v2953
        %v4768 = vunpack.c.l.b16 %v2954
        %v4769 = vunpack.c.l.b16 %v2955
        %v4770 = vunpack.c.l.b16 %v2956
        %v4771 = vunpack.c.l.b16 %v2957
        %v4772 = vunpack.c.l.b16 %v2958
        %v4773 = vunpack.c.l.b16 %v2959
        %v4774 = vunpack.c.l.b16 %v2960
        %v4775 = vunpack.c.l.b16 %v2961
        %v4776 = vunpack.c.l.b16 %v2962
        %v4777 = vunpack.c.l.b16 %v2963
        %v4778 = vunpack.c.l.b16 %v2964
        %v4779 = vunpack.c.l.b16 %v2965
        %v4780 = vunpack.c.l.b16 %v2966
        %v4781 = vunpack.c.l.b16 %v2967
        %v4782 = vunpack.c.l.b16 %v2968
        %v4783 = vunpack.c.l.b16 %v2969
        %v4784 = vunpack.c.l.b16 %v2970
        %v4785 = vunpack.c.l.b16 %v2971
        %v4786 = vunpack.c.l.b16 %v2972
        %v4787 = vunpack.c.l.b16 %v2973
        %v4788 = vunpack.c.l.b16 %v2974
        %v4789 = vunpack.c.l.b16 %v2975
        %v4790 = vunpack.c.l.b16 %v2976
        %v4791 = vunpack.c.l.b16 %v2977
        %v4792 = vunpack.c.l.b16 %v2978
        %v4793 = vunpack.c.l.b16 %v2979
        %v4794 = vunpack.c.l.b16 %v2980
        %v4795 = vunpack.c.l.b16 %v2981
        %v4796 = vunpack.c.l.b16 %v2982
        %v4797 = vunpack.c.l.b16 %v2983
        %v4798 = vunpack.c.l.b16 %v2984
        %v4799 = vunpack.c.l.b16 %v2985
        %v4800 = vunpack.c.l.b16 %v2986
        %v4801 = vunpack.c.l.b16 %v2987
        %v4802 = vunpack.c.l.b16 %v2988
        %v4803 = vpack.c.b16 %v4020, %v4019
        %v4804 = vpack.c.b16 %v4022, %v4021
        %v4805 = vpack.c.b16 %v4024, %v4023
        %v4806 = vpack.c.b16 %v4026, %v4025
        %v4807 = vpack.c.b16 %v4028, %v4027
        %v4808 = vpack.c.b16 %v4030, %v4029
        %v4809 = vpack.c.b16 %v4032, %v4031
        %v4810 = vpack.c.b16 %v4034, %v4033
        %v4811 = vpack.c.b16 %v4036, %v4035
        %v4812 = vpack.c.b16 %v4038, %v4037
        %v4813 = vpack.c.b16 %v4040, %v4039
        %v4814 = vpack.c.b16 %v4042, %v4041
        %v4815 = vpack.c.b16 %v4044, %v4043
        %v4816 = vpack.c.b16 %v4046, %v4045
        %v4817 = vpack.c.b16 %v4048, %v4047
        %v4818 = vpack.c.b16 %v4050, %v4049
        %v4819 = vpack.c.b16 %v4052, %v4051
        %v4820 = vpack.c.b16 %v4054, %v4053
        %v4821 = vpack.c.b16 %v4056, %v4055
        %v4822 = vpack.c.b16 %v4058, %v4057
        %v4823 = vpack.c.b16 %v4060, %v4059
        %v4824 = vpack.c.b16 %v4062, %v4061
        %v4825 = vpack.c.b16 %v4064, %v4063
        %v4826 = vpack.c.b16 %v4066, %v4065
        %v4827 = vpack.c.b16 %v4068, %v4067
        %v4828 = vpack.c.b16 %v4070, %v4069
        %v4829 = vpack.c.b16 %v4072, %v4071
        %v4830 = vpack.c.b16 %v4074, %v4073
        %v4831 = vpack.c.b16 %v4076, %v4075
        %v4832 = vpack.c.b16 %v4078, %v4077
        %v4833 = vpack.c.b16 %v4080, %v4079
        %v4834 = vpack.c.b16 %v4082, %v4081
        %v4835 = vpack.c.b16 %v4084, %v4083
        %v4836 = vpack.c.b16 %v4086, %v4085
        %v4837 = vpack.c.b16 %v4088, %v4087
        %v4838 = vpack.c.b16 %v4090, %v4089
        %v4839 = vpack.c.b16 %v4092, %v4091
        %v4840 = vpack.c.b16 %v4094, %v4093
        %v4841 = vpack.c.b16 %v4096, %v4095
        %v4842 = vpack.c.b16 %v4098, %v4097
        %v4843 = vpack.c.b16 %v4100, %v4099
        %v4844 = vpack.c.b16 %v4102, %v4101
        %v4845 = vpack.c.b16 %v4104, %v4103
        %v4846 = vpack.c.b16 %v4106, %v4105
        %v4847 = vpack.c.b16 %v4108, %v4107
        %v4848 = vpack.c.b16 %v4110, %v4109
        %v4849 = vpack.c.b16 %v4112, %v4111
        %v4850 = vpack.c.b16 %v4114, %v4113
        %v4851 = vpack.c.b16 %v4116, %v4115
        %v4852 = vpack.c.b16 %v4118, %v4117
        %v4853 = vpack.c.b16 %v4120, %v4119
        %v4854 = vpack.c.b16 %v4122, %v4121
        %v4855 = vpack.c.b16 %v4124, %v4123
        %v4856 = vpack.c.b16 %v4126, %v4125
        %v4857 = vpack.c.b16 %v4128, %v4127
        %v4858 = vpack.c.b16 %v4130, %v4129
        %v4859 = vpack.c.b16 %v4132, %v4131
        %v4860 = vpack.c.b16 %v4134, %v4133
        %v4861 = vpack.c.b16 %v4136, %v4135
        %v4862 = vpack.c.b16 %v4138, %v4137
        %v4863 = vpack.c.b16 %v4140, %v4139
        %v4864 = vpack.c.b16 %v4142, %v4141
        %v4865 = vpack.c.b16 %v4144, %v4143
        %v4866 = vpack.c.b16 %v4146, %v4145
        %v4867 = vpack.c.b16 %v4148, %v4147
        %v4868 = vpack.c.b16 %v4150, %v4149
        %v4869 = vpack.c.b16 %v4152, %v4151
        %v4870 = vpack.c.b16 %v4154, %v4153
        %v4871 = vpack.c.b16 %v4156, %v4155
        %v4872 = vpack.c.b16 %v4158, %v4157
        %v4873 = vpack.c.b16 %v4160, %v4159
        %v4874 = vpack.c.b16 %v4162, %v4161
        %v4875 = vpack.c.b16 %v4164, %v4163
        %v4876 = vpack.c.b16 %v4166, %v4165
        %v4877 = vpack.c.b16 %v4168, %v4167
        %v4878 = vpack.c.b16 %v4170, %v4169
        %v4879 = vpack.c.b16 %v4172, %v4171
        %v4880 = vpack.c.b16 %v4174, %v4173
        %v4881 = vpack.c.b16 %v4176, %v4175
        %v4882 = vpack.c.b16 %v4178, %v4177
        %v4883 = vpack.c.b16 %v4180, %v4179
        %v4884 = vpack.c.b16 %v4182, %v4181
        %v4885 = vpack.c.b16 %v4184, %v4183
        %v4886 = vpack.c.b16 %v4186, %v4185
        %v4887 = vpack.c.b16 %v4188, %v4187
        %v4888 = vpack.c.b16 %v4190, %v4189
        %v4889 = vpack.c.b16 %v4192, %v4191
        %v4890 = vpack.c.b16 %v4194, %v4193
        %v4891 = vpack.c.b16 %v4196, %v4195
        %v4892 = vpack.c.b16 %v4198, %v4197
        %v4893 = vpack.c.b16 %v4200, %v4199
        %v4894 = vpack.c.b16 %v4202, %v4201
        %v4895 = vpack.c.b16 %v4204, %v4203
        %v4896 = vpack.c.b16 %v4206, %v4205
        %v4897 = vpack.c.b16 %v4208, %v4207
        %v4898 = vpack.c.b16 %v4210, %v4209
        %v4899 = vpack.c.b16 %v4212, %v4211
        %v4900 = vpack.c.b16 %v4214, %v4213
        %v4901 = vpack.c.b16 %v4216, %v4215
        %v4902 = vpack.c.b16 %v4218, %v4217
        %v4903 = vpack.c.b16 %v4220, %v4219
        %v4904 = vpack.c.b16 %v4222, %v4221
        %v4905 = vpack.c.b16 %v4224, %v4223
        %v4906 = vpack.c.b16 %v4226, %v4225
        %v4907 = vpack.c.b16 %v4228, %v4227
        %v4908 = vpack.c.b16 %v4230, %v4229
        %v4909 = vpack.c.b16 %v4232, %v4231
        %v4910 = vpack.c.b16 %v4234, %v4233
        %v4911 = vpack.c.b16 %v4236, %v4235
        %v4912 = vpack.c.b16 %v4238, %v4237
        %v4913 = vpack.c.b16 %v4240, %v4239
        %v4914 = vpack.c.b16 %v4242, %v4241
        %v4915 = vpack.c.b16 %v4244, %v4243
        %v4916 = vpack.c.b16 %v4246, %v4245
        %v4917 = vpack.c.b16 %v4248, %v4247
        %v4918 = vpack.c.b16 %v4250, %v4249
        %v4919 = vpack.c.b16 %v4252, %v4251
        %v4920 = vpack.c.b16 %v4254, %v4253
        %v4921 = vpack.c.b16 %v4256, %v4255
        %v4922 = vpack.c.b16 %v4258, %v4257
        %v4923 = vpack.c.b16 %v4260, %v4259
        %v4924 = vpack.c.b16 %v4262, %v4261
        %v4925 = vpack.c.b16 %v4264, %v4263
        %v4926 = vpack.c.b16 %v4266, %v4265
        %v4927 = vpack.c.b16 %v4268, %v4267
        %v4928 = vpack.c.b16 %v4270, %v4269
        %v4929 = vpack.c.b16 %v4272, %v4271
        %v4930 = vpack.c.b16 %v4274, %v4273
        %v4931 = vpack.c.b16 %v4276, %v4275
        %v4932 = vpack.c.b16 %v4278, %v4277
        %v4933 = vpack.c.b16 %v4280, %v4279
        %v4934 = vpack.c.b16 %v4282, %v4281
        %v4935 = vpack.c.b16 %v4284, %v4283
        %v4936 = vpack.c.b16 %v4286, %v4285
        %v4937 = vpack.c.b16 %v4288, %v4287
        %v4938 = vpack.c.b16 %v4290, %v4289
        %v4939 = vpack.c.b16 %v4292, %v4291
        %v4940 = vpack.c.b16 %v4294, %v4293
        %v4941 = vpack.c.b16 %v4296, %v4295
        %v4942 = vpack.c.b16 %v4298, %v4297
        %v4943 = vpack.c.b16 %v4300, %v4299
        %v4944 = vpack.c.b16 %v4302, %v4301
        %v4945 = vpack.c.b16 %v4304, %v4303
        %v4946 = vpack.c.b16 %v4306, %v4305
        %v4947 = vpack.c.b16 %v4308, %v4307
        %v4948 = vpack.c.b16 %v4310, %v4309
        %v4949 = vpack.c.b16 %v4312, %v4311
        %v4950 = vpack.c.b16 %v4314, %v4313
        %v4951 = vpack.c.b16 %v4316, %v4315
        %v4952 = vpack.c.b16 %v4318, %v4317
        %v4953 = vpack.c.b16 %v4320, %v4319
        %v4954 = vpack.c.b16 %v4322, %v4321
        %v4955 = vpack.c.b16 %v4324, %v4323
        %v4956 = vpack.c.b16 %v4326, %v4325
        %v4957 = vpack.c.b16 %v4328, %v4327
        %v4958 = vpack.c.b16 %v4330, %v4329
        %v4959 = vpack.c.b16 %v4332, %v4331
        %v4960 = vpack.c.b16 %v4334, %v4333
        %v4961 = vpack.c.b16 %v4336, %v4335
        %v4962 = vpack.c.b16 %v4338, %v4337
        %v4963 = vpack.c.b16 %v4340, %v4339
        %v4964 = vpack.c.b16 %v4342, %v4341
        %v4965 = vpack.c.b16 %v4344, %v4343
        %v4966 = vpack.c.b16 %v4346, %v4345
        %v4967 = vpack.c.b16 %v4348, %v4347
        %v4968 = vpack.c.b16 %v4350, %v4349
        %v4969 = vpack.c.b16 %v4352, %v4351
        %v4970 = vpack.c.b16 %v4354, %v4353
        %v4971 = vpack.c.b16 %v4356, %v4355
        %v4972 = vpack.c.b16 %v4358, %v4357
        %v4973 = vpack.c.b16 %v4360, %v4359
        %v4974 = vpack.c.b16 %v4362, %v4361
        %v4975 = vpack.c.b16 %v4364, %v4363
        %v4976 = vpack.c.b16 %v4366, %v4365
        %v4977 = vpack.c.b16 %v4368, %v4367
        %v4978 = vpack.c.b16 %v4370, %v4369
        %v4979 = vpack.c.b16 %v4372, %v4371
        %v4980 = vpack.c.b16 %v4374, %v4373
        %v4981 = vpack.c.b16 %v4376, %v4375
        %v4982 = vpack.c.b16 %v4378, %v4377
        %v4983 = vpack.c.b16 %v4380, %v4379
        %v4984 = vpack.c.b16 %v4382, %v4381
        %v4985 = vpack.c.b16 %v4384, %v4383
        %v4986 = vpack.c.b16 %v4386, %v4385
        %v4987 = vpack.c.b16 %v4388, %v4387
        %v4988 = vpack.c.b16 %v4390, %v4389
        %v4989 = vpack.c.b16 %v4392, %v4391
        %v4990 = vpack.c.b16 %v4394, %v4393
        %v4991 = vpack.c.b16 %v4396, %v4395
        %v4992 = vpack.c.b16 %v4398, %v4397
        %v4993 = vpack.c.b16 %v4400, %v4399
        %v4994 = vpack.c.b16 %v4402, %v4401
        %v4995 = vpack.c.b16 %v4404, %v4403
        %v4996 = vpack.c.b16 %v4406, %v4405
        %v4997 = vpack.c.b16 %v4408, %v4407
        %v4998 = vpack.c.b16 %v4410, %v4409
        %v4999 = vpack.c.b16 %v4412, %v4411
        %v5000 = vpack.c.b16 %v4414, %v4413
        %v5001 = vpack.c.b16 %v4416, %v4415
        %v5002 = vpack.c.b16 %v4418, %v4417
        %v5003 = vpack.c.b16 %v4420, %v4419
        %v5004 = vpack.c.b16 %v4422, %v4421
        %v5005 = vpack.c.b16 %v4424, %v4423
        %v5006 = vpack.c.b16 %v4426, %v4425
        %v5007 = vpack.c.b16 %v4428, %v4427
        %v5008 = vpack.c.b16 %v4430, %v4429
        %v5009 = vpack.c.b16 %v4432, %v4431
        %v5010 = vpack.c.b16 %v4434, %v4433
        %v5011 = vpack.c.b16 %v4436, %v4435
        %v5012 = vpack.c.b16 %v4438, %v4437
        %v5013 = vpack.c.b16 %v4440, %v4439
        %v5014 = vpack.c.b16 %v4442, %v4441
        %v5015 = vpack.c.b16 %v4444, %v4443
        %v5016 = vpack.c.b16 %v4446, %v4445
        %v5017 = vpack.c.b16 %v4448, %v4447
        %v5018 = vpack.c.b16 %v4450, %v4449
        %v5019 = vpack.c.b16 %v4452, %v4451
        %v5020 = vpack.c.b16 %v4454, %v4453
        %v5021 = vpack.c.b16 %v4456, %v4455
        %v5022 = vpack.c.b16 %v4458, %v4457
        %v5023 = vpack.c.b16 %v4460, %v4459
        %v5024 = vpack.c.b16 %v4462, %v4461
        %v5025 = vpack.c.b16 %v4464, %v4463
        %v5026 = vpack.c.b16 %v4466, %v4465
        %v5027 = vpack.c.b16 %v4468, %v4467
        %v5028 = vpack.c.b16 %v4470, %v4469
        %v5029 = vpack.c.b16 %v4472, %v4471
        %v5030 = vpack.c.b16 %v4474, %v4473
        %v5031 = vpack.c.b16 %v4476, %v4475
        %v5032 = vpack.c.b16 %v4478, %v4477
        %v5033 = vpack.c.b16 %v4480, %v4479
        %v5034 = vpack.c.b16 %v4482, %v4481
        %v5035 = vpack.c.b16 %v4484, %v4483
        %v5036 = vpack.c.b16 %v4486, %v4485
        %v5037 = vpack.c.b16 %v4488, %v4487
        %v5038 = vpack.c.b16 %v4490, %v4489
        %v5039 = vpack.c.b16 %v4492, %v4491
        %v5040 = vpack.c.b16 %v4494, %v4493
        %v5041 = vpack.c.b16 %v4496, %v4495
        %v5042 = vpack.c.b16 %v4498, %v4497
        %v5043 = vpack.c.b16 %v4500, %v4499
        %v5044 = vpack.c.b16 %v4502, %v4501
        %v5045 = vpack.c.b16 %v4504, %v4503
        %v5046 = vpack.c.b16 %v4506, %v4505
        %v5047 = vpack.c.b16 %v4508, %v4507
        %v5048 = vpack.c.b16 %v4510, %v4509
        %v5049 = vpack.c.b16 %v4512, %v4511
        %v5050 = vpack.c.b16 %v4514, %v4513
        %v5051 = vpack.c.b16 %v4516, %v4515
        %v5052 = vpack.c.b16 %v4518, %v4517
        %v5053 = vpack.c.b16 %v4520, %v4519
        %v5054 = vpack.c.b16 %v4522, %v4521
        %v5055 = vpack.c.b16 %v4524, %v4523
        %v5056 = vpack.c.b16 %v4526, %v4525
        %v5057 = vpack.c.b16 %v4528, %v4527
        %v5058 = vpack.c.b16 %v4530, %v4529
        %v5059 = vpack.c.b16 %v4532, %v4531
        %v5060 = vpack.c.b16 %v4534, %v4533
        %v5061 = vpack.c.b16 %v4536, %v4535
        %v5062 = vpack.c.b16 %v4538, %v4537
        %v5063 = vpack.c.b16 %v4540, %v4539
        %v5064 = vpack.c.b16 %v4542, %v4541
        %v5065 = vpack.c.b16 %v4544, %v4543
        %v5066 = vpack.c.b16 %v4546, %v4545
        %v5067 = vpack.c.b16 %v4548, %v4547
        %v5068 = vpack.c.b16 %v4550, %v4549
        %v5069 = vpack.c.b16 %v4552, %v4551
        %v5070 = vpack.c.b16 %v4554, %v4553
        %v5071 = vpack.c.b16 %v4556, %v4555
        %v5072 = vpack.c.b16 %v4558, %v4557
        %v5073 = vpack.c.b16 %v4560, %v4559
        %v5074 = vpack.c.b16 %v4562, %v4561
        %v5075 = vpack.c.b16 %v4564, %v4563
        %v5076 = vpack.c.b16 %v4566, %v4565
        %v5077 = vpack.c.b16 %v4568, %v4567
        %v5078 = vpack.c.b16 %v4570, %v4569
        %v5079 = vpack.c.b16 %v4572, %v4571
        %v5080 = vpack.c.b16 %v4574, %v4573
        %v5081 = vpack.c.b16 %v4576, %v4575
        %v5082 = vpack.c.b16 %v4578, %v4577
        %v5083 = vpack.c.b16 %v4580, %v4579
        %v5084 = vpack.c.b16 %v4582, %v4581
        %v5085 = vpack.c.b16 %v4584, %v4583
        %v5086 = vpack.c.b16 %v4586, %v4585
        %v5087 = vpack.c.b16 %v4588, %v4587
        %v5088 = vpack.c.b16 %v4590, %v4589
        %v5089 = vpack.c.b16 %v4592, %v4591
        %v5090 = vpack.c.b16 %v4594, %v4593
        %v5091 = vpack.c.b16 %v4596, %v4595
        %v5092 = vpack.c.b16 %v4598, %v4597
        %v5093 = vpack.c.b16 %v4600, %v4599
        %v5094 = vpack.c.b16 %v4602, %v4601
        %v5095 = vpack.c.b16 %v4604, %v4603
        %v5096 = vpack.c.b16 %v4606, %v4605
        %v5097 = vpack.c.b16 %v4608, %v4607
        %v5098 = vpack.c.b16 %v4610, %v4609
        %v5099 = vpack.c.b16 %v4612, %v4611
        %v5100 = vpack.c.b16 %v4614, %v4613
        %v5101 = vpack.c.b16 %v4616, %v4615
        %v5102 = vpack.c.b16 %v4618, %v4617
        %v5103 = vpack.c.b16 %v4620, %v4619
        %v5104 = vpack.c.b16 %v4622, %v4621
        %v5105 = vpack.c.b16 %v4624, %v4623
        %v5106 = vpack.c.b16 %v4626, %v4625
        %v5107 = vpack.c.b16 %v4628, %v4627
        %v5108 = vpack.c.b16 %v4630, %v4629
        %v5109 = vpack.c.b16 %v4632, %v4631
        %v5110 = vpack.c.b16 %v4634, %v4633
        %v5111 = vpack.c.b16 %v4636, %v4635
        %v5112 = vpack.c.b16 %v4638, %v4637
        %v5113 = vpack.c.b16 %v4640, %v4639
        %v5114 = vpack.c.b16 %v4642, %v4641
        %v5115 = vpack.c.b16 %v4644, %v4643
        %v5116 = vpack.c.b16 %v4646, %v4645
        %v5117 = vpack.c.b16 %v4648, %v4647
        %v5118 = vpack.c.b16 %v4650, %v4649
        %v5119 = vpack.c.b16 %v4652, %v4651
        %v5120 = vpack.c.b16 %v4654, %v4653
        %v5121 = vpack.c.b16 %v4656, %v4655
        %v5122 = vpack.c.b16 %v4658, %v4657
        %v5123 = vpack.c.b16 %v4660, %v4659
        %v5124 = vpack.c.b16 %v4662, %v4661
        %v5125 = vpack.c.b16 %v4664, %v4663
        %v5126 = vpack.c.b16 %v4666, %v4665
        %v5127 = vpack.c.b16 %v4668, %v4667
        %v5128 = vpack.c.b16 %v4670, %v4669
        %v5129 = vpack.c.b16 %v4672, %v4671
        %v5130 = vpack.c.b16 %v4674, %v4673
        %v5131 = vpack.c.b16 %v4676, %v4675
        %v5132 = vpack.c.b16 %v4678, %v4677
        %v5133 = vpack.c.b16 %v4680, %v4679
        %v5134 = vpack.c.b16 %v4682, %v4681
        %v5135 = vpack.c.b16 %v4684, %v4683
        %v5136 = vpack.c.b16 %v4686, %v4685
        %v5137 = vpack.c.b16 %v4688, %v4687
        %v5138 = vpack.c.b16 %v4690, %v4689
        %v5139 = vpack.c.b16 %v4692, %v4691
        %v5140 = vpack.c.b16 %v4694, %v4693
        %v5141 = vpack.c.b16 %v4696, %v4695
        %v5142 = vpack.c.b16 %v4698, %v4697
        %v5143 = vpack.c.b16 %v4700, %v4699
        %v5144 = vpack.c.b16 %v4702, %v4701
        %v5145 = vpack.c.b16 %v4704, %v4703
        %v5146 = vpack.c.b16 %v4706, %v4705
        %v5147 = vpack.c.b16 %v4708, %v4707
        %v5148 = vpack.c.b16 %v4710, %v4709
        %v5149 = vpack.c.b16 %v4712, %v4711
        %v5150 = vpack.c.b16 %v4714, %v4713
        %v5151 = vpack.c.b16 %v4716, %v4715
        %v5152 = vpack.c.b16 %v4718, %v4717
        %v5153 = vpack.c.b16 %v4720, %v4719
        %v5154 = vpack.c.b16 %v4722, %v4721
        %v5155 = vpack.c.b16 %v4724, %v4723
        %v5156 = vpack.c.b16 %v4726, %v4725
        %v5157 = vpack.c.b16 %v4728, %v4727
        %v5158 = vpack.c.b16 %v4730, %v4729
        %v5159 = vpack.c.b16 %v4732, %v4731
        %v5160 = vpack.c.b16 %v4734, %v4733
        %v5161 = vpack.c.b16 %v4736, %v4735
        %v5162 = vpack.c.b16 %v4738, %v4737
        %v5163 = vpack.c.b16 %v4740, %v4739
        %v5164 = vpack.c.b16 %v4742, %v4741
        %v5165 = vpack.c.b16 %v4744, %v4743
        %v5166 = vpack.c.b16 %v4746, %v4745
        %v5167 = vpack.c.b16 %v4748, %v4747
        %v5168 = vpack.c.b16 %v4750, %v4749
        %v5169 = vpack.c.b16 %v4752, %v4751
        %v5170 = vpack.c.b16 %v4754, %v4753
        %v5171 = vpack.c.b16 %v4756, %v4755
        %v5172 = vpack.c.b16 %v4758, %v4757
        %v5173 = vpack.c.b16 %v4760, %v4759
        %v5174 = vpack.c.b16 %v4762, %v4761
        %v5175 = vpack.c.b16 %v4764, %v4763
        %v5176 = vpack.c.b16 %v4766, %v4765
        %v5177 = vpack.c.b16 %v4768, %v4767
        %v5178 = vpack.c.b16 %v4770, %v4769
        %v5179 = vpack.c.b16 %v4772, %v4771
        %v5180 = vpack.c.b16 %v4774, %v4773
        %v5181 = vpack.c.b16 %v4776, %v4775
        %v5182 = vpack.c.b16 %v4778, %v4777
        %v5183 = vpack.c.b16 %v4780, %v4779
        %v5184 = vpack.c.b16 %v4782, %v4781
        %v5185 = vpack.c.b16 %v4784, %v4783
        %v5186 = vpack.c.b16 %v4786, %v4785
        %v5187 = vpack.c.b16 %v4788, %v4787
        %v5188 = vpack.c.b16 %v4790, %v4789
        %v5189 = vpack.c.b16 %v4792, %v4791
        %v5190 = vpack.c.b16 %v4794, %v4793
        %v5191 = vpack.c.b16 %v4796, %v4795
        %v5192 = vpack.c.b16 %v4798, %v4797
        %v5193 = vpack.c.b16 %v4800, %v4799
        %v5194 = vpack.c.b16 %v4802, %v4801
        %5587 = vmatprep.subr.bf16.mxu0 0
        %5588 = vmatpush1.bf16.msra.mxu0 %v4810
        %5589 = vmatprep.subr.bf16.mxu0 0
        %5590 = vmatpush1.bf16.msra.mxu0 %v4809
        %5591 = vmatprep.subr.bf16.mxu0 0
        %5592 = vmatpush1.bf16.msra.mxu0 %v4808
        %5593 = vmatprep.subr.bf16.mxu0 0
        %5594 = vmatpush1.bf16.msra.mxu0 %v4807
        %5595 = vmatprep.subr.bf16.mxu0 0
        %5596 = vmatpush1.bf16.msra.mxu0 %v4806
        %5597 = vmatprep.subr.bf16.mxu0 0
        %5598 = vmatpush1.bf16.msra.mxu0 %v4805
        %5599 = vmatprep.subr.bf16.mxu0 0
        %5600 = vmatpush1.bf16.msra.mxu0 %v4804
        %5601 = vmatprep.subr.bf16.mxu0 0
        %5602 = vmatpush1.bf16.msra.mxu0 %v4803
        %5603 = vmatprep.subr.bf16.mxu0 0
        %5604 = vmatpush2.bf16.msra.mxu0 %v4818
        %5605 = vmatprep.subr.bf16.mxu0 0
        %5606 = vmatpush2.bf16.msra.mxu0 %v4817
        %5607 = vmatprep.subr.bf16.mxu0 0
        %5608 = vmatpush2.bf16.msra.mxu0 %v4816
        %5609 = vmatprep.subr.bf16.mxu0 0
        %5610 = vmatpush2.bf16.msra.mxu0 %v4815
        %5611 = vmatprep.subr.bf16.mxu0 0
        %5612 = vmatpush2.bf16.msra.mxu0 %v4814
        %5613 = vmatprep.subr.bf16.mxu0 0
        %5614 = vmatpush2.bf16.msra.mxu0 %v4813
        %5615 = vmatprep.subr.bf16.mxu0 0
        %5616 = vmatpush2.bf16.msra.mxu0 %v4812
        %5617 = vmatprep.subr.bf16.mxu0 0
        %5618 = vmatpush2.bf16.msra.mxu0 %v4811
        %5619 = vmatprep.mubr.bf16.mxu0 %v3138
        %5620 = vmatmul.mubr.bf16.gmra.mxu0 %v3137
        %v5621 = vpop.f32.mrf.mxu0
        %v5622 = vadd.f32 0.0, %v5621
        %v5623 = vpop.f32.mrf.mxu0
        %v5624 = vpop.f32.mrf.mxu0
        %v5625 = vadd.f32 0.0, %v5624
        %v5626 = vpop.f32.mrf.mxu0
        %5627 = vdwg.mxu0
        %5628 = vmatprep.subr.bf16.mxu0 0
        %5629 = vmatpush1.bf16.msra.mxu0 %v4826
        %5630 = vmatprep.subr.bf16.mxu0 0
        %5631 = vmatpush1.bf16.msra.mxu0 %v4825
        %5632 = vmatprep.subr.bf16.mxu0 0
        %5633 = vmatpush1.bf16.msra.mxu0 %v4824
        %5634 = vmatprep.subr.bf16.mxu0 0
        %5635 = vmatpush1.bf16.msra.mxu0 %v4823
        %5636 = vmatprep.subr.bf16.mxu0 0
        %5637 = vmatpush1.bf16.msra.mxu0 %v4822
        %5638 = vmatprep.subr.bf16.mxu0 0
        %5639 = vmatpush1.bf16.msra.mxu0 %v4821
        %5640 = vmatprep.subr.bf16.mxu0 0
        %5641 = vmatpush1.bf16.msra.mxu0 %v4820
        %5642 = vmatprep.subr.bf16.mxu0 0
        %5643 = vmatpush1.bf16.msra.mxu0 %v4819
        %5644 = vmatprep.subr.bf16.mxu0 0
        %5645 = vmatpush2.bf16.msra.mxu0 %v4834
        %5646 = vmatprep.subr.bf16.mxu0 0
        %5647 = vmatpush2.bf16.msra.mxu0 %v4833
        %5648 = vmatprep.subr.bf16.mxu0 0
        %5649 = vmatpush2.bf16.msra.mxu0 %v4832
        %5650 = vmatprep.subr.bf16.mxu0 0
        %5651 = vmatpush2.bf16.msra.mxu0 %v4831
        %5652 = vmatprep.subr.bf16.mxu0 0
        %5653 = vmatpush2.bf16.msra.mxu0 %v4830
        %5654 = vmatprep.subr.bf16.mxu0 0
        %5655 = vmatpush2.bf16.msra.mxu0 %v4829
        %5656 = vmatprep.subr.bf16.mxu0 0
        %5657 = vmatpush2.bf16.msra.mxu0 %v4828
        %5658 = vmatprep.subr.bf16.mxu0 0
        %5659 = vmatpush2.bf16.msra.mxu0 %v4827
        %5660 = vmatprep.mubr.bf16.mxu0 %v3140
        %5661 = vmatmul.mubr.bf16.gmra.mxu0 %v3139
        %v5662 = vpop.f32.mrf.mxu0
        %v5663 = vadd.f32 %v5622, %v5662
        %v5664 = vpop.f32.mrf.mxu0
        %v5665 = vpop.f32.mrf.mxu0
        %v5666 = vadd.f32 %v5625, %v5665
        %v5667 = vpop.f32.mrf.mxu0
        %5668 = vdwg.mxu0
        %5669 = vmatprep.subr.bf16.mxu0 0
        %5670 = vmatpush1.bf16.msra.mxu0 %v4842
        %5671 = vmatprep.subr.bf16.mxu0 0
        %5672 = vmatpush1.bf16.msra.mxu0 %v4841
        %5673 = vmatprep.subr.bf16.mxu0 0
        %5674 = vmatpush1.bf16.msra.mxu0 %v4840
        %5675 = vmatprep.subr.bf16.mxu0 0
        %5676 = vmatpush1.bf16.msra.mxu0 %v4839
        %5677 = vmatprep.subr.bf16.mxu0 0
        %5678 = vmatpush1.bf16.msra.mxu0 %v4838
        %5679 = vmatprep.subr.bf16.mxu0 0
        %5680 = vmatpush1.bf16.msra.mxu0 %v4837
        %5681 = vmatprep.subr.bf16.mxu0 0
        %5682 = vmatpush1.bf16.msra.mxu0 %v4836
        %5683 = vmatprep.subr.bf16.mxu0 0
        %5684 = vmatpush1.bf16.msra.mxu0 %v4835
        %5685 = vmatprep.subr.bf16.mxu0 0
        %5686 = vmatpush2.bf16.msra.mxu0 %v4850
        %5687 = vmatprep.subr.bf16.mxu0 0
        %5688 = vmatpush2.bf16.msra.mxu0 %v4849
        %5689 = vmatprep.subr.bf16.mxu0 0
        %5690 = vmatpush2.bf16.msra.mxu0 %v4848
        %5691 = vmatprep.subr.bf16.mxu0 0
        %5692 = vmatpush2.bf16.msra.mxu0 %v4847
        %5693 = vmatprep.subr.bf16.mxu0 0
        %5694 = vmatpush2.bf16.msra.mxu0 %v4846
        %5695 = vmatprep.subr.bf16.mxu0 0
        %5696 = vmatpush2.bf16.msra.mxu0 %v4845
        %5697 = vmatprep.subr.bf16.mxu0 0
        %5698 = vmatpush2.bf16.msra.mxu0 %v4844
        %5699 = vmatprep.subr.bf16.mxu0 0
        %5700 = vmatpush2.bf16.msra.mxu0 %v4843
        %5701 = vmatprep.mubr.bf16.mxu0 %v3142
        %5702 = vmatmul.mubr.bf16.gmra.mxu0 %v3141
        %v5703 = vpop.f32.mrf.mxu0
        %v5704 = vadd.f32 %v5663, %v5703
        %v5705 = vpop.f32.mrf.mxu0
        %v5706 = vpop.f32.mrf.mxu0
        %v5707 = vadd.f32 %v5666, %v5706
        %v5708 = vpop.f32.mrf.mxu0
        %5709 = vdwg.mxu0
        %5710 = vmatprep.subr.bf16.mxu0 0
        %5711 = vmatpush1.bf16.msra.mxu0 %v4858
        %5712 = vmatprep.subr.bf16.mxu0 0
        %5713 = vmatpush1.bf16.msra.mxu0 %v4857
        %5714 = vmatprep.subr.bf16.mxu0 0
        %5715 = vmatpush1.bf16.msra.mxu0 %v4856
        %5716 = vmatprep.subr.bf16.mxu0 0
        %5717 = vmatpush1.bf16.msra.mxu0 %v4855
        %5718 = vmatprep.subr.bf16.mxu0 0
        %5719 = vmatpush1.bf16.msra.mxu0 %v4854
        %5720 = vmatprep.subr.bf16.mxu0 0
        %5721 = vmatpush1.bf16.msra.mxu0 %v4853
        %5722 = vmatprep.subr.bf16.mxu0 0
        %5723 = vmatpush1.bf16.msra.mxu0 %v4852
        %5724 = vmatprep.subr.bf16.mxu0 0
        %5725 = vmatpush1.bf16.msra.mxu0 %v4851
        %5726 = vmatprep.subr.bf16.mxu0 0
        %5727 = vmatpush2.bf16.msra.mxu0 %v4866
        %5728 = vmatprep.subr.bf16.mxu0 0
        %5729 = vmatpush2.bf16.msra.mxu0 %v4865
        %5730 = vmatprep.subr.bf16.mxu0 0
        %5731 = vmatpush2.bf16.msra.mxu0 %v4864
        %5732 = vmatprep.subr.bf16.mxu0 0
        %5733 = vmatpush2.bf16.msra.mxu0 %v4863
        %5734 = vmatprep.subr.bf16.mxu0 0
        %5735 = vmatpush2.bf16.msra.mxu0 %v4862
        %5736 = vmatprep.subr.bf16.mxu0 0
        %5737 = vmatpush2.bf16.msra.mxu0 %v4861
        %5738 = vmatprep.subr.bf16.mxu0 0
        %5739 = vmatpush2.bf16.msra.mxu0 %v4860
        %5740 = vmatprep.subr.bf16.mxu0 0
        %5741 = vmatpush2.bf16.msra.mxu0 %v4859
        %5742 = vmatprep.mubr.bf16.mxu0 %v3144
        %5743 = vmatmul.mubr.bf16.gmra.mxu0 %v3143
        %v5744 = vpop.f32.mrf.mxu0
        %v5745 = vadd.f32 %v5704, %v5744
        %v5746 = vpop.f32.mrf.mxu0
        %v5747 = vpop.f32.mrf.mxu0
        %v5748 = vadd.f32 %v5707, %v5747
        %v5749 = vpop.f32.mrf.mxu0
        %5750 = vdwg.mxu0
        %5751 = vmatprep.subr.bf16.mxu0 0
        %5752 = vmatpush1.bf16.msra.mxu0 %v4874
        %5753 = vmatprep.subr.bf16.mxu0 0
        %5754 = vmatpush1.bf16.msra.mxu0 %v4873
        %5755 = vmatprep.subr.bf16.mxu0 0
        %5756 = vmatpush1.bf16.msra.mxu0 %v4872
        %5757 = vmatprep.subr.bf16.mxu0 0
        %5758 = vmatpush1.bf16.msra.mxu0 %v4871
        %5759 = vmatprep.subr.bf16.mxu0 0
        %5760 = vmatpush1.bf16.msra.mxu0 %v4870
        %5761 = vmatprep.subr.bf16.mxu0 0
        %5762 = vmatpush1.bf16.msra.mxu0 %v4869
        %5763 = vmatprep.subr.bf16.mxu0 0
        %5764 = vmatpush1.bf16.msra.mxu0 %v4868
        %5765 = vmatprep.subr.bf16.mxu0 0
        %5766 = vmatpush1.bf16.msra.mxu0 %v4867
        %5767 = vmatprep.subr.bf16.mxu0 0
        %5768 = vmatpush2.bf16.msra.mxu0 %v4882
        %5769 = vmatprep.subr.bf16.mxu0 0
        %5770 = vmatpush2.bf16.msra.mxu0 %v4881
        %5771 = vmatprep.subr.bf16.mxu0 0
        %5772 = vmatpush2.bf16.msra.mxu0 %v4880
        %5773 = vmatprep.subr.bf16.mxu0 0
        %5774 = vmatpush2.bf16.msra.mxu0 %v4879
        %5775 = vmatprep.subr.bf16.mxu0 0
        %5776 = vmatpush2.bf16.msra.mxu0 %v4878
        %5777 = vmatprep.subr.bf16.mxu0 0
        %5778 = vmatpush2.bf16.msra.mxu0 %v4877
        %5779 = vmatprep.subr.bf16.mxu0 0
        %5780 = vmatpush2.bf16.msra.mxu0 %v4876
        %5781 = vmatprep.subr.bf16.mxu0 0
        %5782 = vmatpush2.bf16.msra.mxu0 %v4875
        %5783 = vmatprep.mubr.bf16.mxu0 %v3146
        %5784 = vmatmul.mubr.bf16.gmra.mxu0 %v3145
        %v5785 = vpop.f32.mrf.mxu0
        %v5786 = vadd.f32 %v5745, %v5785
        %v5787 = vpop.f32.mrf.mxu0
        %v5788 = vpop.f32.mrf.mxu0
        %v5789 = vadd.f32 %v5748, %v5788
        %v5790 = vpop.f32.mrf.mxu0
        %5791 = vdwg.mxu0
        %5792 = vmatprep.subr.bf16.mxu0 0
        %5793 = vmatpush1.bf16.msra.mxu0 %v4890
        %5794 = vmatprep.subr.bf16.mxu0 0
        %5795 = vmatpush1.bf16.msra.mxu0 %v4889
        %5796 = vmatprep.subr.bf16.mxu0 0
        %5797 = vmatpush1.bf16.msra.mxu0 %v4888
        %5798 = vmatprep.subr.bf16.mxu0 0
        %5799 = vmatpush1.bf16.msra.mxu0 %v4887
        %5800 = vmatprep.subr.bf16.mxu0 0
        %5801 = vmatpush1.bf16.msra.mxu0 %v4886
        %5802 = vmatprep.subr.bf16.mxu0 0
        %5803 = vmatpush1.bf16.msra.mxu0 %v4885
        %5804 = vmatprep.subr.bf16.mxu0 0
        %5805 = vmatpush1.bf16.msra.mxu0 %v4884
        %5806 = vmatprep.subr.bf16.mxu0 0
        %5807 = vmatpush1.bf16.msra.mxu0 %v4883
        %5808 = vmatprep.subr.bf16.mxu0 0
        %5809 = vmatpush2.bf16.msra.mxu0 %v4898
        %5810 = vmatprep.subr.bf16.mxu0 0
        %5811 = vmatpush2.bf16.msra.mxu0 %v4897
        %5812 = vmatprep.subr.bf16.mxu0 0
        %5813 = vmatpush2.bf16.msra.mxu0 %v4896
        %5814 = vmatprep.subr.bf16.mxu0 0
        %5815 = vmatpush2.bf16.msra.mxu0 %v4895
        %5816 = vmatprep.subr.bf16.mxu0 0
        %5817 = vmatpush2.bf16.msra.mxu0 %v4894
        %5818 = vmatprep.subr.bf16.mxu0 0
        %5819 = vmatpush2.bf16.msra.mxu0 %v4893
        %5820 = vmatprep.subr.bf16.mxu0 0
        %5821 = vmatpush2.bf16.msra.mxu0 %v4892
        %5822 = vmatprep.subr.bf16.mxu0 0
        %5823 = vmatpush2.bf16.msra.mxu0 %v4891
        %5824 = vmatprep.mubr.bf16.mxu0 %v3148
        %5825 = vmatmul.mubr.bf16.gmra.mxu0 %v3147
        %v5826 = vpop.f32.mrf.mxu0
        %v5827 = vadd.f32 %v5786, %v5826
        %v5828 = vpop.f32.mrf.mxu0
        %v5829 = vpop.f32.mrf.mxu0
        %v5830 = vadd.f32 %v5789, %v5829
        %v5831 = vpop.f32.mrf.mxu0
        %5832 = vdwg.mxu0
        %5833 = vmatprep.subr.bf16.mxu0 0
        %5834 = vmatpush1.bf16.msra.mxu0 %v4906
        %5835 = vmatprep.subr.bf16.mxu0 0
        %5836 = vmatpush1.bf16.msra.mxu0 %v4905
        %5837 = vmatprep.subr.bf16.mxu0 0
        %5838 = vmatpush1.bf16.msra.mxu0 %v4904
        %5839 = vmatprep.subr.bf16.mxu0 0
        %5840 = vmatpush1.bf16.msra.mxu0 %v4903
        %5841 = vmatprep.subr.bf16.mxu0 0
        %5842 = vmatpush1.bf16.msra.mxu0 %v4902
        %5843 = vmatprep.subr.bf16.mxu0 0
        %5844 = vmatpush1.bf16.msra.mxu0 %v4901
        %5845 = vmatprep.subr.bf16.mxu0 0
        %5846 = vmatpush1.bf16.msra.mxu0 %v4900
        %5847 = vmatprep.subr.bf16.mxu0 0
        %5848 = vmatpush1.bf16.msra.mxu0 %v4899
        %5849 = vmatprep.subr.bf16.mxu0 0
        %5850 = vmatpush2.bf16.msra.mxu0 %v4914
        %5851 = vmatprep.subr.bf16.mxu0 0
        %5852 = vmatpush2.bf16.msra.mxu0 %v4913
        %5853 = vmatprep.subr.bf16.mxu0 0
        %5854 = vmatpush2.bf16.msra.mxu0 %v4912
        %5855 = vmatprep.subr.bf16.mxu0 0
        %5856 = vmatpush2.bf16.msra.mxu0 %v4911
        %5857 = vmatprep.subr.bf16.mxu0 0
        %5858 = vmatpush2.bf16.msra.mxu0 %v4910
        %5859 = vmatprep.subr.bf16.mxu0 0
        %5860 = vmatpush2.bf16.msra.mxu0 %v4909
        %5861 = vmatprep.subr.bf16.mxu0 0
        %5862 = vmatpush2.bf16.msra.mxu0 %v4908
        %5863 = vmatprep.subr.bf16.mxu0 0
        %5864 = vmatpush2.bf16.msra.mxu0 %v4907
        %5865 = vmatprep.mubr.bf16.mxu0 %v3150
        %5866 = vmatmul.mubr.bf16.gmra.mxu0 %v3149
        %v5867 = vpop.f32.mrf.mxu0
        %v5868 = vadd.f32 %v5827, %v5867
        %v5869 = vpop.f32.mrf.mxu0
        %v5870 = vpop.f32.mrf.mxu0
        %v5871 = vadd.f32 %v5830, %v5870
        %v5872 = vpop.f32.mrf.mxu0
        %5873 = vdwg.mxu0
        %5874 = vmatprep.subr.bf16.mxu0 0
        %5875 = vmatpush1.bf16.msra.mxu0 %v4922
        %5876 = vmatprep.subr.bf16.mxu0 0
        %5877 = vmatpush1.bf16.msra.mxu0 %v4921
        %5878 = vmatprep.subr.bf16.mxu0 0
        %5879 = vmatpush1.bf16.msra.mxu0 %v4920
        %5880 = vmatprep.subr.bf16.mxu0 0
        %5881 = vmatpush1.bf16.msra.mxu0 %v4919
        %5882 = vmatprep.subr.bf16.mxu0 0
        %5883 = vmatpush1.bf16.msra.mxu0 %v4918
        %5884 = vmatprep.subr.bf16.mxu0 0
        %5885 = vmatpush1.bf16.msra.mxu0 %v4917
        %5886 = vmatprep.subr.bf16.mxu0 0
        %5887 = vmatpush1.bf16.msra.mxu0 %v4916
        %5888 = vmatprep.subr.bf16.mxu0 0
        %5889 = vmatpush1.bf16.msra.mxu0 %v4915
        %5890 = vmatprep.subr.bf16.mxu0 0
        %5891 = vmatpush2.bf16.msra.mxu0 %v4930
        %5892 = vmatprep.subr.bf16.mxu0 0
        %5893 = vmatpush2.bf16.msra.mxu0 %v4929
        %5894 = vmatprep.subr.bf16.mxu0 0
        %5895 = vmatpush2.bf16.msra.mxu0 %v4928
        %5896 = vmatprep.subr.bf16.mxu0 0
        %5897 = vmatpush2.bf16.msra.mxu0 %v4927
        %5898 = vmatprep.subr.bf16.mxu0 0
        %5899 = vmatpush2.bf16.msra.mxu0 %v4926
        %5900 = vmatprep.subr.bf16.mxu0 0
        %5901 = vmatpush2.bf16.msra.mxu0 %v4925
        %5902 = vmatprep.subr.bf16.mxu0 0
        %5903 = vmatpush2.bf16.msra.mxu0 %v4924
        %5904 = vmatprep.subr.bf16.mxu0 0
        %5905 = vmatpush2.bf16.msra.mxu0 %v4923
        %5906 = vmatprep.mubr.bf16.mxu0 %v3152
        %5907 = vmatmul.mubr.bf16.gmra.mxu0 %v3151
        %v5908 = vpop.f32.mrf.mxu0
        %v5909 = vadd.f32 %v5868, %v5908
        %v5910 = vpop.f32.mrf.mxu0
        %v5911 = vpop.f32.mrf.mxu0
        %v5912 = vadd.f32 %v5871, %v5911
        %v5913 = vpop.f32.mrf.mxu0
        %5914 = vdwg.mxu0
        %5915 = vmatprep.subr.bf16.mxu0 0
        %5916 = vmatpush1.bf16.msra.mxu0 %v4938
        %5917 = vmatprep.subr.bf16.mxu0 0
        %5918 = vmatpush1.bf16.msra.mxu0 %v4937
        %5919 = vmatprep.subr.bf16.mxu0 0
        %5920 = vmatpush1.bf16.msra.mxu0 %v4936
        %5921 = vmatprep.subr.bf16.mxu0 0
        %5922 = vmatpush1.bf16.msra.mxu0 %v4935
        %5923 = vmatprep.subr.bf16.mxu0 0
        %5924 = vmatpush1.bf16.msra.mxu0 %v4934
        %5925 = vmatprep.subr.bf16.mxu0 0
        %5926 = vmatpush1.bf16.msra.mxu0 %v4933
        %5927 = vmatprep.subr.bf16.mxu0 0
        %5928 = vmatpush1.bf16.msra.mxu0 %v4932
        %5929 = vmatprep.subr.bf16.mxu0 0
        %5930 = vmatpush1.bf16.msra.mxu0 %v4931
        %5931 = vmatprep.subr.bf16.mxu0 0
        %5932 = vmatpush2.bf16.msra.mxu0 %v4946
        %5933 = vmatprep.subr.bf16.mxu0 0
        %5934 = vmatpush2.bf16.msra.mxu0 %v4945
        %5935 = vmatprep.subr.bf16.mxu0 0
        %5936 = vmatpush2.bf16.msra.mxu0 %v4944
        %5937 = vmatprep.subr.bf16.mxu0 0
        %5938 = vmatpush2.bf16.msra.mxu0 %v4943
        %5939 = vmatprep.subr.bf16.mxu0 0
        %5940 = vmatpush2.bf16.msra.mxu0 %v4942
        %5941 = vmatprep.subr.bf16.mxu0 0
        %5942 = vmatpush2.bf16.msra.mxu0 %v4941
        %5943 = vmatprep.subr.bf16.mxu0 0
        %5944 = vmatpush2.bf16.msra.mxu0 %v4940
        %5945 = vmatprep.subr.bf16.mxu0 0
        %5946 = vmatpush2.bf16.msra.mxu0 %v4939
        %5947 = vmatprep.mubr.bf16.mxu0 %v3154
        %5948 = vmatmul.mubr.bf16.gmra.mxu0 %v3153
        %v5949 = vpop.f32.mrf.mxu0
        %v5950 = vadd.f32 %v5909, %v5949
        %v5951 = vpop.f32.mrf.mxu0
        %v5952 = vpop.f32.mrf.mxu0
        %v5953 = vadd.f32 %v5912, %v5952
        %v5954 = vpop.f32.mrf.mxu0
        %5955 = vdwg.mxu0
        %5956 = vmatprep.subr.bf16.mxu0 0
        %5957 = vmatpush1.bf16.msra.mxu0 %v4954
        %5958 = vmatprep.subr.bf16.mxu0 0
        %5959 = vmatpush1.bf16.msra.mxu0 %v4953
        %5960 = vmatprep.subr.bf16.mxu0 0
        %5961 = vmatpush1.bf16.msra.mxu0 %v4952
        %5962 = vmatprep.subr.bf16.mxu0 0
        %5963 = vmatpush1.bf16.msra.mxu0 %v4951
        %5964 = vmatprep.subr.bf16.mxu0 0
        %5965 = vmatpush1.bf16.msra.mxu0 %v4950
        %5966 = vmatprep.subr.bf16.mxu0 0
        %5967 = vmatpush1.bf16.msra.mxu0 %v4949
        %5968 = vmatprep.subr.bf16.mxu0 0
        %5969 = vmatpush1.bf16.msra.mxu0 %v4948
        %5970 = vmatprep.subr.bf16.mxu0 0
        %5971 = vmatpush1.bf16.msra.mxu0 %v4947
        %5972 = vmatprep.subr.bf16.mxu0 0
        %5973 = vmatpush2.bf16.msra.mxu0 %v4962
        %5974 = vmatprep.subr.bf16.mxu0 0
        %5975 = vmatpush2.bf16.msra.mxu0 %v4961
        %5976 = vmatprep.subr.bf16.mxu0 0
        %5977 = vmatpush2.bf16.msra.mxu0 %v4960
        %5978 = vmatprep.subr.bf16.mxu0 0
        %5979 = vmatpush2.bf16.msra.mxu0 %v4959
        %5980 = vmatprep.subr.bf16.mxu0 0
        %5981 = vmatpush2.bf16.msra.mxu0 %v4958
        %5982 = vmatprep.subr.bf16.mxu0 0
        %5983 = vmatpush2.bf16.msra.mxu0 %v4957
        %5984 = vmatprep.subr.bf16.mxu0 0
        %5985 = vmatpush2.bf16.msra.mxu0 %v4956
        %5986 = vmatprep.subr.bf16.mxu0 0
        %5987 = vmatpush2.bf16.msra.mxu0 %v4955
        %5988 = vmatprep.mubr.bf16.mxu0 %v3156
        %5989 = vmatmul.mubr.bf16.gmra.mxu0 %v3155
        %v5990 = vpop.f32.mrf.mxu0
        %v5991 = vadd.f32 %v5950, %v5990
        %v5992 = vpop.f32.mrf.mxu0
        %v5993 = vpop.f32.mrf.mxu0
        %v5994 = vadd.f32 %v5953, %v5993
        %v5995 = vpop.f32.mrf.mxu0
        %5996 = vdwg.mxu0
        %5997 = vmatprep.subr.bf16.mxu0 0
        %5998 = vmatpush1.bf16.msra.mxu0 %v4970
        %5999 = vmatprep.subr.bf16.mxu0 0
        %6000 = vmatpush1.bf16.msra.mxu0 %v4969
        %6001 = vmatprep.subr.bf16.mxu0 0
        %6002 = vmatpush1.bf16.msra.mxu0 %v4968
        %6003 = vmatprep.subr.bf16.mxu0 0
        %6004 = vmatpush1.bf16.msra.mxu0 %v4967
        %6005 = vmatprep.subr.bf16.mxu0 0
        %6006 = vmatpush1.bf16.msra.mxu0 %v4966
        %6007 = vmatprep.subr.bf16.mxu0 0
        %6008 = vmatpush1.bf16.msra.mxu0 %v4965
        %6009 = vmatprep.subr.bf16.mxu0 0
        %6010 = vmatpush1.bf16.msra.mxu0 %v4964
        %6011 = vmatprep.subr.bf16.mxu0 0
        %6012 = vmatpush1.bf16.msra.mxu0 %v4963
        %6013 = vmatprep.subr.bf16.mxu0 0
        %6014 = vmatpush2.bf16.msra.mxu0 %v4978
        %6015 = vmatprep.subr.bf16.mxu0 0
        %6016 = vmatpush2.bf16.msra.mxu0 %v4977
        %6017 = vmatprep.subr.bf16.mxu0 0
        %6018 = vmatpush2.bf16.msra.mxu0 %v4976
        %6019 = vmatprep.subr.bf16.mxu0 0
        %6020 = vmatpush2.bf16.msra.mxu0 %v4975
        %6021 = vmatprep.subr.bf16.mxu0 0
        %6022 = vmatpush2.bf16.msra.mxu0 %v4974
        %6023 = vmatprep.subr.bf16.mxu0 0
        %6024 = vmatpush2.bf16.msra.mxu0 %v4973
        %6025 = vmatprep.subr.bf16.mxu0 0
        %6026 = vmatpush2.bf16.msra.mxu0 %v4972
        %6027 = vmatprep.subr.bf16.mxu0 0
        %6028 = vmatpush2.bf16.msra.mxu0 %v4971
        %6029 = vmatprep.mubr.bf16.mxu0 %v3158
        %6030 = vmatmul.mubr.bf16.gmra.mxu0 %v3157
        %v6031 = vpop.f32.mrf.mxu0
        %v6032 = vadd.f32 %v5991, %v6031
        %v6033 = vpop.f32.mrf.mxu0
        %v6034 = vpop.f32.mrf.mxu0
        %v6035 = vadd.f32 %v5994, %v6034
        %v6036 = vpop.f32.mrf.mxu0
        %6037 = vdwg.mxu0
        %6038 = vmatprep.subr.bf16.mxu0 0
        %6039 = vmatpush1.bf16.msra.mxu0 %v4986
        %6040 = vmatprep.subr.bf16.mxu0 0
        %6041 = vmatpush1.bf16.msra.mxu0 %v4985
        %6042 = vmatprep.subr.bf16.mxu0 0
        %6043 = vmatpush1.bf16.msra.mxu0 %v4984
        %6044 = vmatprep.subr.bf16.mxu0 0
        %6045 = vmatpush1.bf16.msra.mxu0 %v4983
        %6046 = vmatprep.subr.bf16.mxu0 0
        %6047 = vmatpush1.bf16.msra.mxu0 %v4982
        %6048 = vmatprep.subr.bf16.mxu0 0
        %6049 = vmatpush1.bf16.msra.mxu0 %v4981
        %6050 = vmatprep.subr.bf16.mxu0 0
        %6051 = vmatpush1.bf16.msra.mxu0 %v4980
        %6052 = vmatprep.subr.bf16.mxu0 0
        %6053 = vmatpush1.bf16.msra.mxu0 %v4979
        %6054 = vmatprep.subr.bf16.mxu0 0
        %6055 = vmatpush2.bf16.msra.mxu0 %v4994
        %6056 = vmatprep.subr.bf16.mxu0 0
        %6057 = vmatpush2.bf16.msra.mxu0 %v4993
        %6058 = vmatprep.subr.bf16.mxu0 0
        %6059 = vmatpush2.bf16.msra.mxu0 %v4992
        %6060 = vmatprep.subr.bf16.mxu0 0
        %6061 = vmatpush2.bf16.msra.mxu0 %v4991
        %6062 = vmatprep.subr.bf16.mxu0 0
        %6063 = vmatpush2.bf16.msra.mxu0 %v4990
        %6064 = vmatprep.subr.bf16.mxu0 0
        %6065 = vmatpush2.bf16.msra.mxu0 %v4989
        %6066 = vmatprep.subr.bf16.mxu0 0
        %6067 = vmatpush2.bf16.msra.mxu0 %v4988
        %6068 = vmatprep.subr.bf16.mxu0 0
        %6069 = vmatpush2.bf16.msra.mxu0 %v4987
        %6070 = vmatprep.mubr.bf16.mxu0 %v3160
        %6071 = vmatmul.mubr.bf16.gmra.mxu0 %v3159
        %v6072 = vpop.f32.mrf.mxu0
        %v6073 = vadd.f32 %v6032, %v6072
        %v6074 = vpop.f32.mrf.mxu0
        %v6075 = vpop.f32.mrf.mxu0
        %v6076 = vadd.f32 %v6035, %v6075
        %v6077 = vpop.f32.mrf.mxu0
        %6078 = vdwg.mxu0
        %6079 = vmatprep.subr.bf16.mxu0 0
        %6080 = vmatpush1.bf16.msra.mxu0 %v5002
        %6081 = vmatprep.subr.bf16.mxu0 0
        %6082 = vmatpush1.bf16.msra.mxu0 %v5001
        %6083 = vmatprep.subr.bf16.mxu0 0
        %6084 = vmatpush1.bf16.msra.mxu0 %v5000
        %6085 = vmatprep.subr.bf16.mxu0 0
        %6086 = vmatpush1.bf16.msra.mxu0 %v4999
        %6087 = vmatprep.subr.bf16.mxu0 0
        %6088 = vmatpush1.bf16.msra.mxu0 %v4998
        %6089 = vmatprep.subr.bf16.mxu0 0
        %6090 = vmatpush1.bf16.msra.mxu0 %v4997
        %6091 = vmatprep.subr.bf16.mxu0 0
        %6092 = vmatpush1.bf16.msra.mxu0 %v4996
        %6093 = vmatprep.subr.bf16.mxu0 0
        %6094 = vmatpush1.bf16.msra.mxu0 %v4995
        %6095 = vmatprep.subr.bf16.mxu0 0
        %6096 = vmatpush2.bf16.msra.mxu0 %v5010
        %6097 = vmatprep.subr.bf16.mxu0 0
        %6098 = vmatpush2.bf16.msra.mxu0 %v5009
        %6099 = vmatprep.subr.bf16.mxu0 0
        %6100 = vmatpush2.bf16.msra.mxu0 %v5008
        %6101 = vmatprep.subr.bf16.mxu0 0
        %6102 = vmatpush2.bf16.msra.mxu0 %v5007
        %6103 = vmatprep.subr.bf16.mxu0 0
        %6104 = vmatpush2.bf16.msra.mxu0 %v5006
        %6105 = vmatprep.subr.bf16.mxu0 0
        %6106 = vmatpush2.bf16.msra.mxu0 %v5005
        %6107 = vmatprep.subr.bf16.mxu0 0
        %6108 = vmatpush2.bf16.msra.mxu0 %v5004
        %6109 = vmatprep.subr.bf16.mxu0 0
        %6110 = vmatpush2.bf16.msra.mxu0 %v5003
        %6111 = vmatprep.mubr.bf16.mxu0 %v3162
        %6112 = vmatmul.mubr.bf16.gmra.mxu0 %v3161
        %v6113 = vpop.f32.mrf.mxu0
        %v6114 = vadd.f32 %v6073, %v6113
        %v6115 = vpop.f32.mrf.mxu0
        %v6116 = vpop.f32.mrf.mxu0
        %v6117 = vadd.f32 %v6076, %v6116
        %v6118 = vpop.f32.mrf.mxu0
        %6119 = vdwg.mxu0
        %6120 = vmatprep.subr.bf16.mxu0 0
        %6121 = vmatpush1.bf16.msra.mxu0 %v5018
        %6122 = vmatprep.subr.bf16.mxu0 0
        %6123 = vmatpush1.bf16.msra.mxu0 %v5017
        %6124 = vmatprep.subr.bf16.mxu0 0
        %6125 = vmatpush1.bf16.msra.mxu0 %v5016
        %6126 = vmatprep.subr.bf16.mxu0 0
        %6127 = vmatpush1.bf16.msra.mxu0 %v5015
        %6128 = vmatprep.subr.bf16.mxu0 0
        %6129 = vmatpush1.bf16.msra.mxu0 %v5014
        %6130 = vmatprep.subr.bf16.mxu0 0
        %6131 = vmatpush1.bf16.msra.mxu0 %v5013
        %6132 = vmatprep.subr.bf16.mxu0 0
        %6133 = vmatpush1.bf16.msra.mxu0 %v5012
        %6134 = vmatprep.subr.bf16.mxu0 0
        %6135 = vmatpush1.bf16.msra.mxu0 %v5011
        %6136 = vmatprep.subr.bf16.mxu0 0
        %6137 = vmatpush2.bf16.msra.mxu0 %v5026
        %6138 = vmatprep.subr.bf16.mxu0 0
        %6139 = vmatpush2.bf16.msra.mxu0 %v5025
        %6140 = vmatprep.subr.bf16.mxu0 0
        %6141 = vmatpush2.bf16.msra.mxu0 %v5024
        %6142 = vmatprep.subr.bf16.mxu0 0
        %6143 = vmatpush2.bf16.msra.mxu0 %v5023
        %6144 = vmatprep.subr.bf16.mxu0 0
        %6145 = vmatpush2.bf16.msra.mxu0 %v5022
        %6146 = vmatprep.subr.bf16.mxu0 0
        %6147 = vmatpush2.bf16.msra.mxu0 %v5021
        %6148 = vmatprep.subr.bf16.mxu0 0
        %6149 = vmatpush2.bf16.msra.mxu0 %v5020
        %6150 = vmatprep.subr.bf16.mxu0 0
        %6151 = vmatpush2.bf16.msra.mxu0 %v5019
        %6152 = vmatprep.mubr.bf16.mxu0 %v3164
        %6153 = vmatmul.mubr.bf16.gmra.mxu0 %v3163
        %v6154 = vpop.f32.mrf.mxu0
        %v6155 = vadd.f32 %v6114, %v6154
        %v6156 = vpop.f32.mrf.mxu0
        %v6157 = vpop.f32.mrf.mxu0
        %v6158 = vadd.f32 %v6117, %v6157
        %v6159 = vpop.f32.mrf.mxu0
        %6160 = vdwg.mxu0
        %6161 = vmatprep.subr.bf16.mxu0 0
        %6162 = vmatpush1.bf16.msra.mxu0 %v5034
        %6163 = vmatprep.subr.bf16.mxu0 0
        %6164 = vmatpush1.bf16.msra.mxu0 %v5033
        %6165 = vmatprep.subr.bf16.mxu0 0
        %6166 = vmatpush1.bf16.msra.mxu0 %v5032
        %6167 = vmatprep.subr.bf16.mxu0 0
        %6168 = vmatpush1.bf16.msra.mxu0 %v5031
        %6169 = vmatprep.subr.bf16.mxu0 0
        %6170 = vmatpush1.bf16.msra.mxu0 %v5030
        %6171 = vmatprep.subr.bf16.mxu0 0
        %6172 = vmatpush1.bf16.msra.mxu0 %v5029
        %6173 = vmatprep.subr.bf16.mxu0 0
        %6174 = vmatpush1.bf16.msra.mxu0 %v5028
        %6175 = vmatprep.subr.bf16.mxu0 0
        %6176 = vmatpush1.bf16.msra.mxu0 %v5027
        %6177 = vmatprep.subr.bf16.mxu0 0
        %6178 = vmatpush2.bf16.msra.mxu0 %v5042
        %6179 = vmatprep.subr.bf16.mxu0 0
        %6180 = vmatpush2.bf16.msra.mxu0 %v5041
        %6181 = vmatprep.subr.bf16.mxu0 0
        %6182 = vmatpush2.bf16.msra.mxu0 %v5040
        %6183 = vmatprep.subr.bf16.mxu0 0
        %6184 = vmatpush2.bf16.msra.mxu0 %v5039
        %6185 = vmatprep.subr.bf16.mxu0 0
        %6186 = vmatpush2.bf16.msra.mxu0 %v5038
        %6187 = vmatprep.subr.bf16.mxu0 0
        %6188 = vmatpush2.bf16.msra.mxu0 %v5037
        %6189 = vmatprep.subr.bf16.mxu0 0
        %6190 = vmatpush2.bf16.msra.mxu0 %v5036
        %6191 = vmatprep.subr.bf16.mxu0 0
        %6192 = vmatpush2.bf16.msra.mxu0 %v5035
        %6193 = vmatprep.mubr.bf16.mxu0 %v3166
        %6194 = vmatmul.mubr.bf16.gmra.mxu0 %v3165
        %v6195 = vpop.f32.mrf.mxu0
        %v6196 = vadd.f32 %v6155, %v6195
        %v6197 = vpop.f32.mrf.mxu0
        %v6198 = vpop.f32.mrf.mxu0
        %v6199 = vadd.f32 %v6158, %v6198
        %v6200 = vpop.f32.mrf.mxu0
        %6201 = vdwg.mxu0
        %6202 = vmatprep.subr.bf16.mxu0 0
        %6203 = vmatpush1.bf16.msra.mxu0 %v5050
        %6204 = vmatprep.subr.bf16.mxu0 0
        %6205 = vmatpush1.bf16.msra.mxu0 %v5049
        %6206 = vmatprep.subr.bf16.mxu0 0
        %6207 = vmatpush1.bf16.msra.mxu0 %v5048
        %6208 = vmatprep.subr.bf16.mxu0 0
        %6209 = vmatpush1.bf16.msra.mxu0 %v5047
        %6210 = vmatprep.subr.bf16.mxu0 0
        %6211 = vmatpush1.bf16.msra.mxu0 %v5046
        %6212 = vmatprep.subr.bf16.mxu0 0
        %6213 = vmatpush1.bf16.msra.mxu0 %v5045
        %6214 = vmatprep.subr.bf16.mxu0 0
        %6215 = vmatpush1.bf16.msra.mxu0 %v5044
        %6216 = vmatprep.subr.bf16.mxu0 0
        %6217 = vmatpush1.bf16.msra.mxu0 %v5043
        %6218 = vmatprep.subr.bf16.mxu0 0
        %6219 = vmatpush2.bf16.msra.mxu0 %v5058
        %6220 = vmatprep.subr.bf16.mxu0 0
        %6221 = vmatpush2.bf16.msra.mxu0 %v5057
        %6222 = vmatprep.subr.bf16.mxu0 0
        %6223 = vmatpush2.bf16.msra.mxu0 %v5056
        %6224 = vmatprep.subr.bf16.mxu0 0
        %6225 = vmatpush2.bf16.msra.mxu0 %v5055
        %6226 = vmatprep.subr.bf16.mxu0 0
        %6227 = vmatpush2.bf16.msra.mxu0 %v5054
        %6228 = vmatprep.subr.bf16.mxu0 0
        %6229 = vmatpush2.bf16.msra.mxu0 %v5053
        %6230 = vmatprep.subr.bf16.mxu0 0
        %6231 = vmatpush2.bf16.msra.mxu0 %v5052
        %6232 = vmatprep.subr.bf16.mxu0 0
        %6233 = vmatpush2.bf16.msra.mxu0 %v5051
        %6234 = vmatprep.mubr.bf16.mxu0 %v3168
        %6235 = vmatmul.mubr.bf16.gmra.mxu0 %v3167
        %v6236 = vpop.f32.mrf.mxu0
        %v6237 = vadd.f32 %v6196, %v6236
        %v6238 = vpop.f32.mrf.mxu0
        %v6239 = vpop.f32.mrf.mxu0
        %v6240 = vadd.f32 %v6199, %v6239
        %v6241 = vpop.f32.mrf.mxu0
        %6242 = vdwg.mxu0
        %6243 = vmatprep.subr.bf16.mxu0 0
        %6244 = vmatpush1.bf16.msra.mxu0 %v5066
        %6245 = vmatprep.subr.bf16.mxu0 0
        %6246 = vmatpush1.bf16.msra.mxu0 %v5065
        %6247 = vmatprep.subr.bf16.mxu0 0
        %6248 = vmatpush1.bf16.msra.mxu0 %v5064
        %6249 = vmatprep.subr.bf16.mxu0 0
        %6250 = vmatpush1.bf16.msra.mxu0 %v5063
        %6251 = vmatprep.subr.bf16.mxu0 0
        %6252 = vmatpush1.bf16.msra.mxu0 %v5062
        %6253 = vmatprep.subr.bf16.mxu0 0
        %6254 = vmatpush1.bf16.msra.mxu0 %v5061
        %6255 = vmatprep.subr.bf16.mxu0 0
        %6256 = vmatpush1.bf16.msra.mxu0 %v5060
        %6257 = vmatprep.subr.bf16.mxu0 0
        %6258 = vmatpush1.bf16.msra.mxu0 %v5059
        %6259 = vmatprep.subr.bf16.mxu0 0
        %6260 = vmatpush2.bf16.msra.mxu0 %v5074
        %6261 = vmatprep.subr.bf16.mxu0 0
        %6262 = vmatpush2.bf16.msra.mxu0 %v5073
        %6263 = vmatprep.subr.bf16.mxu0 0
        %6264 = vmatpush2.bf16.msra.mxu0 %v5072
        %6265 = vmatprep.subr.bf16.mxu0 0
        %6266 = vmatpush2.bf16.msra.mxu0 %v5071
        %6267 = vmatprep.subr.bf16.mxu0 0
        %6268 = vmatpush2.bf16.msra.mxu0 %v5070
        %6269 = vmatprep.subr.bf16.mxu0 0
        %6270 = vmatpush2.bf16.msra.mxu0 %v5069
        %6271 = vmatprep.subr.bf16.mxu0 0
        %6272 = vmatpush2.bf16.msra.mxu0 %v5068
        %6273 = vmatprep.subr.bf16.mxu0 0
        %6274 = vmatpush2.bf16.msra.mxu0 %v5067
        %6275 = vmatprep.mubr.bf16.mxu0 %v3170
        %6276 = vmatmul.mubr.bf16.gmra.mxu0 %v3169
        %v6277 = vpop.f32.mrf.mxu0
        %v6278 = vadd.f32 %v6237, %v6277
        %v6279 = vpop.f32.mrf.mxu0
        %v6280 = vpop.f32.mrf.mxu0
        %v6281 = vadd.f32 %v6240, %v6280
        %v6282 = vpop.f32.mrf.mxu0
        %6283 = vdwg.mxu0
        %6284 = vmatprep.subr.bf16.mxu0 0
        %6285 = vmatpush1.bf16.msra.mxu0 %v5082
        %6286 = vmatprep.subr.bf16.mxu0 0
        %6287 = vmatpush1.bf16.msra.mxu0 %v5081
        %6288 = vmatprep.subr.bf16.mxu0 0
        %6289 = vmatpush1.bf16.msra.mxu0 %v5080
        %6290 = vmatprep.subr.bf16.mxu0 0
        %6291 = vmatpush1.bf16.msra.mxu0 %v5079
        %6292 = vmatprep.subr.bf16.mxu0 0
        %6293 = vmatpush1.bf16.msra.mxu0 %v5078
        %6294 = vmatprep.subr.bf16.mxu0 0
        %6295 = vmatpush1.bf16.msra.mxu0 %v5077
        %6296 = vmatprep.subr.bf16.mxu0 0
        %6297 = vmatpush1.bf16.msra.mxu0 %v5076
        %6298 = vmatprep.subr.bf16.mxu0 0
        %6299 = vmatpush1.bf16.msra.mxu0 %v5075
        %6300 = vmatprep.subr.bf16.mxu0 0
        %6301 = vmatpush2.bf16.msra.mxu0 %v5090
        %6302 = vmatprep.subr.bf16.mxu0 0
        %6303 = vmatpush2.bf16.msra.mxu0 %v5089
        %6304 = vmatprep.subr.bf16.mxu0 0
        %6305 = vmatpush2.bf16.msra.mxu0 %v5088
        %6306 = vmatprep.subr.bf16.mxu0 0
        %6307 = vmatpush2.bf16.msra.mxu0 %v5087
        %6308 = vmatprep.subr.bf16.mxu0 0
        %6309 = vmatpush2.bf16.msra.mxu0 %v5086
        %6310 = vmatprep.subr.bf16.mxu0 0
        %6311 = vmatpush2.bf16.msra.mxu0 %v5085
        %6312 = vmatprep.subr.bf16.mxu0 0
        %6313 = vmatpush2.bf16.msra.mxu0 %v5084
        %6314 = vmatprep.subr.bf16.mxu0 0
        %6315 = vmatpush2.bf16.msra.mxu0 %v5083
        %6316 = vmatprep.mubr.bf16.mxu0 %v3172
        %6317 = vmatmul.mubr.bf16.gmra.mxu0 %v3171
        %v6318 = vpop.f32.mrf.mxu0
        %v6319 = vadd.f32 %v6278, %v6318
        %v6320 = vpop.f32.mrf.mxu0
        %v6321 = vpop.f32.mrf.mxu0
        %v6322 = vadd.f32 %v6281, %v6321
        %v6323 = vpop.f32.mrf.mxu0
        %6324 = vdwg.mxu0
        %6325 = vmatprep.subr.bf16.mxu0 0
        %6326 = vmatpush1.bf16.msra.mxu0 %v5098
        %6327 = vmatprep.subr.bf16.mxu0 0
        %6328 = vmatpush1.bf16.msra.mxu0 %v5097
        %6329 = vmatprep.subr.bf16.mxu0 0
        %6330 = vmatpush1.bf16.msra.mxu0 %v5096
        %6331 = vmatprep.subr.bf16.mxu0 0
        %6332 = vmatpush1.bf16.msra.mxu0 %v5095
        %6333 = vmatprep.subr.bf16.mxu0 0
        %6334 = vmatpush1.bf16.msra.mxu0 %v5094
        %6335 = vmatprep.subr.bf16.mxu0 0
        %6336 = vmatpush1.bf16.msra.mxu0 %v5093
        %6337 = vmatprep.subr.bf16.mxu0 0
        %6338 = vmatpush1.bf16.msra.mxu0 %v5092
        %6339 = vmatprep.subr.bf16.mxu0 0
        %6340 = vmatpush1.bf16.msra.mxu0 %v5091
        %6341 = vmatprep.subr.bf16.mxu0 0
        %6342 = vmatpush2.bf16.msra.mxu0 %v5106
        %6343 = vmatprep.subr.bf16.mxu0 0
        %6344 = vmatpush2.bf16.msra.mxu0 %v5105
        %6345 = vmatprep.subr.bf16.mxu0 0
        %6346 = vmatpush2.bf16.msra.mxu0 %v5104
        %6347 = vmatprep.subr.bf16.mxu0 0
        %6348 = vmatpush2.bf16.msra.mxu0 %v5103
        %6349 = vmatprep.subr.bf16.mxu0 0
        %6350 = vmatpush2.bf16.msra.mxu0 %v5102
        %6351 = vmatprep.subr.bf16.mxu0 0
        %6352 = vmatpush2.bf16.msra.mxu0 %v5101
        %6353 = vmatprep.subr.bf16.mxu0 0
        %6354 = vmatpush2.bf16.msra.mxu0 %v5100
        %6355 = vmatprep.subr.bf16.mxu0 0
        %6356 = vmatpush2.bf16.msra.mxu0 %v5099
        %6357 = vmatprep.mubr.bf16.mxu0 %v3174
        %6358 = vmatmul.mubr.bf16.gmra.mxu0 %v3173
        %v6359 = vpop.f32.mrf.mxu0
        %v6360 = vadd.f32 %v6319, %v6359
        %v6361 = vpop.f32.mrf.mxu0
        %v6362 = vpop.f32.mrf.mxu0
        %v6363 = vadd.f32 %v6322, %v6362
        %v6364 = vpop.f32.mrf.mxu0
        %6365 = vdwg.mxu0
        %6366 = vmatprep.subr.bf16.mxu0 0
        %6367 = vmatpush1.bf16.msra.mxu0 %v5114
        %6368 = vmatprep.subr.bf16.mxu0 0
        %6369 = vmatpush1.bf16.msra.mxu0 %v5113
        %6370 = vmatprep.subr.bf16.mxu0 0
        %6371 = vmatpush1.bf16.msra.mxu0 %v5112
        %6372 = vmatprep.subr.bf16.mxu0 0
        %6373 = vmatpush1.bf16.msra.mxu0 %v5111
        %6374 = vmatprep.subr.bf16.mxu0 0
        %6375 = vmatpush1.bf16.msra.mxu0 %v5110
        %6376 = vmatprep.subr.bf16.mxu0 0
        %6377 = vmatpush1.bf16.msra.mxu0 %v5109
        %6378 = vmatprep.subr.bf16.mxu0 0
        %6379 = vmatpush1.bf16.msra.mxu0 %v5108
        %6380 = vmatprep.subr.bf16.mxu0 0
        %6381 = vmatpush1.bf16.msra.mxu0 %v5107
        %6382 = vmatprep.subr.bf16.mxu0 0
        %6383 = vmatpush2.bf16.msra.mxu0 %v5122
        %6384 = vmatprep.subr.bf16.mxu0 0
        %6385 = vmatpush2.bf16.msra.mxu0 %v5121
        %6386 = vmatprep.subr.bf16.mxu0 0
        %6387 = vmatpush2.bf16.msra.mxu0 %v5120
        %6388 = vmatprep.subr.bf16.mxu0 0
        %6389 = vmatpush2.bf16.msra.mxu0 %v5119
        %6390 = vmatprep.subr.bf16.mxu0 0
        %6391 = vmatpush2.bf16.msra.mxu0 %v5118
        %6392 = vmatprep.subr.bf16.mxu0 0
        %6393 = vmatpush2.bf16.msra.mxu0 %v5117
        %6394 = vmatprep.subr.bf16.mxu0 0
        %6395 = vmatpush2.bf16.msra.mxu0 %v5116
        %6396 = vmatprep.subr.bf16.mxu0 0
        %6397 = vmatpush2.bf16.msra.mxu0 %v5115
        %6398 = vmatprep.mubr.bf16.mxu0 %v3176
        %6399 = vmatmul.mubr.bf16.gmra.mxu0 %v3175
        %v6400 = vpop.f32.mrf.mxu0
        %v6401 = vadd.f32 %v6360, %v6400
        %v6402 = vpop.f32.mrf.mxu0
        %v6403 = vpop.f32.mrf.mxu0
        %v6404 = vadd.f32 %v6363, %v6403
        %v6405 = vpop.f32.mrf.mxu0
        %6406 = vdwg.mxu0
        %6407 = vmatprep.subr.bf16.mxu0 0
        %6408 = vmatpush1.bf16.msra.mxu0 %v5130
        %6409 = vmatprep.subr.bf16.mxu0 0
        %6410 = vmatpush1.bf16.msra.mxu0 %v5129
        %6411 = vmatprep.subr.bf16.mxu0 0
        %6412 = vmatpush1.bf16.msra.mxu0 %v5128
        %6413 = vmatprep.subr.bf16.mxu0 0
        %6414 = vmatpush1.bf16.msra.mxu0 %v5127
        %6415 = vmatprep.subr.bf16.mxu0 0
        %6416 = vmatpush1.bf16.msra.mxu0 %v5126
        %6417 = vmatprep.subr.bf16.mxu0 0
        %6418 = vmatpush1.bf16.msra.mxu0 %v5125
        %6419 = vmatprep.subr.bf16.mxu0 0
        %6420 = vmatpush1.bf16.msra.mxu0 %v5124
        %6421 = vmatprep.subr.bf16.mxu0 0
        %6422 = vmatpush1.bf16.msra.mxu0 %v5123
        %6423 = vmatprep.subr.bf16.mxu0 0
        %6424 = vmatpush2.bf16.msra.mxu0 %v5138
        %6425 = vmatprep.subr.bf16.mxu0 0
        %6426 = vmatpush2.bf16.msra.mxu0 %v5137
        %6427 = vmatprep.subr.bf16.mxu0 0
        %6428 = vmatpush2.bf16.msra.mxu0 %v5136
        %6429 = vmatprep.subr.bf16.mxu0 0
        %6430 = vmatpush2.bf16.msra.mxu0 %v5135
        %6431 = vmatprep.subr.bf16.mxu0 0
        %6432 = vmatpush2.bf16.msra.mxu0 %v5134
        %6433 = vmatprep.subr.bf16.mxu0 0
        %6434 = vmatpush2.bf16.msra.mxu0 %v5133
        %6435 = vmatprep.subr.bf16.mxu0 0
        %6436 = vmatpush2.bf16.msra.mxu0 %v5132
        %6437 = vmatprep.subr.bf16.mxu0 0
        %6438 = vmatpush2.bf16.msra.mxu0 %v5131
        %6439 = vmatprep.mubr.bf16.mxu0 %v3178
        %6440 = vmatmul.mubr.bf16.gmra.mxu0 %v3177
        %v6441 = vpop.f32.mrf.mxu0
        %v6442 = vadd.f32 %v6401, %v6441
        %v6443 = vpop.f32.mrf.mxu0
        %v6444 = vpop.f32.mrf.mxu0
        %v6445 = vadd.f32 %v6404, %v6444
        %v6446 = vpop.f32.mrf.mxu0
        %6447 = vdwg.mxu0
        %6448 = vmatprep.subr.bf16.mxu0 0
        %6449 = vmatpush1.bf16.msra.mxu0 %v5146
        %6450 = vmatprep.subr.bf16.mxu0 0
        %6451 = vmatpush1.bf16.msra.mxu0 %v5145
        %6452 = vmatprep.subr.bf16.mxu0 0
        %6453 = vmatpush1.bf16.msra.mxu0 %v5144
        %6454 = vmatprep.subr.bf16.mxu0 0
        %6455 = vmatpush1.bf16.msra.mxu0 %v5143
        %6456 = vmatprep.subr.bf16.mxu0 0
        %6457 = vmatpush1.bf16.msra.mxu0 %v5142
        %6458 = vmatprep.subr.bf16.mxu0 0
        %6459 = vmatpush1.bf16.msra.mxu0 %v5141
        %6460 = vmatprep.subr.bf16.mxu0 0
        %6461 = vmatpush1.bf16.msra.mxu0 %v5140
        %6462 = vmatprep.subr.bf16.mxu0 0
        %6463 = vmatpush1.bf16.msra.mxu0 %v5139
        %6464 = vmatprep.subr.bf16.mxu0 0
        %6465 = vmatpush2.bf16.msra.mxu0 %v5154
        %6466 = vmatprep.subr.bf16.mxu0 0
        %6467 = vmatpush2.bf16.msra.mxu0 %v5153
        %6468 = vmatprep.subr.bf16.mxu0 0
        %6469 = vmatpush2.bf16.msra.mxu0 %v5152
        %6470 = vmatprep.subr.bf16.mxu0 0
        %6471 = vmatpush2.bf16.msra.mxu0 %v5151
        %6472 = vmatprep.subr.bf16.mxu0 0
        %6473 = vmatpush2.bf16.msra.mxu0 %v5150
        %6474 = vmatprep.subr.bf16.mxu0 0
        %6475 = vmatpush2.bf16.msra.mxu0 %v5149
        %6476 = vmatprep.subr.bf16.mxu0 0
        %6477 = vmatpush2.bf16.msra.mxu0 %v5148
        %6478 = vmatprep.subr.bf16.mxu0 0
        %6479 = vmatpush2.bf16.msra.mxu0 %v5147
        %6480 = vmatprep.mubr.bf16.mxu0 %v3180
        %6481 = vmatmul.mubr.bf16.gmra.mxu0 %v3179
        %v6482 = vpop.f32.mrf.mxu0
        %v6483 = vadd.f32 %v6442, %v6482
        %v6484 = vpop.f32.mrf.mxu0
        %v6485 = vpop.f32.mrf.mxu0
        %v6486 = vadd.f32 %v6445, %v6485
        %v6487 = vpop.f32.mrf.mxu0
        %6488 = vdwg.mxu0
        %6489 = vmatprep.subr.bf16.mxu0 0
        %6490 = vmatpush1.bf16.msra.mxu0 %v5162
        %6491 = vmatprep.subr.bf16.mxu0 0
        %6492 = vmatpush1.bf16.msra.mxu0 %v5161
        %6493 = vmatprep.subr.bf16.mxu0 0
        %6494 = vmatpush1.bf16.msra.mxu0 %v5160
        %6495 = vmatprep.subr.bf16.mxu0 0
        %6496 = vmatpush1.bf16.msra.mxu0 %v5159
        %6497 = vmatprep.subr.bf16.mxu0 0
        %6498 = vmatpush1.bf16.msra.mxu0 %v5158
        %6499 = vmatprep.subr.bf16.mxu0 0
        %6500 = vmatpush1.bf16.msra.mxu0 %v5157
        %6501 = vmatprep.subr.bf16.mxu0 0
        %6502 = vmatpush1.bf16.msra.mxu0 %v5156
        %6503 = vmatprep.subr.bf16.mxu0 0
        %6504 = vmatpush1.bf16.msra.mxu0 %v5155
        %6505 = vmatprep.subr.bf16.mxu0 0
        %6506 = vmatpush2.bf16.msra.mxu0 %v5170
        %6507 = vmatprep.subr.bf16.mxu0 0
        %6508 = vmatpush2.bf16.msra.mxu0 %v5169
        %6509 = vmatprep.subr.bf16.mxu0 0
        %6510 = vmatpush2.bf16.msra.mxu0 %v5168
        %6511 = vmatprep.subr.bf16.mxu0 0
        %6512 = vmatpush2.bf16.msra.mxu0 %v5167
        %6513 = vmatprep.subr.bf16.mxu0 0
        %6514 = vmatpush2.bf16.msra.mxu0 %v5166
        %6515 = vmatprep.subr.bf16.mxu0 0
        %6516 = vmatpush2.bf16.msra.mxu0 %v5165
        %6517 = vmatprep.subr.bf16.mxu0 0
        %6518 = vmatpush2.bf16.msra.mxu0 %v5164
        %6519 = vmatprep.subr.bf16.mxu0 0
        %6520 = vmatpush2.bf16.msra.mxu0 %v5163
        %6521 = vmatprep.mubr.bf16.mxu0 %v3182
        %6522 = vmatmul.mubr.bf16.gmra.mxu0 %v3181
        %v6523 = vpop.f32.mrf.mxu0
        %v6524 = vadd.f32 %v6483, %v6523
        %v6525 = vpop.f32.mrf.mxu0
        %v6526 = vpop.f32.mrf.mxu0
        %v6527 = vadd.f32 %v6486, %v6526
        %v6528 = vpop.f32.mrf.mxu0
        %6529 = vdwg.mxu0
        %6530 = vmatprep.subr.bf16.mxu0 0
        %6531 = vmatpush1.bf16.msra.mxu0 %v5178
        %6532 = vmatprep.subr.bf16.mxu0 0
        %6533 = vmatpush1.bf16.msra.mxu0 %v5177
        %6534 = vmatprep.subr.bf16.mxu0 0
        %6535 = vmatpush1.bf16.msra.mxu0 %v5176
        %6536 = vmatprep.subr.bf16.mxu0 0
        %6537 = vmatpush1.bf16.msra.mxu0 %v5175
        %6538 = vmatprep.subr.bf16.mxu0 0
        %6539 = vmatpush1.bf16.msra.mxu0 %v5174
        %6540 = vmatprep.subr.bf16.mxu0 0
        %6541 = vmatpush1.bf16.msra.mxu0 %v5173
        %6542 = vmatprep.subr.bf16.mxu0 0
        %6543 = vmatpush1.bf16.msra.mxu0 %v5172
        %6544 = vmatprep.subr.bf16.mxu0 0
        %6545 = vmatpush1.bf16.msra.mxu0 %v5171
        %6546 = vmatprep.subr.bf16.mxu0 0
        %6547 = vmatpush2.bf16.msra.mxu0 %v5186
        %6548 = vmatprep.subr.bf16.mxu0 0
        %6549 = vmatpush2.bf16.msra.mxu0 %v5185
        %6550 = vmatprep.subr.bf16.mxu0 0
        %6551 = vmatpush2.bf16.msra.mxu0 %v5184
        %6552 = vmatprep.subr.bf16.mxu0 0
        %6553 = vmatpush2.bf16.msra.mxu0 %v5183
        %6554 = vmatprep.subr.bf16.mxu0 0
        %6555 = vmatpush2.bf16.msra.mxu0 %v5182
        %6556 = vmatprep.subr.bf16.mxu0 0
        %6557 = vmatpush2.bf16.msra.mxu0 %v5181
        %6558 = vmatprep.subr.bf16.mxu0 0
        %6559 = vmatpush2.bf16.msra.mxu0 %v5180
        %6560 = vmatprep.subr.bf16.mxu0 0
        %6561 = vmatpush2.bf16.msra.mxu0 %v5179
        %6562 = vmatprep.mubr.bf16.mxu0 %v3184
        %6563 = vmatmul.mubr.bf16.gmra.mxu0 %v3183
        %v6564 = vpop.f32.mrf.mxu0
        %v6565 = vadd.f32 %v6524, %v6564
        %v6566 = vpop.f32.mrf.mxu0
        %v6567 = vpop.f32.mrf.mxu0
        %v6568 = vadd.f32 %v6527, %v6567
        %v6569 = vpop.f32.mrf.mxu0
        %6570 = vdwg.mxu0
        %6571 = vmatprep.subr.bf16.mxu0 0
        %6572 = vmatpush1.bf16.msra.mxu0 %v5194
        %6573 = vmatprep.subr.bf16.mxu0 0
        %6574 = vmatpush1.bf16.msra.mxu0 %v5193
        %6575 = vmatprep.subr.bf16.mxu0 0
        %6576 = vmatpush1.bf16.msra.mxu0 %v5192
        %6577 = vmatprep.subr.bf16.mxu0 0
        %6578 = vmatpush1.bf16.msra.mxu0 %v5191
        %6579 = vmatprep.subr.bf16.mxu0 0
        %6580 = vmatpush1.bf16.msra.mxu0 %v5190
        %6581 = vmatprep.subr.bf16.mxu0 0
        %6582 = vmatpush1.bf16.msra.mxu0 %v5189
        %6583 = vmatprep.subr.bf16.mxu0 0
        %6584 = vmatpush1.bf16.msra.mxu0 %v5188
        %6585 = vmatprep.subr.bf16.mxu0 0
        %6586 = vmatpush1.bf16.msra.mxu0 %v5187
        %6587 = vmatprep.subr.bf16.mxu0 0
        %6588 = vmatpush2.bf16.msra.mxu0 0
        %6589 = vmatprep.subr.bf16.mxu0 0
        %6590 = vmatpush2.bf16.msra.mxu0 0
        %6591 = vmatprep.subr.bf16.mxu0 0
        %6592 = vmatpush2.bf16.msra.mxu0 0
        %6593 = vmatprep.subr.bf16.mxu0 0
        %6594 = vmatpush2.bf16.msra.mxu0 0
        %6595 = vmatprep.subr.bf16.mxu0 0
        %6596 = vmatpush2.bf16.msra.mxu0 0
        %6597 = vmatprep.subr.bf16.mxu0 0
        %6598 = vmatpush2.bf16.msra.mxu0 0
        %6599 = vmatprep.subr.bf16.mxu0 0
        %6600 = vmatpush2.bf16.msra.mxu0 0
        %6601 = vmatprep.subr.bf16.mxu0 0
        %6602 = vmatpush2.bf16.msra.mxu0 0
        %6603 = vmatprep.mubr.bf16.mxu0 0
        %6604 = vmatmul.mubr.bf16.gmra.mxu0 %v3185
        %v6605 = vpop.f32.mrf.mxu0
        %v6606 = vadd.f32 %v6565, %v6605
        %v6607 = vpop.f32.mrf.mxu0
        %v6608 = vpop.f32.mrf.mxu0
        %v6609 = vadd.f32 %v6568, %v6608
        %v6610 = vpop.f32.mrf.mxu0
        %6611 = vdwg.mxu0
        %v6612 = vadd.f32 %v2203, %v6606
        %v6613 = vadd.f32 %v2204, %v6609
        %6614 = vst [vmem:[#allocation4] sm:$0xff] %v6612
        %6615 = vst [vmem:[#allocation4 + $0x8] sm:$0xff] %v6613
        // Predicated region
        $region61: #{image_encoder_forward.1} parent=39 // pred_check
          %p6616 = pneg %p313
        $region62: #{image_encoder_forward.1} parent=39 // pred_check_branch
          %6618 = sbr.rel (%p6616) target = $region64
        $region63: #{image_encoder_forward.1} parent=39 // pred_region
          %v6619 = vld [vmem:[#allocation4] sm:$0xff]
          %v6620 = vld [vmem:[#allocation4 + $0x8] sm:$0xff]
          %v6621 = vld [vmem:[%s281] sm:$0x1]
          %v6623 = vlaneseq
          %v6624 = vshrl.u32 %v6623, 7
          %v6625 = vsub.s32 0, %v6624
          %v6626 = vrot.slane %v6621, %v6625
          %v6628 = vadd.f32 %v6619, %v6626
          %v6629 = vadd.f32 %v6620, %v6626
          %6630 = vst [vmem:[%s310] sm:$0xff] %v6628
          %6631 = vst [vmem:[%s310 + $0x8] sm:$0xff] %v6629
        $region64: #{image_encoder_forward.1} parent=39 // pred_fallthru
          _
        %s6632 = sand.u32 %s155, 1
        %s6633 = sand.u32 %s155, 1
        %s6634 = smul.addr %s6633, 16
        %s6635 = scalar_lea.vmem [#allocation11], %s6634
        // Predicated region
        $region65: #{image_encoder_forward.1} parent=39 // pred_check
          %p6636 = pneg %p165
        $region66: #{image_encoder_forward.1} parent=39 // pred_check_branch
          %6638 = sbr.rel (%p6636) target = $region68
        $region67: #{image_encoder_forward.1} parent=39 // pred_region
          %s6639 = smul.addr %s22, 8
          %s6640 = scalar_lea.vmem %s5, %s6639
          // Predicated region
          $region69: #{image_encoder_forward.1} parent=67 // pred_check
            _
          $region70: #{image_encoder_forward.1} parent=67 // pred_check_branch
            %6642 = sbr.rel (0) target = $region72
          $region71: #{image_encoder_forward.1} parent=67 // pred_region
            // Predicated region
            $region73: #{image_encoder_forward.1} parent=71 // pred_check
              _
            $region74: #{image_encoder_forward.1} parent=71 // pred_check_branch
              %6644 = sbr.rel (0) target = $region76
            $region75: #{image_encoder_forward.1} parent=71 // pred_region
              // Predicated region
              $region88: #{image_encoder_forward.1} parent=75 // pred_check
                _
              $region89: #{image_encoder_forward.1} parent=75 // pred_check_branch
                %6662 = sbr.rel (0) target = $region91
              $region90: #{image_encoder_forward.1} parent=75 // pred_region
                loop: start=0, step=1, limit=1
                $region92: #{image_encoder_forward.1} parent=90 // loop_pre_header
                  _
                $region93: #{image_encoder_forward.1} parent=90 // loop_header
                  %s6664 = sphi 0, %s6668
                  %p6665 = scmp.ge.s32.totalorder %s6664, 1
                  %s6669 = sphi %s6635, %s6635
                  %s6670 = sphi %s6640, %s6640
                $region94: #{image_encoder_forward.1} parent=90 // loop_header_branch
                  %6667 = sbr.rel (%p6665) target = $region98
                $region95: #{image_encoder_forward.1} parent=90 // loop_body
                  %v6671 = vld [vmem:[%s6669] sm:$0xff]
                  %6672 = vst [vmem:[%s6670] sm:$0xff] %v6671
                  %v6673 = vld [vmem:[%s6669 + $0x8] sm:$0xff]
                  %6674 = vst [vmem:[%s6670 + $0x20] sm:$0xff] %v6673
                $region96: #{image_encoder_forward.1} parent=90 // loop_footer
                  %s6668 = sadd.s32 1, %s6664
                $region97: #{image_encoder_forward.1} parent=90 // loop_footer_branch
                  %6663 = sbr.rel target = $region93
                $region98: #{image_encoder_forward.1} parent=90 // loop_exit
                  _
              $region91: #{image_encoder_forward.1} parent=75 // pred_fallthru
                _
              // Predicated region
              $region99: #{image_encoder_forward.1} parent=75 // pred_check
                _
              $region100: #{image_encoder_forward.1} parent=75 // pred_check_branch
                %6676 = sbr.rel target = $region102
              $region101: #{image_encoder_forward.1} parent=75 // pred_region
                _
              $region102: #{image_encoder_forward.1} parent=75 // pred_fallthru
                _
            $region76: #{image_encoder_forward.1} parent=71 // pred_fallthru
              _
            // Predicated region
            $region77: #{image_encoder_forward.1} parent=71 // pred_check
              _
            $region78: #{image_encoder_forward.1} parent=71 // pred_check_branch
              %6646 = sbr.rel target = $region80
            $region79: #{image_encoder_forward.1} parent=71 // pred_region
              %s6648 = ssub.s32 256, 1
              loop: start=0, step=1, limit=1
              $region81: #{image_encoder_forward.1} parent=79 // loop_pre_header
                _
              $region82: #{image_encoder_forward.1} parent=79 // loop_header
                %s6650 = sphi 0, %s6654
                %p6651 = scmp.ge.s32.totalorder %s6650, 1
                %s6655 = sphi %s6635, %s6635
                %s6656 = sphi %s6640, %s6640
              $region83: #{image_encoder_forward.1} parent=79 // loop_header_branch
                %6653 = sbr.rel (%p6651) target = $region87
              $region84: #{image_encoder_forward.1} parent=79 // loop_body
                %v6657 = vld [vmem:[%s6655] sm:%s6648]
                %6658 = vst [vmem:[%s6656] sm:%s6648] %v6657
                %v6659 = vld [vmem:[%s6655 + $0x8] sm:%s6648]
                %6660 = vst [vmem:[%s6656 + $0x20] sm:%s6648] %v6659
              $region85: #{image_encoder_forward.1} parent=79 // loop_footer
                %s6654 = sadd.s32 1, %s6650
              $region86: #{image_encoder_forward.1} parent=79 // loop_footer_branch
                %6649 = sbr.rel target = $region82
              $region87: #{image_encoder_forward.1} parent=79 // loop_exit
                _
            $region80: #{image_encoder_forward.1} parent=71 // pred_fallthru
              _
          $region72: #{image_encoder_forward.1} parent=67 // pred_fallthru
            _
          %6677 = vnop
        $region68: #{image_encoder_forward.1} parent=39 // pred_fallthru
          _
      $region40: #{image_encoder_forward.1} parent=5 // pred_fallthru
        _
      %p6678 = scmp.le.s32.totalorder 2, %s13
      // Predicated region
      $region103: #{image_encoder_forward.1} parent=5 // pred_check
        %p6679 = pneg %p6678
      $region104: #{image_encoder_forward.1} parent=5 // pred_check_branch
        %6681 = sbr.rel (%p6679) target = $region106
      $region105: #{image_encoder_forward.1} parent=5 // pred_region
        %s6682 = ssub.s32 %s13, 2
        // Predicated region
        $region107: #{image_encoder_forward.1} parent=105 // pred_check
          %p6683 = pneg %p171
        $region108: #{image_encoder_forward.1} parent=105 // pred_check_branch
          %6685 = sbr.rel (%p6683) target = $region110
        $region109: #{image_encoder_forward.1} parent=105 // pred_region
          %s6686 = sand.u32 %s156, 1
          %s6687 = sand.u32 %s156, 1
          %s6688 = smul.addr %s6687, 16
          %s6689 = scalar_lea.vmem [#allocation11], %s6688
        $region110: #{image_encoder_forward.1} parent=105 // pred_fallthru
          _
      $region106: #{image_encoder_forward.1} parent=5 // pred_fallthru
        _
    $region6: #{image_encoder_forward.1} parent=1 // loop_footer
      %s17 = sadd.s32 1, %s13
    $region7: #{image_encoder_forward.1} parent=1 // loop_footer_branch
      %12 = sbr.rel target = $region3
    $region8: #{image_encoder_forward.1} parent=1 // loop_exit
      _
    %6690 = vsyncpa [#allocation6], 1
    %s6691 = scalar_lea.sflag [#allocation6], 1
    %6692 = vsyncpa %s6691, 1
    %6693 = vsyncpa [#allocation8], 1

</llo_original>
